<compile_context>
chip_gen: v7x
topology: tpu7x:2x2x1
jax: 0.10.0
libtpu: 0.0.40
codegen_flags: <defaults>
</compile_context>

<pallas_src>
import functools

import jax
import jax.numpy as jnp
from jax import lax
from jax.experimental import pallas as pl
from jax.experimental.pallas import tpu as pltpu

EPS = 1e-5  # nn.BatchNorm default eps


# ----------------------------- fused Pallas kernel -----------------------------

def _fused_kernel(x_ref, cw_hbm, bn2g_ref, bn2b_ref,
                  fc1w_ref, fc1b_ref, bn1g_ref, bn1b_ref,
                  fc2w_ref, fc2b_ref,
                  o_ref,
                  pad_ref, patch_ref, cw_vmem, cw_sem,
                  *, N, Hp, Wp, Ho, Wo):
    C = x_ref.shape[-1]

    # ---- stream the (9C, Cout) bf16 conv weight HBM -> VMEM; overlapped with pool/pad/gather
    cw_copy = pltpu.make_async_copy(cw_hbm, cw_vmem, cw_sem)
    cw_copy.start()

    # ---- MaxPool2d(2,2): W-pairs sit on axis 1 of x_ref; H-pairs via a leading-dim reshape
    xw = jnp.max(x_ref[...], axis=1)                             # (N*H*Wp, C)
    pooled = jnp.max(xw.reshape(N, Hp, 2, Wp, C), axis=2)        # (N, Hp, Wp, C)

    # ---- zero-padded conv input (padding=1); W dim of the scratch is padded to 8 sublanes
    pad_ref[...] = jnp.zeros(pad_ref.shape, pad_ref.dtype)
    pad_ref[:, 1:1 + Hp, 1:1 + Wp, :] = pooled

    # ---- im2col: one (M, 9C) patch matrix, rows ordered (ho, wo, n), columns tap-major
    #      (matches the HWIO -> (9C, Cout) weight reshape). 6 row-slab loads total; each tap
    #      block is assembled in registers and stored with one aligned, unmasked store.
    for kh in range(3):
        rows = [pad_ref[:, 2 * ho + kh, :, :] for ho in range(Ho)]   # Ho x (N, Wpad, C)
        for kw in range(3):
            t = kh * 3 + kw
            taps = [rows[ho][:, 2 * wo + kw, :]                      # (N, C) each
                    for ho in range(Ho) for wo in range(Wo)]
            patch_ref[:, t * C:(t + 1) * C] = jnp.concatenate(taps, axis=0)

    # ---- Conv2d(C,Cout,3,stride=2,pad=1) as ONE MXU matmul (K = 9C); bias absorbed by BN
    cw_copy.wait()
    acc = jnp.dot(patch_ref[...].astype(cw_vmem.dtype), cw_vmem[...],
                  preferred_element_type=jnp.float32)            # (M, Cout) f32

    # ---- BatchNorm2d (training-mode batch stats over all N*Ho*Wo rows) + ReLU (f32 VPU math)
    mu = jnp.mean(acc, axis=0, keepdims=True)
    var = jnp.mean(jnp.square(acc - mu), axis=0, keepdims=True)
    feat = jnp.maximum(bn2g_ref[...] * (acc - mu) * lax.rsqrt(var + EPS) + bn2b_ref[...], 0.0)

    # ---- AdaptiveAvgPool2d(1): rows are (ho, wo, n) so a leading reshape exposes spatial
    gap = jnp.mean(feat.reshape(Ho * Wo, N, feat.shape[-1]), axis=0)   # (N, Cout)

    # ---- Linear(256,128) + ReLU + BatchNorm1d(128) + Linear(128,10)
    h = jnp.dot(gap.astype(fc1w_ref.dtype), fc1w_ref[...],
                preferred_element_type=jnp.float32) + fc1b_ref[...]
    h = jnp.maximum(h, 0.0)
    mu1 = jnp.mean(h, axis=0, keepdims=True)
    var1 = jnp.mean(jnp.square(h - mu1), axis=0, keepdims=True)
    hn = bn1g_ref[...] * (h - mu1) * lax.rsqrt(var1 + EPS) + bn1b_ref[...]
    o_ref[...] = jnp.dot(hn, fc2w_ref[...], preferred_element_type=jnp.float32) + fc2b_ref[...]


# ----------------------------- forward pass wrapper -----------------------------

def vgg_tinyserver_0_forward(x_nchw, params):
    N, C, H, W = x_nchw.shape
    Hp, Wp = H // 2, W // 2                      # after MaxPool2d(2, 2)
    Ho = (Hp + 2 - 3) // 2 + 1                   # conv: k=3, stride=2, pad=1
    Wo = (Wp + 2 - 3) // 2 + 1
    Cout = params["conv_w"].shape[-1]
    n_classes = params["fc2_w"].shape[-1]
    wpad = -(-(Wp + 2) // 8) * 8                 # pad scratch W dim up to a multiple of 8

    # NCHW -> NHWC (channels on the 128-wide lane dim), then a free reshape exposing the two
    # W-neighbours of every 2x2 pooling window on a small reducible axis.
    x = jnp.transpose(x_nchw, (0, 2, 3, 1)).reshape(N * H * Wp, 2, C)
    # HWIO -> (9C, Cout), tap-major / cin-minor; contiguous, so the reshape is free.
    cw_mat = params["conv_w"].reshape(3 * 3 * C, Cout)

    kernel = functools.partial(_fused_kernel, N=N, Hp=Hp, Wp=Wp, Ho=Ho, Wo=Wo)
    vmem = pl.BlockSpec(memory_space=pltpu.MemorySpace.VMEM)
    hbm = pl.BlockSpec(memory_space=pl.ANY)      # conv weight stays in HBM, streamed manually
    # TODO(synk): for realistic VGG sizes (large N*Ho*Wo) this single-block design would need an
    # M-tiling grid axis plus a two-pass / cross-block BatchNorm2d statistics reduction.
    return pl.pallas_call(
        kernel,
        out_shape=jax.ShapeDtypeStruct((N, n_classes), jnp.float32),
        in_specs=[vmem, hbm] + [vmem] * 8,
        out_specs=vmem,
        scratch_shapes=[
            pltpu.VMEM((N, Hp + 2, wpad, C), jnp.float32),        # zero-padded pooled activations
            pltpu.VMEM((N * Ho * Wo, 3 * 3 * C), jnp.float32),    # (M, 9C) im2col patch matrix
            pltpu.VMEM((3 * 3 * C, Cout), params["conv_w"].dtype),  # conv weight landing buffer
            pltpu.SemaphoreType.DMA(()),                          # weight-DMA completion sem
        ],
    )(x, cw_mat,
      params["bn2_g"].reshape(1, -1), params["bn2_b"].reshape(1, -1),
      params["fc1_w"], params["fc1_b"].reshape(1, -1),
      params["bn1_g"].reshape(1, -1), params["bn1_b"].reshape(1, -1),
      params["fc2_w"], params["fc2_b"].reshape(1, -1))


# ----------------------------- main -----------------------------

if __name__ == "__main__":
    N, Cin, H, W = 2, 256, 8, 8     # in_channels=256 is fixed by the architecture
    Cout, Hid, NClass = 256, 128, 10

    key = jax.random.PRNGKey(0)
    k = jax.random.split(key, 4)

    x = jax.random.normal(k[0], (N, Cin, H, W), jnp.float32)

    kaiming_std = (2.0 / (Cin * 3 * 3)) ** 0.5
    params = {
        # Conv2d weight in HWIO layout; kaiming-normal. Stored bf16 AT REST (halves the dominant
        # HBM transfer; the BN right after the conv absorbs the tiny quantization shift).
        "conv_w": (jax.random.normal(k[1], (3, 3, Cin, Cout), jnp.float32)
                   * kaiming_std).astype(jnp.bfloat16),
        # conv bias is zero-initialized and is mathematically absorbed by the train-mode BN mean
        # subtraction, so it is kept for interface fidelity but not passed to the kernel.
        "conv_b": jnp.zeros((Cout,), jnp.float32),
        "bn2_g": jnp.ones((Cout,), jnp.float32),
        "bn2_b": jnp.zeros((Cout,), jnp.float32),
        # Linear weights stored as (in, out) so the kernel does x @ W; normal(0, 0.01), zero bias.
        "fc1_w": (jax.random.normal(k[2], (Cout, Hid), jnp.float32) * 0.01).astype(jnp.bfloat16),
        "fc1_b": jnp.zeros((Hid,), jnp.float32),
        "bn1_g": jnp.ones((Hid,), jnp.float32),
        "bn1_b": jnp.zeros((Hid,), jnp.float32),
        "fc2_w": jax.random.normal(k[3], (Hid, NClass), jnp.float32) * 0.01,
        "fc2_b": jnp.zeros((NClass,), jnp.float32),
    }

    fwd = jax.jit(vgg_tinyserver_0_forward)
    out = fwd(x, params)
    out = jax.block_until_ready(out)
    assert out.shape == (N, NClass) and out.dtype == jnp.float32
    print("KERNEL_OK")
</pallas_src>

<mosaic_0001>
module attributes {stable_mosaic.version = 11 : i64} {
  func.func @_fused_kernel(%arg0: memref<64x2x256xf32, #tpu.memory_space<vmem>>, %arg1: memref<2304x256xbf16, #tpu.memory_space<any>>, %arg2: memref<1x256xf32, #tpu.memory_space<vmem>>, %arg3: memref<1x256xf32, #tpu.memory_space<vmem>>, %arg4: memref<256x128xbf16, #tpu.memory_space<vmem>>, %arg5: memref<1x128xf32, #tpu.memory_space<vmem>>, %arg6: memref<1x128xf32, #tpu.memory_space<vmem>>, %arg7: memref<1x128xf32, #tpu.memory_space<vmem>>, %arg8: memref<128x10xf32, #tpu.memory_space<vmem>>, %arg9: memref<1x10xf32, #tpu.memory_space<vmem>>, %arg10: memref<2x10xf32, #tpu.memory_space<vmem>>, %arg11: memref<2x6x8x256xf32, #tpu.memory_space<vmem>>, %arg12: memref<8x2304xf32, #tpu.memory_space<vmem>>, %arg13: memref<2304x256xbf16, #tpu.memory_space<vmem>>, %arg14: memref<!tpu.dma_semaphore, #tpu.memory_space<semaphore_mem>>) attributes {dimension_semantics = [], scalar_prefetch = 0 : i64, scratch_operands = 4 : i64, tpu.core_type = #tpu.core_type<tc>} {
    tpu.enqueue_dma source(%arg1 : memref<2304x256xbf16, #tpu.memory_space<any>>) target(%arg13 : memref<2304x256xbf16, #tpu.memory_space<vmem>>) target_semaphore(%arg14 : memref<!tpu.dma_semaphore, #tpu.memory_space<semaphore_mem>>)
    %c0 = arith.constant 0 : index
    %c0_0 = arith.constant 0 : index
    %c0_1 = arith.constant 0 : index
    %0 = vector.load %arg0[%c0, %c0_0, %c0_1] : memref<64x2x256xf32, #tpu.memory_space<vmem>>, vector<64x2x256xf32>
    %cst = arith.constant dense<0xFF800000> : vector<64x256xf32>
    %1 = vector.multi_reduction <maximumf>, %0, %cst [1] : vector<64x2x256xf32> to vector<64x256xf32>
    %2 = vector.shape_cast %1 : vector<64x256xf32> to vector<2x4x2x4x256xf32>
    %cst_2 = arith.constant dense<0xFF800000> : vector<2x4x4x256xf32>
    %3 = vector.multi_reduction <maximumf>, %2, %cst_2 [2] : vector<2x4x2x4x256xf32> to vector<2x4x4x256xf32>
    %cst_3 = arith.constant 0.000000e+00 : f32
    %4 = vector.broadcast %cst_3 : f32 to vector<2x6x8x256xf32>
    %c0_4 = arith.constant 0 : index
    %c0_5 = arith.constant 0 : index
    %c0_6 = arith.constant 0 : index
    %c0_7 = arith.constant 0 : index
    %5 = vector.load %arg11[%c0_4, %c0_5, %c0_6, %c0_7] : memref<2x6x8x256xf32, #tpu.memory_space<vmem>>, vector<2x6x8x256xf32>
    tpu.vector_store %arg11[%c0_4, %c0_5, %c0_6, %c0_7], %4 {strides = array<i32>} : memref<2x6x8x256xf32, #tpu.memory_space<vmem>>, vector<2x6x8x256xf32>,
    %c0_8 = arith.constant 0 : index
    %c1 = arith.constant 1 : index
    %c1_9 = arith.constant 1 : index
    %c0_10 = arith.constant 0 : index
    %6 = vector.load %arg11[%c0_8, %c1, %c1_9, %c0_10] : memref<2x6x8x256xf32, #tpu.memory_space<vmem>>, vector<2x4x4x256xf32>
    tpu.vector_store %arg11[%c0_8, %c1, %c1_9, %c0_10], %3 {strides = array<i32>} : memref<2x6x8x256xf32, #tpu.memory_space<vmem>>, vector<2x4x4x256xf32>,
    %c0_11 = arith.constant 0 : index
    %c0_12 = arith.constant 0 : index
    %c0_13 = arith.constant 0 : index
    %c0_14 = arith.constant 0 : index
    %7 = vector.load %arg11[%c0_11, %c0_12, %c0_13, %c0_14] : memref<2x6x8x256xf32, #tpu.memory_space<vmem>>, vector<2x1x8x256xf32>
    %8 = vector.shape_cast %7 : vector<2x1x8x256xf32> to vector<2x8x256xf32>
    %c0_15 = arith.constant 0 : index
    %c2 = arith.constant 2 : index
    %c0_16 = arith.constant 0 : index
    %c0_17 = arith.constant 0 : index
    %9 = vector.load %arg11[%c0_15, %c2, %c0_16, %c0_17] : memref<2x6x8x256xf32, #tpu.memory_space<vmem>>, vector<2x1x8x256xf32>
    %10 = vector.shape_cast %9 : vector<2x1x8x256xf32> to vector<2x8x256xf32>
    %11 = vector.extract_strided_slice %8 {offsets = [0, 0, 0], sizes = [2, 1, 256], strides = [1, 1, 1]} : vector<2x8x256xf32> to vector<2x1x256xf32>
    %12 = vector.shape_cast %11 : vector<2x1x256xf32> to vector<2x256xf32>
    %13 = vector.extract_strided_slice %8 {offsets = [0, 2, 0], sizes = [2, 1, 256], strides = [1, 1, 1]} : vector<2x8x256xf32> to vector<2x1x256xf32>
    %14 = vector.shape_cast %13 : vector<2x1x256xf32> to vector<2x256xf32>
    %15 = vector.extract_strided_slice %10 {offsets = [0, 0, 0], sizes = [2, 1, 256], strides = [1, 1, 1]} : vector<2x8x256xf32> to vector<2x1x256xf32>
    %16 = vector.shape_cast %15 : vector<2x1x256xf32> to vector<2x256xf32>
    %17 = vector.extract_strided_slice %10 {offsets = [0, 2, 0], sizes = [2, 1, 256], strides = [1, 1, 1]} : vector<2x8x256xf32> to vector<2x1x256xf32>
    %18 = vector.shape_cast %17 : vector<2x1x256xf32> to vector<2x256xf32>
    %19 = tpu.concatenate %12, %14, %16, %18 in 0 : vector<2x256xf32>, vector<2x256xf32>, vector<2x256xf32>, vector<2x256xf32> -> vector<8x256xf32>
    %c0_18 = arith.constant 0 : index
    %c0_19 = arith.constant 0 : index
    %20 = vector.load %arg12[%c0_18, %c0_19] : memref<8x2304xf32, #tpu.memory_space<vmem>>, vector<8x256xf32>
    tpu.vector_store %arg12[%c0_18, %c0_19], %19 {strides = array<i32>} : memref<8x2304xf32, #tpu.memory_space<vmem>>, vector<8x256xf32>,
    %21 = vector.extract_strided_slice %8 {offsets = [0, 1, 0], sizes = [2, 1, 256], strides = [1, 1, 1]} : vector<2x8x256xf32> to vector<2x1x256xf32>
    %22 = vector.shape_cast %21 : vector<2x1x256xf32> to vector<2x256xf32>
    %23 = vector.extract_strided_slice %8 {offsets = [0, 3, 0], sizes = [2, 1, 256], strides = [1, 1, 1]} : vector<2x8x256xf32> to vector<2x1x256xf32>
    %24 = vector.shape_cast %23 : vector<2x1x256xf32> to vector<2x256xf32>
    %25 = vector.extract_strided_slice %10 {offsets = [0, 1, 0], sizes = [2, 1, 256], strides = [1, 1, 1]} : vector<2x8x256xf32> to vector<2x1x256xf32>
    %26 = vector.shape_cast %25 : vector<2x1x256xf32> to vector<2x256xf32>
    %27 = vector.extract_strided_slice %10 {offsets = [0, 3, 0], sizes = [2, 1, 256], strides = [1, 1, 1]} : vector<2x8x256xf32> to vector<2x1x256xf32>
    %28 = vector.shape_cast %27 : vector<2x1x256xf32> to vector<2x256xf32>
    %29 = tpu.concatenate %22, %24, %26, %28 in 0 : vector<2x256xf32>, vector<2x256xf32>, vector<2x256xf32>, vector<2x256xf32> -> vector<8x256xf32>
    %c0_20 = arith.constant 0 : index
    %c256 = arith.constant 256 : index
    %30 = vector.load %arg12[%c0_20, %c256] : memref<8x2304xf32, #tpu.memory_space<vmem>>, vector<8x256xf32>
    tpu.vector_store %arg12[%c0_20, %c256], %29 {strides = array<i32>} : memref<8x2304xf32, #tpu.memory_space<vmem>>, vector<8x256xf32>,
    %31 = vector.extract_strided_slice %8 {offsets = [0, 2, 0], sizes = [2, 1, 256], strides = [1, 1, 1]} : vector<2x8x256xf32> to vector<2x1x256xf32>
    %32 = vector.shape_cast %31 : vector<2x1x256xf32> to vector<2x256xf32>
    %33 = vector.extract_strided_slice %8 {offsets = [0, 4, 0], sizes = [2, 1, 256], strides = [1, 1, 1]} : vector<2x8x256xf32> to vector<2x1x256xf32>
    %34 = vector.shape_cast %33 : vector<2x1x256xf32> to vector<2x256xf32>
    %35 = vector.extract_strided_slice %10 {offsets = [0, 2, 0], sizes = [2, 1, 256], strides = [1, 1, 1]} : vector<2x8x256xf32> to vector<2x1x256xf32>
    %36 = vector.shape_cast %35 : vector<2x1x256xf32> to vector<2x256xf32>
    %37 = vector.extract_strided_slice %10 {offsets = [0, 4, 0], sizes = [2, 1, 256], strides = [1, 1, 1]} : vector<2x8x256xf32> to vector<2x1x256xf32>
    %38 = vector.shape_cast %37 : vector<2x1x256xf32> to vector<2x256xf32>
    %39 = tpu.concatenate %32, %34, %36, %38 in 0 : vector<2x256xf32>, vector<2x256xf32>, vector<2x256xf32>, vector<2x256xf32> -> vector<8x256xf32>
    %c0_21 = arith.constant 0 : index
    %c512 = arith.constant 512 : index
    %40 = vector.load %arg12[%c0_21, %c512] : memref<8x2304xf32, #tpu.memory_space<vmem>>, vector<8x256xf32>
    tpu.vector_store %arg12[%c0_21, %c512], %39 {strides = array<i32>} : memref<8x2304xf32, #tpu.memory_space<vmem>>, vector<8x256xf32>,
    %c0_22 = arith.constant 0 : index
    %c1_23 = arith.constant 1 : index
    %c0_24 = arith.constant 0 : index
    %c0_25 = arith.constant 0 : index
    %41 = vector.load %arg11[%c0_22, %c1_23, %c0_24, %c0_25] : memref<2x6x8x256xf32, #tpu.memory_space<vmem>>, vector<2x1x8x256xf32>
    %42 = vector.shape_cast %41 : vector<2x1x8x256xf32> to vector<2x8x256xf32>
    %c0_26 = arith.constant 0 : index
    %c3 = arith.constant 3 : index
    %c0_27 = arith.constant 0 : index
    %c0_28 = arith.constant 0 : index
    %43 = vector.load %arg11[%c0_26, %c3, %c0_27, %c0_28] : memref<2x6x8x256xf32, #tpu.memory_space<vmem>>, vector<2x1x8x256xf32>
    %44 = vector.shape_cast %43 : vector<2x1x8x256xf32> to vector<2x8x256xf32>
    %45 = vector.extract_strided_slice %42 {offsets = [0, 0, 0], sizes = [2, 1, 256], strides = [1, 1, 1]} : vector<2x8x256xf32> to vector<2x1x256xf32>
    %46 = vector.shape_cast %45 : vector<2x1x256xf32> to vector<2x256xf32>
    %47 = vector.extract_strided_slice %42 {offsets = [0, 2, 0], sizes = [2, 1, 256], strides = [1, 1, 1]} : vector<2x8x256xf32> to vector<2x1x256xf32>
    %48 = vector.shape_cast %47 : vector<2x1x256xf32> to vector<2x256xf32>
    %49 = vector.extract_strided_slice %44 {offsets = [0, 0, 0], sizes = [2, 1, 256], strides = [1, 1, 1]} : vector<2x8x256xf32> to vector<2x1x256xf32>
    %50 = vector.shape_cast %49 : vector<2x1x256xf32> to vector<2x256xf32>
    %51 = vector.extract_strided_slice %44 {offsets = [0, 2, 0], sizes = [2, 1, 256], strides = [1, 1, 1]} : vector<2x8x256xf32> to vector<2x1x256xf32>
    %52 = vector.shape_cast %51 : vector<2x1x256xf32> to vector<2x256xf32>
    %53 = tpu.concatenate %46, %48, %50, %52 in 0 : vector<2x256xf32>, vector<2x256xf32>, vector<2x256xf32>, vector<2x256xf32> -> vector<8x256xf32>
    %c0_29 = arith.constant 0 : index
    %c768 = arith.constant 768 : index
    %54 = vector.load %arg12[%c0_29, %c768] : memref<8x2304xf32, #tpu.memory_space<vmem>>, vector<8x256xf32>
    tpu.vector_store %arg12[%c0_29, %c768], %53 {strides = array<i32>} : memref<8x2304xf32, #tpu.memory_space<vmem>>, vector<8x256xf32>,
    %55 = vector.extract_strided_slice %42 {offsets = [0, 1, 0], sizes = [2, 1, 256], strides = [1, 1, 1]} : vector<2x8x256xf32> to vector<2x1x256xf32>
    %56 = vector.shape_cast %55 : vector<2x1x256xf32> to vector<2x256xf32>
    %57 = vector.extract_strided_slice %42 {offsets = [0, 3, 0], sizes = [2, 1, 256], strides = [1, 1, 1]} : vector<2x8x256xf32> to vector<2x1x256xf32>
    %58 = vector.shape_cast %57 : vector<2x1x256xf32> to vector<2x256xf32>
    %59 = vector.extract_strided_slice %44 {offsets = [0, 1, 0], sizes = [2, 1, 256], strides = [1, 1, 1]} : vector<2x8x256xf32> to vector<2x1x256xf32>
    %60 = vector.shape_cast %59 : vector<2x1x256xf32> to vector<2x256xf32>
    %61 = vector.extract_strided_slice %44 {offsets = [0, 3, 0], sizes = [2, 1, 256], strides = [1, 1, 1]} : vector<2x8x256xf32> to vector<2x1x256xf32>
    %62 = vector.shape_cast %61 : vector<2x1x256xf32> to vector<2x256xf32>
    %63 = tpu.concatenate %56, %58, %60, %62 in 0 : vector<2x256xf32>, vector<2x256xf32>, vector<2x256xf32>, vector<2x256xf32> -> vector<8x256xf32>
    %c0_30 = arith.constant 0 : index
    %c1024 = arith.constant 1024 : index
    %64 = vector.load %arg12[%c0_30, %c1024] : memref<8x2304xf32, #tpu.memory_space<vmem>>, vector<8x256xf32>
    tpu.vector_store %arg12[%c0_30, %c1024], %63 {strides = array<i32>} : memref<8x2304xf32, #tpu.memory_space<vmem>>, vector<8x256xf32>,
    %65 = vector.extract_strided_slice %42 {offsets = [0, 2, 0], sizes = [2, 1, 256], strides = [1, 1, 1]} : vector<2x8x256xf32> to vector<2x1x256xf32>
    %66 = vector.shape_cast %65 : vector<2x1x256xf32> to vector<2x256xf32>
    %67 = vector.extract_strided_slice %42 {offsets = [0, 4, 0], sizes = [2, 1, 256], strides = [1, 1, 1]} : vector<2x8x256xf32> to vector<2x1x256xf32>
    %68 = vector.shape_cast %67 : vector<2x1x256xf32> to vector<2x256xf32>
    %69 = vector.extract_strided_slice %44 {offsets = [0, 2, 0], sizes = [2, 1, 256], strides = [1, 1, 1]} : vector<2x8x256xf32> to vector<2x1x256xf32>
    %70 = vector.shape_cast %69 : vector<2x1x256xf32> to vector<2x256xf32>
    %71 = vector.extract_strided_slice %44 {offsets = [0, 4, 0], sizes = [2, 1, 256], strides = [1, 1, 1]} : vector<2x8x256xf32> to vector<2x1x256xf32>
    %72 = vector.shape_cast %71 : vector<2x1x256xf32> to vector<2x256xf32>
    %73 = tpu.concatenate %66, %68, %70, %72 in 0 : vector<2x256xf32>, vector<2x256xf32>, vector<2x256xf32>, vector<2x256xf32> -> vector<8x256xf32>
    %c0_31 = arith.constant 0 : index
    %c1280 = arith.constant 1280 : index
    %74 = vector.load %arg12[%c0_31, %c1280] : memref<8x2304xf32, #tpu.memory_space<vmem>>, vector<8x256xf32>
    tpu.vector_store %arg12[%c0_31, %c1280], %73 {strides = array<i32>} : memref<8x2304xf32, #tpu.memory_space<vmem>>, vector<8x256xf32>,
    %c0_32 = arith.constant 0 : index
    %c2_33 = arith.constant 2 : index
    %c0_34 = arith.constant 0 : index
    %c0_35 = arith.constant 0 : index
    %75 = vector.load %arg11[%c0_32, %c2_33, %c0_34, %c0_35] : memref<2x6x8x256xf32, #tpu.memory_space<vmem>>, vector<2x1x8x256xf32>
    %76 = vector.shape_cast %75 : vector<2x1x8x256xf32> to vector<2x8x256xf32>
    %c0_36 = arith.constant 0 : index
    %c4 = arith.constant 4 : index
    %c0_37 = arith.constant 0 : index
    %c0_38 = arith.constant 0 : index
    %77 = vector.load %arg11[%c0_36, %c4, %c0_37, %c0_38] : memref<2x6x8x256xf32, #tpu.memory_space<vmem>>, vector<2x1x8x256xf32>
    %78 = vector.shape_cast %77 : vector<2x1x8x256xf32> to vector<2x8x256xf32>
    %79 = vector.extract_strided_slice %76 {offsets = [0, 0, 0], sizes = [2, 1, 256], strides = [1, 1, 1]} : vector<2x8x256xf32> to vector<2x1x256xf32>
    %80 = vector.shape_cast %79 : vector<2x1x256xf32> to vector<2x256xf32>
    %81 = vector.extract_strided_slice %76 {offsets = [0, 2, 0], sizes = [2, 1, 256], strides = [1, 1, 1]} : vector<2x8x256xf32> to vector<2x1x256xf32>
    %82 = vector.shape_cast %81 : vector<2x1x256xf32> to vector<2x256xf32>
    %83 = vector.extract_strided_slice %78 {offsets = [0, 0, 0], sizes = [2, 1, 256], strides = [1, 1, 1]} : vector<2x8x256xf32> to vector<2x1x256xf32>
    %84 = vector.shape_cast %83 : vector<2x1x256xf32> to vector<2x256xf32>
    %85 = vector.extract_strided_slice %78 {offsets = [0, 2, 0], sizes = [2, 1, 256], strides = [1, 1, 1]} : vector<2x8x256xf32> to vector<2x1x256xf32>
    %86 = vector.shape_cast %85 : vector<2x1x256xf32> to vector<2x256xf32>
    %87 = tpu.concatenate %80, %82, %84, %86 in 0 : vector<2x256xf32>, vector<2x256xf32>, vector<2x256xf32>, vector<2x256xf32> -> vector<8x256xf32>
    %c0_39 = arith.constant 0 : index
    %c1536 = arith.constant 1536 : index
    %88 = vector.load %arg12[%c0_39, %c1536] : memref<8x2304xf32, #tpu.memory_space<vmem>>, vector<8x256xf32>
    tpu.vector_store %arg12[%c0_39, %c1536], %87 {strides = array<i32>} : memref<8x2304xf32, #tpu.memory_space<vmem>>, vector<8x256xf32>,
    %89 = vector.extract_strided_slice %76 {offsets = [0, 1, 0], sizes = [2, 1, 256], strides = [1, 1, 1]} : vector<2x8x256xf32> to vector<2x1x256xf32>
    %90 = vector.shape_cast %89 : vector<2x1x256xf32> to vector<2x256xf32>
    %91 = vector.extract_strided_slice %76 {offsets = [0, 3, 0], sizes = [2, 1, 256], strides = [1, 1, 1]} : vector<2x8x256xf32> to vector<2x1x256xf32>
    %92 = vector.shape_cast %91 : vector<2x1x256xf32> to vector<2x256xf32>
    %93 = vector.extract_strided_slice %78 {offsets = [0, 1, 0], sizes = [2, 1, 256], strides = [1, 1, 1]} : vector<2x8x256xf32> to vector<2x1x256xf32>
    %94 = vector.shape_cast %93 : vector<2x1x256xf32> to vector<2x256xf32>
    %95 = vector.extract_strided_slice %78 {offsets = [0, 3, 0], sizes = [2, 1, 256], strides = [1, 1, 1]} : vector<2x8x256xf32> to vector<2x1x256xf32>
    %96 = vector.shape_cast %95 : vector<2x1x256xf32> to vector<2x256xf32>
    %97 = tpu.concatenate %90, %92, %94, %96 in 0 : vector<2x256xf32>, vector<2x256xf32>, vector<2x256xf32>, vector<2x256xf32> -> vector<8x256xf32>
    %c0_40 = arith.constant 0 : index
    %c1792 = arith.constant 1792 : index
    %98 = vector.load %arg12[%c0_40, %c1792] : memref<8x2304xf32, #tpu.memory_space<vmem>>, vector<8x256xf32>
    tpu.vector_store %arg12[%c0_40, %c1792], %97 {strides = array<i32>} : memref<8x2304xf32, #tpu.memory_space<vmem>>, vector<8x256xf32>,
    %99 = vector.extract_strided_slice %76 {offsets = [0, 2, 0], sizes = [2, 1, 256], strides = [1, 1, 1]} : vector<2x8x256xf32> to vector<2x1x256xf32>
    %100 = vector.shape_cast %99 : vector<2x1x256xf32> to vector<2x256xf32>
    %101 = vector.extract_strided_slice %76 {offsets = [0, 4, 0], sizes = [2, 1, 256], strides = [1, 1, 1]} : vector<2x8x256xf32> to vector<2x1x256xf32>
    %102 = vector.shape_cast %101 : vector<2x1x256xf32> to vector<2x256xf32>
    %103 = vector.extract_strided_slice %78 {offsets = [0, 2, 0], sizes = [2, 1, 256], strides = [1, 1, 1]} : vector<2x8x256xf32> to vector<2x1x256xf32>
    %104 = vector.shape_cast %103 : vector<2x1x256xf32> to vector<2x256xf32>
    %105 = vector.extract_strided_slice %78 {offsets = [0, 4, 0], sizes = [2, 1, 256], strides = [1, 1, 1]} : vector<2x8x256xf32> to vector<2x1x256xf32>
    %106 = vector.shape_cast %105 : vector<2x1x256xf32> to vector<2x256xf32>
    %107 = tpu.concatenate %100, %102, %104, %106 in 0 : vector<2x256xf32>, vector<2x256xf32>, vector<2x256xf32>, vector<2x256xf32> -> vector<8x256xf32>
    %c0_41 = arith.constant 0 : index
    %c2048 = arith.constant 2048 : index
    %108 = vector.load %arg12[%c0_41, %c2048] : memref<8x2304xf32, #tpu.memory_space<vmem>>, vector<8x256xf32>
    tpu.vector_store %arg12[%c0_41, %c2048], %107 {strides = array<i32>} : memref<8x2304xf32, #tpu.memory_space<vmem>>, vector<8x256xf32>,
    tpu.wait_dma2 semaphore(%arg14 : memref<!tpu.dma_semaphore, #tpu.memory_space<semaphore_mem>>) src(%arg1 : memref<2304x256xbf16, #tpu.memory_space<any>>) dst(%arg13 : memref<2304x256xbf16, #tpu.memory_space<vmem>>)
    %c0_42 = arith.constant 0 : index
    %c0_43 = arith.constant 0 : index
    %109 = vector.load %arg12[%c0_42, %c0_43] : memref<8x2304xf32, #tpu.memory_space<vmem>>, vector<8x2304xf32>
    %110 = arith.truncf %109 : vector<8x2304xf32> to vector<8x2304xbf16>
    %c0_44 = arith.constant 0 : index
    %c0_45 = arith.constant 0 : index
    %111 = vector.load %arg13[%c0_44, %c0_45] : memref<2304x256xbf16, #tpu.memory_space<vmem>>, vector<2304x256xbf16>
    %cst_46 = arith.constant dense<0.000000e+00> : vector<8x256xf32>
    %112 = tpu.matmul %110, %111, %cst_46 {dimension_numbers = #tpu.dot_dimension_numbers<[1], [0], [0], [1], [0, 0, 1, 1], [], []>} : vector<8x2304xbf16>, vector<2304x256xbf16>, vector<8x256xf32> -> vector<8x256xf32>
    %cst_47 = arith.constant dense<0.000000e+00> : vector<256xf32>
    %113 = vector.multi_reduction <add>, %112, %cst_47 [0] : vector<8x256xf32> to vector<256xf32>
    %114 = vector.shape_cast %113 : vector<256xf32> to vector<1x256xf32>
    %cst_48 = arith.constant 8.000000e+00 : f32
    %115 = vector.broadcast %cst_48 : f32 to vector<1x256xf32>
    %116 = arith.divf %114, %115 : vector<1x256xf32>
    %117 = vector.broadcast %116 : vector<1x256xf32> to vector<8x256xf32>
    %118 = arith.subf %112, %117 : vector<8x256xf32>
    %119 = arith.mulf %118, %118 : vector<8x256xf32>
    %cst_49 = arith.constant dense<0.000000e+00> : vector<256xf32>
    %120 = vector.multi_reduction <add>, %119, %cst_49 [0] : vector<8x256xf32> to vector<256xf32>
    %121 = vector.shape_cast %120 : vector<256xf32> to vector<1x256xf32>
    %cst_50 = arith.constant 8.000000e+00 : f32
    %122 = vector.broadcast %cst_50 : f32 to vector<1x256xf32>
    %123 = arith.divf %121, %122 : vector<1x256xf32>
    %c0_51 = arith.constant 0 : index
    %c0_52 = arith.constant 0 : index
    %124 = vector.load %arg2[%c0_51, %c0_52] : memref<1x256xf32, #tpu.memory_space<vmem>>, vector<1x256xf32>
    %125 = vector.broadcast %116 : vector<1x256xf32> to vector<8x256xf32>
    %126 = arith.subf %112, %125 : vector<8x256xf32>
    %127 = vector.broadcast %124 : vector<1x256xf32> to vector<8x256xf32>
    %128 = arith.mulf %127, %126 : vector<8x256xf32>
    %cst_53 = arith.constant 9.99999974E-6 : f32
    %129 = vector.broadcast %cst_53 : f32 to vector<1x256xf32>
    %130 = arith.addf %123, %129 : vector<1x256xf32>
    %131 = math.rsqrt %130 : vector<1x256xf32>
    %132 = vector.broadcast %131 : vector<1x256xf32> to vector<8x256xf32>
    %133 = arith.mulf %128, %132 : vector<8x256xf32>
    %c0_54 = arith.constant 0 : index
    %c0_55 = arith.constant 0 : index
    %134 = vector.load %arg3[%c0_54, %c0_55] : memref<1x256xf32, #tpu.memory_space<vmem>>, vector<1x256xf32>
    %135 = vector.broadcast %134 : vector<1x256xf32> to vector<8x256xf32>
    %136 = arith.addf %133, %135 : vector<8x256xf32>
    %cst_56 = arith.constant 0.000000e+00 : f32
    %137 = vector.broadcast %cst_56 : f32 to vector<8x256xf32>
    %138 = arith.maximumf %136, %137 : vector<8x256xf32>
    %139 = vector.shape_cast %138 : vector<8x256xf32> to vector<4x2x256xf32>
    %cst_57 = arith.constant dense<0.000000e+00> : vector<2x256xf32>
    %140 = vector.multi_reduction <add>, %139, %cst_57 [0] : vector<4x2x256xf32> to vector<2x256xf32>
    %cst_58 = arith.constant 4.000000e+00 : f32
    %141 = vector.broadcast %cst_58 : f32 to vector<2x256xf32>
    %142 = arith.divf %140, %141 : vector<2x256xf32>
    %143 = arith.truncf %142 : vector<2x256xf32> to vector<2x256xbf16>
    %c0_59 = arith.constant 0 : index
    %c0_60 = arith.constant 0 : index
    %144 = vector.load %arg4[%c0_59, %c0_60] : memref<256x128xbf16, #tpu.memory_space<vmem>>, vector<256x128xbf16>
    %cst_61 = arith.constant dense<0.000000e+00> : vector<2x128xf32>
    %145 = tpu.matmul %143, %144, %cst_61 {dimension_numbers = #tpu.dot_dimension_numbers<[1], [0], [0], [1], [0, 0, 1, 1], [], []>} : vector<2x256xbf16>, vector<256x128xbf16>, vector<2x128xf32> -> vector<2x128xf32>
    %c0_62 = arith.constant 0 : index
    %c0_63 = arith.constant 0 : index
    %146 = vector.load %arg5[%c0_62, %c0_63] : memref<1x128xf32, #tpu.memory_space<vmem>>, vector<1x128xf32>
    %147 = vector.broadcast %146 : vector<1x128xf32> to vector<2x128xf32>
    %148 = arith.addf %145, %147 : vector<2x128xf32>
    %cst_64 = arith.constant 0.000000e+00 : f32
    %149 = vector.broadcast %cst_64 : f32 to vector<2x128xf32>
    %150 = arith.maximumf %148, %149 : vector<2x128xf32>
    %cst_65 = arith.constant dense<0.000000e+00> : vector<128xf32>
    %151 = vector.multi_reduction <add>, %150, %cst_65 [0] : vector<2x128xf32> to vector<128xf32>
    %152 = vector.shape_cast %151 : vector<128xf32> to vector<1x128xf32>
    %cst_66 = arith.constant 2.000000e+00 : f32
    %153 = vector.broadcast %cst_66 : f32 to vector<1x128xf32>
    %154 = arith.divf %152, %153 : vector<1x128xf32>
    %155 = vector.broadcast %154 : vector<1x128xf32> to vector<2x128xf32>
    %156 = arith.subf %150, %155 : vector<2x128xf32>
    %157 = arith.mulf %156, %156 : vector<2x128xf32>
    %cst_67 = arith.constant dense<0.000000e+00> : vector<128xf32>
    %158 = vector.multi_reduction <add>, %157, %cst_67 [0] : vector<2x128xf32> to vector<128xf32>
    %159 = vector.shape_cast %158 : vector<128xf32> to vector<1x128xf32>
    %cst_68 = arith.constant 2.000000e+00 : f32
    %160 = vector.broadcast %cst_68 : f32 to vector<1x128xf32>
    %161 = arith.divf %159, %160 : vector<1x128xf32>
    %c0_69 = arith.constant 0 : index
    %c0_70 = arith.constant 0 : index
    %162 = vector.load %arg6[%c0_69, %c0_70] : memref<1x128xf32, #tpu.memory_space<vmem>>, vector<1x128xf32>
    %163 = vector.broadcast %154 : vector<1x128xf32> to vector<2x128xf32>
    %164 = arith.subf %150, %163 : vector<2x128xf32>
    %165 = vector.broadcast %162 : vector<1x128xf32> to vector<2x128xf32>
    %166 = arith.mulf %165, %164 : vector<2x128xf32>
    %cst_71 = arith.constant 9.99999974E-6 : f32
    %167 = vector.broadcast %cst_71 : f32 to vector<1x128xf32>
    %168 = arith.addf %161, %167 : vector<1x128xf32>
    %169 = math.rsqrt %168 : vector<1x128xf32>
    %170 = vector.broadcast %169 : vector<1x128xf32> to vector<2x128xf32>
    %171 = arith.mulf %166, %170 : vector<2x128xf32>
    %c0_72 = arith.constant 0 : index
    %c0_73 = arith.constant 0 : index
    %172 = vector.load %arg7[%c0_72, %c0_73] : memref<1x128xf32, #tpu.memory_space<vmem>>, vector<1x128xf32>
    %173 = vector.broadcast %172 : vector<1x128xf32> to vector<2x128xf32>
    %174 = arith.addf %171, %173 : vector<2x128xf32>
    %c0_74 = arith.constant 0 : index
    %c0_75 = arith.constant 0 : index
    %175 = vector.load %arg8[%c0_74, %c0_75] : memref<128x10xf32, #tpu.memory_space<vmem>>, vector<128x10xf32>
    %cst_76 = arith.constant dense<0.000000e+00> : vector<2x10xf32>
    %176 = tpu.matmul %174, %175, %cst_76 {dimension_numbers = #tpu.dot_dimension_numbers<[1], [0], [0], [1], [0, 0, 1, 1], [], []>} : vector<2x128xf32>, vector<128x10xf32>, vector<2x10xf32> -> vector<2x10xf32>
    %c0_77 = arith.constant 0 : index
    %c0_78 = arith.constant 0 : index
    %177 = vector.load %arg9[%c0_77, %c0_78] : memref<1x10xf32, #tpu.memory_space<vmem>>, vector<1x10xf32>
    %178 = vector.broadcast %177 : vector<1x10xf32> to vector<2x10xf32>
    %179 = arith.addf %176, %178 : vector<2x10xf32>
    %c0_79 = arith.constant 0 : index
    %c0_80 = arith.constant 0 : index
    %180 = vector.load %arg10[%c0_79, %c0_80] : memref<2x10xf32, #tpu.memory_space<vmem>>, vector<2x10xf32>
    tpu.vector_store %arg10[%c0_79, %c0_80], %179 {strides = array<i32>} : memref<2x10xf32, #tpu.memory_space<vmem>>, vector<2x10xf32>,
    return
  }
}

</mosaic_0001>

<llo_original>
// kernel: vgg_tinyserver_0_forward.1
$region0: #{vgg_tinyserver_0_forward.1}
  #allocation0 [shape = 'u32[]', space=smem, size = 0x4, offset = 0x4, fixed_abs, tag = 'smem constant byte address 0x4 - core index']
  #allocation1 [shape = 'u32[144,128]{1,0:T(1,128)}', space=vmem, size = 0x12000, scoped, tag = 'internal scratch']
  #allocation2 [shape = 'f32[2,6,8,256]{3,2,1,0:T(8,128)}', space=vmem, size = 0x18000, scoped, tag = 'scratch operand']
  #allocation3 [shape = 'f32[8,2304]{1,0:T(8,128)}', space=vmem, size = 0x12000, scoped, tag = 'scratch operand']
  #allocation4 [shape = 'bf16[2304,256]{1,0:T(16,128)(2,1)}', space=vmem, size = 0x120000, scoped, tag = 'scratch operand']
  #allocation5 [shape = 's32[1]{0}', space=sflag, size = 0x4, scoped, tag = 'scratch operand']
  #allocation19 [shape = 's32[]', space=sflag, size = 0x4, offset = 0, fixed_abs, tag = 'sflag constant byte address 0x0 - dummy sync flag']
  %s0 = inlined_call_operand.vmem [shape: f32[64,2,256], index: 0, kind: input, shape index: {}]
  %s1 = inlined_call_operand.hbm [shape: bf16[2304,256], index: 1, kind: input, shape index: {}]
  %s2 = inlined_call_operand.hbm [shape: f32[1,256], index: 2, kind: input, shape index: {}]
  %s3 = inlined_call_operand.hbm [shape: f32[1,256], index: 3, kind: input, shape index: {}]
  %s4 = inlined_call_operand.hbm [shape: bf16[256,128], index: 4, kind: input, shape index: {}]
  %s5 = inlined_call_operand.hbm [shape: f32[1,128], index: 5, kind: input, shape index: {}]
  %s6 = inlined_call_operand.hbm [shape: f32[1,128], index: 6, kind: input, shape index: {}]
  %s7 = inlined_call_operand.hbm [shape: f32[1,128], index: 7, kind: input, shape index: {}]
  %s8 = inlined_call_operand.vmem [shape: f32[128,10], index: 8, kind: input, shape index: {}]
  %s9 = inlined_call_operand.hbm [shape: f32[1,10], index: 9, kind: input, shape index: {}]
  %s10 = inlined_call_operand.hbm [shape: f32[2,10], index: 10, kind: output, shape index: {}]
  %s11 = sld [smem:[#allocation0]]
  $region74: #{vgg_tinyserver_0_forward.1} parent=0
    _
  %s13 = ssub.s32 1, %s11
  %s14 = scalar_select 0, %s13, %s11
  $region1: #{vgg_tinyserver_0_forward.1} parent=0
    #allocation6 [shape = 'u8[1024]{0}', space=vmem, size = 0x400, scoped, tag = 'input window, operand 2, single buffered']
    #allocation7 [shape = 's32[1]{0}', space=sflag, size = 0x4, scoped, tag = 'scoped memory for vgg_tinyserver_0_forward.1']
    #allocation8 [shape = 's32[1]{0}', space=sflag, size = 0x4, scoped, tag = 'scoped memory for vgg_tinyserver_0_forward.1']
    #allocation9 [shape = 'u8[1024]{0}', space=vmem, size = 0x400, scoped, tag = 'input window, operand 3, single buffered']
    #allocation10 [shape = 's32[1]{0}', space=sflag, size = 0x4, scoped, tag = 'scoped memory for vgg_tinyserver_0_forward.1']
    #allocation11 [shape = 'u8[65536]{0}', space=vmem, size = 0x10000, scoped, tag = 'input window, operand 4, single buffered']
    #allocation12 [shape = 'u8[512]{0}', space=vmem, size = 0x400, scoped, tag = 'input window, operand 5, single buffered']
    #allocation13 [shape = 's32[1]{0}', space=sflag, size = 0x4, scoped, tag = 'scoped memory for vgg_tinyserver_0_forward.1']
    #allocation14 [shape = 'u8[512]{0}', space=vmem, size = 0x400, scoped, tag = 'input window, operand 6, single buffered']
    #allocation15 [shape = 'u8[512]{0}', space=vmem, size = 0x400, scoped, tag = 'input window, operand 7, single buffered']
    #allocation16 [shape = 's32[1]{0}', space=sflag, size = 0x4, scoped, tag = 'scoped memory for vgg_tinyserver_0_forward.1']
    #allocation17 [shape = 'u8[512]{0}', space=vmem, size = 0x400, scoped, tag = 'input window, operand 9, single buffered']
    #allocation18 [shape = 'u8[1024]{0}', space=vmem, size = 0x400, scoped, tag = 'output window, operand 0, single buffered']
    #allocation20 [shape = 'u32[9]{0}', space=smem, size = 0x24, scoped, tag = 'DMA stride descriptor']
    %15 = vsyncpa [#allocation7], 0
    %16 = vsyncpa [#allocation10], 0
    %17 = vsyncpa [#allocation13], 0
    %18 = vsyncpa [#allocation16], 0
    %19 = vsyncpa [#allocation8], 0
    // Predicated region
    $region2: #{vgg_tinyserver_0_forward.1} parent=1 // pred_check
      _
    $region3: #{vgg_tinyserver_0_forward.1} parent=1 // pred_check_branch
      %21 = sbr.rel (0) target = $region5
    $region4: #{vgg_tinyserver_0_forward.1} parent=1 // pred_region
      _
    $region5: #{vgg_tinyserver_0_forward.1} parent=1 // pred_fallthru
      _
    // Predicated region
    $region6: #{vgg_tinyserver_0_forward.1} parent=1 // pred_check
      _
    $region7: #{vgg_tinyserver_0_forward.1} parent=1 // pred_check_branch
      %23 = sbr.rel (0) target = $region9
    $region8: #{vgg_tinyserver_0_forward.1} parent=1 // pred_region
      %s25 = ssub.s32 32, 32
      %26 = vsyncadd [#allocation7], %s25
      %s28 = sshll.u32 [#allocation6], 4
      %s29 = int_to_ptr.vmem [resolvable:$true] %s28
      %31 = dma.hbm_to_vmem [thread:$0]  %s2, 32, %s29, [#allocation7]
    $region9: #{vgg_tinyserver_0_forward.1} parent=1 // pred_fallthru
      _
    // Predicated region
    $region10: #{vgg_tinyserver_0_forward.1} parent=1 // pred_check
      _
    $region11: #{vgg_tinyserver_0_forward.1} parent=1 // pred_check_branch
      %33 = sbr.rel (0) target = $region13
    $region12: #{vgg_tinyserver_0_forward.1} parent=1 // pred_region
      %s35 = ssub.s32 32, 32
      %36 = vsyncadd [#allocation10], %s35
      %s38 = sshll.u32 [#allocation9], 4
      %s39 = int_to_ptr.vmem [resolvable:$true] %s38
      %41 = dma.hbm_to_vmem [thread:$0]  %s3, 32, %s39, [#allocation10]
    $region13: #{vgg_tinyserver_0_forward.1} parent=1 // pred_fallthru
      _
    // Predicated region
    $region14: #{vgg_tinyserver_0_forward.1} parent=1 // pred_check
      _
    $region15: #{vgg_tinyserver_0_forward.1} parent=1 // pred_check_branch
      %43 = sbr.rel (0) target = $region17
    $region16: #{vgg_tinyserver_0_forward.1} parent=1 // pred_region
      %s45 = ssub.s32 2048, 2048
      %46 = vsyncadd [#allocation10], %s45
      %s47 = sshll.u32 [#allocation11], 4
      %s48 = int_to_ptr.vmem [resolvable:$true] %s47
      %53 = dma.hbm_to_vmem [thread:$0]  %s4, 2048, %s48, [#allocation10], 64, 64, 4
    $region17: #{vgg_tinyserver_0_forward.1} parent=1 // pred_fallthru
      _
    // Predicated region
    $region18: #{vgg_tinyserver_0_forward.1} parent=1 // pred_check
      _
    $region19: #{vgg_tinyserver_0_forward.1} parent=1 // pred_check_branch
      %55 = sbr.rel (0) target = $region21
    $region20: #{vgg_tinyserver_0_forward.1} parent=1 // pred_region
      %s57 = ssub.s32 16, 16
      %58 = vsyncadd [#allocation13], %s57
      %s60 = sshll.u32 [#allocation12], 4
      %s61 = int_to_ptr.vmem [resolvable:$true] %s60
      %63 = dma.hbm_to_vmem [thread:$0]  %s5, 16, %s61, [#allocation13]
    $region21: #{vgg_tinyserver_0_forward.1} parent=1 // pred_fallthru
      _
    // Predicated region
    $region22: #{vgg_tinyserver_0_forward.1} parent=1 // pred_check
      _
    $region23: #{vgg_tinyserver_0_forward.1} parent=1 // pred_check_branch
      %65 = sbr.rel (0) target = $region25
    $region24: #{vgg_tinyserver_0_forward.1} parent=1 // pred_region
      %s67 = ssub.s32 16, 16
      %68 = vsyncadd [#allocation13], %s67
      %s70 = sshll.u32 [#allocation14], 4
      %s71 = int_to_ptr.vmem [resolvable:$true] %s70
      %73 = dma.hbm_to_vmem [thread:$0]  %s6, 16, %s71, [#allocation13]
    $region25: #{vgg_tinyserver_0_forward.1} parent=1 // pred_fallthru
      _
    // Predicated region
    $region26: #{vgg_tinyserver_0_forward.1} parent=1 // pred_check
      _
    $region27: #{vgg_tinyserver_0_forward.1} parent=1 // pred_check_branch
      %75 = sbr.rel (0) target = $region29
    $region28: #{vgg_tinyserver_0_forward.1} parent=1 // pred_region
      %s77 = ssub.s32 16, 16
      %78 = vsyncadd [#allocation16], %s77
      %s80 = sshll.u32 [#allocation15], 4
      %s81 = int_to_ptr.vmem [resolvable:$true] %s80
      %83 = dma.hbm_to_vmem [thread:$0]  %s7, 16, %s81, [#allocation16]
    $region29: #{vgg_tinyserver_0_forward.1} parent=1 // pred_fallthru
      _
    // Predicated region
    $region30: #{vgg_tinyserver_0_forward.1} parent=1 // pred_check
      _
    $region31: #{vgg_tinyserver_0_forward.1} parent=1 // pred_check_branch
      %85 = sbr.rel (0) target = $region33
    $region32: #{vgg_tinyserver_0_forward.1} parent=1 // pred_region
      _
    $region33: #{vgg_tinyserver_0_forward.1} parent=1 // pred_fallthru
      _
    // Predicated region
    $region34: #{vgg_tinyserver_0_forward.1} parent=1 // pred_check
      _
    $region35: #{vgg_tinyserver_0_forward.1} parent=1 // pred_check_branch
      %87 = sbr.rel (0) target = $region37
    $region36: #{vgg_tinyserver_0_forward.1} parent=1 // pred_region
      %s89 = ssub.s32 16, 16
      %90 = vsyncadd [#allocation16], %s89
      %s92 = sshll.u32 [#allocation17], 4
      %s93 = int_to_ptr.vmem [resolvable:$true] %s92
      %95 = dma.hbm_to_vmem [thread:$0]  %s9, 16, %s93, [#allocation16]
    $region37: #{vgg_tinyserver_0_forward.1} parent=1 // pred_fallthru
      _
    // Predicated region
    $region38: #{vgg_tinyserver_0_forward.1} parent=1 // pred_check
      _
    $region39: #{vgg_tinyserver_0_forward.1} parent=1 // pred_check_branch
      %97 = sbr.rel (0) target = $region41
    $region40: #{vgg_tinyserver_0_forward.1} parent=1 // pred_region
      %98 = dma.done [#allocation7], 32
    $region41: #{vgg_tinyserver_0_forward.1} parent=1 // pred_fallthru
      _
    // Predicated region
    $region42: #{vgg_tinyserver_0_forward.1} parent=1 // pred_check
      _
    $region43: #{vgg_tinyserver_0_forward.1} parent=1 // pred_check_branch
      %100 = sbr.rel (0) target = $region45
    $region44: #{vgg_tinyserver_0_forward.1} parent=1 // pred_region
      %101 = dma.done [#allocation10], 32
    $region45: #{vgg_tinyserver_0_forward.1} parent=1 // pred_fallthru
      _
    // Predicated region
    $region46: #{vgg_tinyserver_0_forward.1} parent=1 // pred_check
      _
    $region47: #{vgg_tinyserver_0_forward.1} parent=1 // pred_check_branch
      %103 = sbr.rel (0) target = $region49
    $region48: #{vgg_tinyserver_0_forward.1} parent=1 // pred_region
      %104 = dma.done [#allocation10], 2048
    $region49: #{vgg_tinyserver_0_forward.1} parent=1 // pred_fallthru
      _
    // Predicated region
    $region50: #{vgg_tinyserver_0_forward.1} parent=1 // pred_check
      _
    $region51: #{vgg_tinyserver_0_forward.1} parent=1 // pred_check_branch
      %106 = sbr.rel (0) target = $region53
    $region52: #{vgg_tinyserver_0_forward.1} parent=1 // pred_region
      %107 = dma.done [#allocation13], 16
    $region53: #{vgg_tinyserver_0_forward.1} parent=1 // pred_fallthru
      _
    // Predicated region
    $region54: #{vgg_tinyserver_0_forward.1} parent=1 // pred_check
      _
    $region55: #{vgg_tinyserver_0_forward.1} parent=1 // pred_check_branch
      %109 = sbr.rel (0) target = $region57
    $region56: #{vgg_tinyserver_0_forward.1} parent=1 // pred_region
      %110 = dma.done [#allocation13], 16
    $region57: #{vgg_tinyserver_0_forward.1} parent=1 // pred_fallthru
      _
    // Predicated region
    $region58: #{vgg_tinyserver_0_forward.1} parent=1 // pred_check
      _
    $region59: #{vgg_tinyserver_0_forward.1} parent=1 // pred_check_branch
      %112 = sbr.rel (0) target = $region61
    $region60: #{vgg_tinyserver_0_forward.1} parent=1 // pred_region
      %113 = dma.done [#allocation16], 16
    $region61: #{vgg_tinyserver_0_forward.1} parent=1 // pred_fallthru
      _
    // Predicated region
    $region62: #{vgg_tinyserver_0_forward.1} parent=1 // pred_check
      _
    $region63: #{vgg_tinyserver_0_forward.1} parent=1 // pred_check_branch
      %115 = sbr.rel (0) target = $region65
    $region64: #{vgg_tinyserver_0_forward.1} parent=1 // pred_region
      %116 = dma.done [#allocation16], 16
    $region65: #{vgg_tinyserver_0_forward.1} parent=1 // pred_fallthru
      _
    %s119 = sshll.u32 1, 14
    %s120 = sxor.u32 4294967295, %s119
    %s122 = sld [smem:[#allocation0]]
    %s123 = sadd.s32 2, %s122
    %s125 = sshll.u32 7, 26
    %s126 = sxor.u32 4294967295, %s125
    %s127 = sand.u32 0, %s126
    %s128 = sshll.u32 %s123, 26
    %s129 = sor.u32 %s127, %s128
    %s130 = sshll.u32 [#allocation4], 4
    %s131 = int_to_ptr.vmem [resolvable:$true] %s130
    %134 = sst [smem:[#allocation20]] 256
    %s135 = scalar_lea.smem [#allocation20], 1
    %136 = sst [smem:[%s135]] 256
    %s137 = scalar_lea.smem [#allocation20], 2
    %138 = sst [smem:[%s137]] 2
    %s139 = scalar_lea.smem [#allocation20], 3
    %140 = sst [smem:[%s139]] 64
    %s141 = scalar_lea.smem [#allocation20], 4
    %142 = sst [smem:[%s141]] 128
    %s143 = scalar_lea.smem [#allocation20], 5
    %144 = sst [smem:[%s143]] 2
    %s145 = scalar_lea.smem [#allocation20], 6
    %146 = sst [smem:[%s145]] 128
    %s147 = scalar_lea.smem [#allocation20], 7
    %148 = sst [smem:[%s147]] 64
    %s149 = scalar_lea.smem [#allocation20], 8
    %150 = sst [smem:[%s149]] 4
    %152 = dma.general %s1, 36864, %s131, [#allocation5], [#allocation19], [#allocation20], %s129, 0
    %v153 = vld [vmem:[%s0] sm:$0xf]
    %v154 = vld [vmem:[%s0 + $0x4] sm:$0xf]
    %v155 = vld [vmem:[%s0 + $0x8] sm:$0xf]
    %v156 = vld [vmem:[%s0 + $0xc] sm:$0xf]
    %v157 = vld [vmem:[%s0 + $0x10] sm:$0xf]
    %v158 = vld [vmem:[%s0 + $0x14] sm:$0xf]
    %v159 = vld [vmem:[%s0 + $0x18] sm:$0xf]
    %v160 = vld [vmem:[%s0 + $0x1c] sm:$0xf]
    %v161 = vld [vmem:[%s0 + $0x20] sm:$0xf]
    %v162 = vld [vmem:[%s0 + $0x24] sm:$0xf]
    %v163 = vld [vmem:[%s0 + $0x28] sm:$0xf]
    %v164 = vld [vmem:[%s0 + $0x2c] sm:$0xf]
    %v165 = vld [vmem:[%s0 + $0x30] sm:$0xf]
    %v166 = vld [vmem:[%s0 + $0x34] sm:$0xf]
    %v167 = vld [vmem:[%s0 + $0x38] sm:$0xf]
    %v168 = vld [vmem:[%s0 + $0x3c] sm:$0xf]
    %v169 = vld [vmem:[%s0 + $0x40] sm:$0xf]
    %v170 = vld [vmem:[%s0 + $0x44] sm:$0xf]
    %v171 = vld [vmem:[%s0 + $0x48] sm:$0xf]
    %v172 = vld [vmem:[%s0 + $0x4c] sm:$0xf]
    %v173 = vld [vmem:[%s0 + $0x50] sm:$0xf]
    %v174 = vld [vmem:[%s0 + $0x54] sm:$0xf]
    %v175 = vld [vmem:[%s0 + $0x58] sm:$0xf]
    %v176 = vld [vmem:[%s0 + $0x5c] sm:$0xf]
    %v177 = vld [vmem:[%s0 + $0x60] sm:$0xf]
    %v178 = vld [vmem:[%s0 + $0x64] sm:$0xf]
    %v179 = vld [vmem:[%s0 + $0x68] sm:$0xf]
    %v180 = vld [vmem:[%s0 + $0x6c] sm:$0xf]
    %v181 = vld [vmem:[%s0 + $0x70] sm:$0xf]
    %v182 = vld [vmem:[%s0 + $0x74] sm:$0xf]
    %v183 = vld [vmem:[%s0 + $0x78] sm:$0xf]
    %v184 = vld [vmem:[%s0 + $0x7c] sm:$0xf]
    %v185 = vld [vmem:[%s0 + $0x80] sm:$0xf]
    %v186 = vld [vmem:[%s0 + $0x84] sm:$0xf]
    %v187 = vld [vmem:[%s0 + $0x88] sm:$0xf]
    %v188 = vld [vmem:[%s0 + $0x8c] sm:$0xf]
    %v189 = vld [vmem:[%s0 + $0x90] sm:$0xf]
    %v190 = vld [vmem:[%s0 + $0x94] sm:$0xf]
    %v191 = vld [vmem:[%s0 + $0x98] sm:$0xf]
    %v192 = vld [vmem:[%s0 + $0x9c] sm:$0xf]
    %v193 = vld [vmem:[%s0 + $0xa0] sm:$0xf]
    %v194 = vld [vmem:[%s0 + $0xa4] sm:$0xf]
    %v195 = vld [vmem:[%s0 + $0xa8] sm:$0xf]
    %v196 = vld [vmem:[%s0 + $0xac] sm:$0xf]
    %v197 = vld [vmem:[%s0 + $0xb0] sm:$0xf]
    %v198 = vld [vmem:[%s0 + $0xb4] sm:$0xf]
    %v199 = vld [vmem:[%s0 + $0xb8] sm:$0xf]
    %v200 = vld [vmem:[%s0 + $0xbc] sm:$0xf]
    %v201 = vld [vmem:[%s0 + $0xc0] sm:$0xf]
    %v202 = vld [vmem:[%s0 + $0xc4] sm:$0xf]
    %v203 = vld [vmem:[%s0 + $0xc8] sm:$0xf]
    %v204 = vld [vmem:[%s0 + $0xcc] sm:$0xf]
    %v205 = vld [vmem:[%s0 + $0xd0] sm:$0xf]
    %v206 = vld [vmem:[%s0 + $0xd4] sm:$0xf]
    %v207 = vld [vmem:[%s0 + $0xd8] sm:$0xf]
    %v208 = vld [vmem:[%s0 + $0xdc] sm:$0xf]
    %v209 = vld [vmem:[%s0 + $0xe0] sm:$0xf]
    %v210 = vld [vmem:[%s0 + $0xe4] sm:$0xf]
    %v211 = vld [vmem:[%s0 + $0xe8] sm:$0xf]
    %v212 = vld [vmem:[%s0 + $0xec] sm:$0xf]
    %v213 = vld [vmem:[%s0 + $0xf0] sm:$0xf]
    %v214 = vld [vmem:[%s0 + $0xf4] sm:$0xf]
    %v215 = vld [vmem:[%s0 + $0xf8] sm:$0xf]
    %v216 = vld [vmem:[%s0 + $0xfc] sm:$0xf]
    %v282 = vunpack.c.l.s4 1983009808
    %v283 = vunpack.c.0.s8 %v282
    %v284 = vlaneseq
    %v285 = vshrl.u32 %v284, 7
    %v286 = vsub.s32 %v283, %v285
    %v287 = vrot.slane %v153, %v286
    %v288 = vcombine.high %v287, %v287
    %v290 = vunpack.c.l.s4 1983009808
    %v291 = vunpack.c.0.s8 %v290
    %v292 = vlaneseq
    %v293 = vshrl.u32 %v292, 7
    %v294 = vsub.s32 %v291, %v293
    %v295 = vrot.slane %v154, %v294
    %v296 = vcombine.high %v295, %v295
    %v298 = vunpack.c.l.s4 1983009808
    %v299 = vunpack.c.0.s8 %v298
    %v300 = vlaneseq
    %v301 = vshrl.u32 %v300, 7
    %v302 = vsub.s32 %v299, %v301
    %v303 = vrot.slane %v155, %v302
    %v304 = vcombine.high %v303, %v303
    %v306 = vunpack.c.l.s4 1983009808
    %v307 = vunpack.c.0.s8 %v306
    %v308 = vlaneseq
    %v309 = vshrl.u32 %v308, 7
    %v310 = vsub.s32 %v307, %v309
    %v311 = vrot.slane %v156, %v310
    %v312 = vcombine.high %v311, %v311
    %v314 = vunpack.c.l.s4 1983009808
    %v315 = vunpack.c.0.s8 %v314
    %v316 = vlaneseq
    %v317 = vshrl.u32 %v316, 7
    %v318 = vsub.s32 %v315, %v317
    %v319 = vrot.slane %v157, %v318
    %v320 = vcombine.high %v319, %v319
    %v322 = vunpack.c.l.s4 1983009808
    %v323 = vunpack.c.0.s8 %v322
    %v324 = vlaneseq
    %v325 = vshrl.u32 %v324, 7
    %v326 = vsub.s32 %v323, %v325
    %v327 = vrot.slane %v158, %v326
    %v328 = vcombine.high %v327, %v327
    %v330 = vunpack.c.l.s4 1983009808
    %v331 = vunpack.c.0.s8 %v330
    %v332 = vlaneseq
    %v333 = vshrl.u32 %v332, 7
    %v334 = vsub.s32 %v331, %v333
    %v335 = vrot.slane %v159, %v334
    %v336 = vcombine.high %v335, %v335
    %v338 = vunpack.c.l.s4 1983009808
    %v339 = vunpack.c.0.s8 %v338
    %v340 = vlaneseq
    %v341 = vshrl.u32 %v340, 7
    %v342 = vsub.s32 %v339, %v341
    %v343 = vrot.slane %v160, %v342
    %v344 = vcombine.high %v343, %v343
    %v346 = vunpack.c.l.s4 1983009808
    %v347 = vunpack.c.0.s8 %v346
    %v348 = vlaneseq
    %v349 = vshrl.u32 %v348, 7
    %v350 = vsub.s32 %v347, %v349
    %v351 = vrot.slane %v161, %v350
    %v352 = vcombine.high %v351, %v351
    %v354 = vunpack.c.l.s4 1983009808
    %v355 = vunpack.c.0.s8 %v354
    %v356 = vlaneseq
    %v357 = vshrl.u32 %v356, 7
    %v358 = vsub.s32 %v355, %v357
    %v359 = vrot.slane %v162, %v358
    %v360 = vcombine.high %v359, %v359
    %v362 = vunpack.c.l.s4 1983009808
    %v363 = vunpack.c.0.s8 %v362
    %v364 = vlaneseq
    %v365 = vshrl.u32 %v364, 7
    %v366 = vsub.s32 %v363, %v365
    %v367 = vrot.slane %v163, %v366
    %v368 = vcombine.high %v367, %v367
    %v370 = vunpack.c.l.s4 1983009808
    %v371 = vunpack.c.0.s8 %v370
    %v372 = vlaneseq
    %v373 = vshrl.u32 %v372, 7
    %v374 = vsub.s32 %v371, %v373
    %v375 = vrot.slane %v164, %v374
    %v376 = vcombine.high %v375, %v375
    %v378 = vunpack.c.l.s4 1983009808
    %v379 = vunpack.c.0.s8 %v378
    %v380 = vlaneseq
    %v381 = vshrl.u32 %v380, 7
    %v382 = vsub.s32 %v379, %v381
    %v383 = vrot.slane %v165, %v382
    %v384 = vcombine.high %v383, %v383
    %v386 = vunpack.c.l.s4 1983009808
    %v387 = vunpack.c.0.s8 %v386
    %v388 = vlaneseq
    %v389 = vshrl.u32 %v388, 7
    %v390 = vsub.s32 %v387, %v389
    %v391 = vrot.slane %v166, %v390
    %v392 = vcombine.high %v391, %v391
    %v394 = vunpack.c.l.s4 1983009808
    %v395 = vunpack.c.0.s8 %v394
    %v396 = vlaneseq
    %v397 = vshrl.u32 %v396, 7
    %v398 = vsub.s32 %v395, %v397
    %v399 = vrot.slane %v167, %v398
    %v400 = vcombine.high %v399, %v399
    %v402 = vunpack.c.l.s4 1983009808
    %v403 = vunpack.c.0.s8 %v402
    %v404 = vlaneseq
    %v405 = vshrl.u32 %v404, 7
    %v406 = vsub.s32 %v403, %v405
    %v407 = vrot.slane %v168, %v406
    %v408 = vcombine.high %v407, %v407
    %v410 = vunpack.c.l.s4 1983009808
    %v411 = vunpack.c.0.s8 %v410
    %v412 = vlaneseq
    %v413 = vshrl.u32 %v412, 7
    %v414 = vsub.s32 %v411, %v413
    %v415 = vrot.slane %v169, %v414
    %v416 = vcombine.high %v415, %v415
    %v418 = vunpack.c.l.s4 1983009808
    %v419 = vunpack.c.0.s8 %v418
    %v420 = vlaneseq
    %v421 = vshrl.u32 %v420, 7
    %v422 = vsub.s32 %v419, %v421
    %v423 = vrot.slane %v170, %v422
    %v424 = vcombine.high %v423, %v423
    %v426 = vunpack.c.l.s4 1983009808
    %v427 = vunpack.c.0.s8 %v426
    %v428 = vlaneseq
    %v429 = vshrl.u32 %v428, 7
    %v430 = vsub.s32 %v427, %v429
    %v431 = vrot.slane %v171, %v430
    %v432 = vcombine.high %v431, %v431
    %v434 = vunpack.c.l.s4 1983009808
    %v435 = vunpack.c.0.s8 %v434
    %v436 = vlaneseq
    %v437 = vshrl.u32 %v436, 7
    %v438 = vsub.s32 %v435, %v437
    %v439 = vrot.slane %v172, %v438
    %v440 = vcombine.high %v439, %v439
    %v442 = vunpack.c.l.s4 1983009808
    %v443 = vunpack.c.0.s8 %v442
    %v444 = vlaneseq
    %v445 = vshrl.u32 %v444, 7
    %v446 = vsub.s32 %v443, %v445
    %v447 = vrot.slane %v173, %v446
    %v448 = vcombine.high %v447, %v447
    %v450 = vunpack.c.l.s4 1983009808
    %v451 = vunpack.c.0.s8 %v450
    %v452 = vlaneseq
    %v453 = vshrl.u32 %v452, 7
    %v454 = vsub.s32 %v451, %v453
    %v455 = vrot.slane %v174, %v454
    %v456 = vcombine.high %v455, %v455
    %v458 = vunpack.c.l.s4 1983009808
    %v459 = vunpack.c.0.s8 %v458
    %v460 = vlaneseq
    %v461 = vshrl.u32 %v460, 7
    %v462 = vsub.s32 %v459, %v461
    %v463 = vrot.slane %v175, %v462
    %v464 = vcombine.high %v463, %v463
    %v466 = vunpack.c.l.s4 1983009808
    %v467 = vunpack.c.0.s8 %v466
    %v468 = vlaneseq
    %v469 = vshrl.u32 %v468, 7
    %v470 = vsub.s32 %v467, %v469
    %v471 = vrot.slane %v176, %v470
    %v472 = vcombine.high %v471, %v471
    %v474 = vunpack.c.l.s4 1983009808
    %v475 = vunpack.c.0.s8 %v474
    %v476 = vlaneseq
    %v477 = vshrl.u32 %v476, 7
    %v478 = vsub.s32 %v475, %v477
    %v479 = vrot.slane %v177, %v478
    %v480 = vcombine.high %v479, %v479
    %v482 = vunpack.c.l.s4 1983009808
    %v483 = vunpack.c.0.s8 %v482
    %v484 = vlaneseq
    %v485 = vshrl.u32 %v484, 7
    %v486 = vsub.s32 %v483, %v485
    %v487 = vrot.slane %v178, %v486
    %v488 = vcombine.high %v487, %v487
    %v490 = vunpack.c.l.s4 1983009808
    %v491 = vunpack.c.0.s8 %v490
    %v492 = vlaneseq
    %v493 = vshrl.u32 %v492, 7
    %v494 = vsub.s32 %v491, %v493
    %v495 = vrot.slane %v179, %v494
    %v496 = vcombine.high %v495, %v495
    %v498 = vunpack.c.l.s4 1983009808
    %v499 = vunpack.c.0.s8 %v498
    %v500 = vlaneseq
    %v501 = vshrl.u32 %v500, 7
    %v502 = vsub.s32 %v499, %v501
    %v503 = vrot.slane %v180, %v502
    %v504 = vcombine.high %v503, %v503
    %v506 = vunpack.c.l.s4 1983009808
    %v507 = vunpack.c.0.s8 %v506
    %v508 = vlaneseq
    %v509 = vshrl.u32 %v508, 7
    %v510 = vsub.s32 %v507, %v509
    %v511 = vrot.slane %v181, %v510
    %v512 = vcombine.high %v511, %v511
    %v514 = vunpack.c.l.s4 1983009808
    %v515 = vunpack.c.0.s8 %v514
    %v516 = vlaneseq
    %v517 = vshrl.u32 %v516, 7
    %v518 = vsub.s32 %v515, %v517
    %v519 = vrot.slane %v182, %v518
    %v520 = vcombine.high %v519, %v519
    %v522 = vunpack.c.l.s4 1983009808
    %v523 = vunpack.c.0.s8 %v522
    %v524 = vlaneseq
    %v525 = vshrl.u32 %v524, 7
    %v526 = vsub.s32 %v523, %v525
    %v527 = vrot.slane %v183, %v526
    %v528 = vcombine.high %v527, %v527
    %v530 = vunpack.c.l.s4 1983009808
    %v531 = vunpack.c.0.s8 %v530
    %v532 = vlaneseq
    %v533 = vshrl.u32 %v532, 7
    %v534 = vsub.s32 %v531, %v533
    %v535 = vrot.slane %v184, %v534
    %v536 = vcombine.high %v535, %v535
    %v538 = vunpack.c.l.s4 1983009808
    %v539 = vunpack.c.0.s8 %v538
    %v540 = vlaneseq
    %v541 = vshrl.u32 %v540, 7
    %v542 = vsub.s32 %v539, %v541
    %v543 = vrot.slane %v185, %v542
    %v544 = vcombine.high %v543, %v543
    %v546 = vunpack.c.l.s4 1983009808
    %v547 = vunpack.c.0.s8 %v546
    %v548 = vlaneseq
    %v549 = vshrl.u32 %v548, 7
    %v550 = vsub.s32 %v547, %v549
    %v551 = vrot.slane %v186, %v550
    %v552 = vcombine.high %v551, %v551
    %v554 = vunpack.c.l.s4 1983009808
    %v555 = vunpack.c.0.s8 %v554
    %v556 = vlaneseq
    %v557 = vshrl.u32 %v556, 7
    %v558 = vsub.s32 %v555, %v557
    %v559 = vrot.slane %v187, %v558
    %v560 = vcombine.high %v559, %v559
    %v562 = vunpack.c.l.s4 1983009808
    %v563 = vunpack.c.0.s8 %v562
    %v564 = vlaneseq
    %v565 = vshrl.u32 %v564, 7
    %v566 = vsub.s32 %v563, %v565
    %v567 = vrot.slane %v188, %v566
    %v568 = vcombine.high %v567, %v567
    %v570 = vunpack.c.l.s4 1983009808
    %v571 = vunpack.c.0.s8 %v570
    %v572 = vlaneseq
    %v573 = vshrl.u32 %v572, 7
    %v574 = vsub.s32 %v571, %v573
    %v575 = vrot.slane %v189, %v574
    %v576 = vcombine.high %v575, %v575
    %v578 = vunpack.c.l.s4 1983009808
    %v579 = vunpack.c.0.s8 %v578
    %v580 = vlaneseq
    %v581 = vshrl.u32 %v580, 7
    %v582 = vsub.s32 %v579, %v581
    %v583 = vrot.slane %v190, %v582
    %v584 = vcombine.high %v583, %v583
    %v586 = vunpack.c.l.s4 1983009808
    %v587 = vunpack.c.0.s8 %v586
    %v588 = vlaneseq
    %v589 = vshrl.u32 %v588, 7
    %v590 = vsub.s32 %v587, %v589
    %v591 = vrot.slane %v191, %v590
    %v592 = vcombine.high %v591, %v591
    %v594 = vunpack.c.l.s4 1983009808
    %v595 = vunpack.c.0.s8 %v594
    %v596 = vlaneseq
    %v597 = vshrl.u32 %v596, 7
    %v598 = vsub.s32 %v595, %v597
    %v599 = vrot.slane %v192, %v598
    %v600 = vcombine.high %v599, %v599
    %v602 = vunpack.c.l.s4 1983009808
    %v603 = vunpack.c.0.s8 %v602
    %v604 = vlaneseq
    %v605 = vshrl.u32 %v604, 7
    %v606 = vsub.s32 %v603, %v605
    %v607 = vrot.slane %v193, %v606
    %v608 = vcombine.high %v607, %v607
    %v610 = vunpack.c.l.s4 1983009808
    %v611 = vunpack.c.0.s8 %v610
    %v612 = vlaneseq
    %v613 = vshrl.u32 %v612, 7
    %v614 = vsub.s32 %v611, %v613
    %v615 = vrot.slane %v194, %v614
    %v616 = vcombine.high %v615, %v615
    %v618 = vunpack.c.l.s4 1983009808
    %v619 = vunpack.c.0.s8 %v618
    %v620 = vlaneseq
    %v621 = vshrl.u32 %v620, 7
    %v622 = vsub.s32 %v619, %v621
    %v623 = vrot.slane %v195, %v622
    %v624 = vcombine.high %v623, %v623
    %v626 = vunpack.c.l.s4 1983009808
    %v627 = vunpack.c.0.s8 %v626
    %v628 = vlaneseq
    %v629 = vshrl.u32 %v628, 7
    %v630 = vsub.s32 %v627, %v629
    %v631 = vrot.slane %v196, %v630
    %v632 = vcombine.high %v631, %v631
    %v634 = vunpack.c.l.s4 1983009808
    %v635 = vunpack.c.0.s8 %v634
    %v636 = vlaneseq
    %v637 = vshrl.u32 %v636, 7
    %v638 = vsub.s32 %v635, %v637
    %v639 = vrot.slane %v197, %v638
    %v640 = vcombine.high %v639, %v639
    %v642 = vunpack.c.l.s4 1983009808
    %v643 = vunpack.c.0.s8 %v642
    %v644 = vlaneseq
    %v645 = vshrl.u32 %v644, 7
    %v646 = vsub.s32 %v643, %v645
    %v647 = vrot.slane %v198, %v646
    %v648 = vcombine.high %v647, %v647
    %v650 = vunpack.c.l.s4 1983009808
    %v651 = vunpack.c.0.s8 %v650
    %v652 = vlaneseq
    %v653 = vshrl.u32 %v652, 7
    %v654 = vsub.s32 %v651, %v653
    %v655 = vrot.slane %v199, %v654
    %v656 = vcombine.high %v655, %v655
    %v658 = vunpack.c.l.s4 1983009808
    %v659 = vunpack.c.0.s8 %v658
    %v660 = vlaneseq
    %v661 = vshrl.u32 %v660, 7
    %v662 = vsub.s32 %v659, %v661
    %v663 = vrot.slane %v200, %v662
    %v664 = vcombine.high %v663, %v663
    %v666 = vunpack.c.l.s4 1983009808
    %v667 = vunpack.c.0.s8 %v666
    %v668 = vlaneseq
    %v669 = vshrl.u32 %v668, 7
    %v670 = vsub.s32 %v667, %v669
    %v671 = vrot.slane %v201, %v670
    %v672 = vcombine.high %v671, %v671
    %v674 = vunpack.c.l.s4 1983009808
    %v675 = vunpack.c.0.s8 %v674
    %v676 = vlaneseq
    %v677 = vshrl.u32 %v676, 7
    %v678 = vsub.s32 %v675, %v677
    %v679 = vrot.slane %v202, %v678
    %v680 = vcombine.high %v679, %v679
    %v682 = vunpack.c.l.s4 1983009808
    %v683 = vunpack.c.0.s8 %v682
    %v684 = vlaneseq
    %v685 = vshrl.u32 %v684, 7
    %v686 = vsub.s32 %v683, %v685
    %v687 = vrot.slane %v203, %v686
    %v688 = vcombine.high %v687, %v687
    %v690 = vunpack.c.l.s4 1983009808
    %v691 = vunpack.c.0.s8 %v690
    %v692 = vlaneseq
    %v693 = vshrl.u32 %v692, 7
    %v694 = vsub.s32 %v691, %v693
    %v695 = vrot.slane %v204, %v694
    %v696 = vcombine.high %v695, %v695
    %v698 = vunpack.c.l.s4 1983009808
    %v699 = vunpack.c.0.s8 %v698
    %v700 = vlaneseq
    %v701 = vshrl.u32 %v700, 7
    %v702 = vsub.s32 %v699, %v701
    %v703 = vrot.slane %v205, %v702
    %v704 = vcombine.high %v703, %v703
    %v706 = vunpack.c.l.s4 1983009808
    %v707 = vunpack.c.0.s8 %v706
    %v708 = vlaneseq
    %v709 = vshrl.u32 %v708, 7
    %v710 = vsub.s32 %v707, %v709
    %v711 = vrot.slane %v206, %v710
    %v712 = vcombine.high %v711, %v711
    %v714 = vunpack.c.l.s4 1983009808
    %v715 = vunpack.c.0.s8 %v714
    %v716 = vlaneseq
    %v717 = vshrl.u32 %v716, 7
    %v718 = vsub.s32 %v715, %v717
    %v719 = vrot.slane %v207, %v718
    %v720 = vcombine.high %v719, %v719
    %v722 = vunpack.c.l.s4 1983009808
    %v723 = vunpack.c.0.s8 %v722
    %v724 = vlaneseq
    %v725 = vshrl.u32 %v724, 7
    %v726 = vsub.s32 %v723, %v725
    %v727 = vrot.slane %v208, %v726
    %v728 = vcombine.high %v727, %v727
    %v730 = vunpack.c.l.s4 1983009808
    %v731 = vunpack.c.0.s8 %v730
    %v732 = vlaneseq
    %v733 = vshrl.u32 %v732, 7
    %v734 = vsub.s32 %v731, %v733
    %v735 = vrot.slane %v209, %v734
    %v736 = vcombine.high %v735, %v735
    %v738 = vunpack.c.l.s4 1983009808
    %v739 = vunpack.c.0.s8 %v738
    %v740 = vlaneseq
    %v741 = vshrl.u32 %v740, 7
    %v742 = vsub.s32 %v739, %v741
    %v743 = vrot.slane %v210, %v742
    %v744 = vcombine.high %v743, %v743
    %v746 = vunpack.c.l.s4 1983009808
    %v747 = vunpack.c.0.s8 %v746
    %v748 = vlaneseq
    %v749 = vshrl.u32 %v748, 7
    %v750 = vsub.s32 %v747, %v749
    %v751 = vrot.slane %v211, %v750
    %v752 = vcombine.high %v751, %v751
    %v754 = vunpack.c.l.s4 1983009808
    %v755 = vunpack.c.0.s8 %v754
    %v756 = vlaneseq
    %v757 = vshrl.u32 %v756, 7
    %v758 = vsub.s32 %v755, %v757
    %v759 = vrot.slane %v212, %v758
    %v760 = vcombine.high %v759, %v759
    %v762 = vunpack.c.l.s4 1983009808
    %v763 = vunpack.c.0.s8 %v762
    %v764 = vlaneseq
    %v765 = vshrl.u32 %v764, 7
    %v766 = vsub.s32 %v763, %v765
    %v767 = vrot.slane %v213, %v766
    %v768 = vcombine.high %v767, %v767
    %v770 = vunpack.c.l.s4 1983009808
    %v771 = vunpack.c.0.s8 %v770
    %v772 = vlaneseq
    %v773 = vshrl.u32 %v772, 7
    %v774 = vsub.s32 %v771, %v773
    %v775 = vrot.slane %v214, %v774
    %v776 = vcombine.high %v775, %v775
    %v778 = vunpack.c.l.s4 1983009808
    %v779 = vunpack.c.0.s8 %v778
    %v780 = vlaneseq
    %v781 = vshrl.u32 %v780, 7
    %v782 = vsub.s32 %v779, %v781
    %v783 = vrot.slane %v215, %v782
    %v784 = vcombine.high %v783, %v783
    %v786 = vunpack.c.l.s4 1983009808
    %v787 = vunpack.c.0.s8 %v786
    %v788 = vlaneseq
    %v789 = vshrl.u32 %v788, 7
    %v790 = vsub.s32 %v787, %v789
    %v791 = vrot.slane %v216, %v790
    %v792 = vcombine.high %v791, %v791
    %vm921 = vcmask 1041408
    %v922 = vsel %vm921, %v287, -inf
    %v923 = vrot.slane %v922, 4
    %v924 = vmax.f32 %v922, %v923
    %v925 = vrot.slane %v924, 2
    %v926 = vmax.f32 %v924, %v925
    %v927 = vrot.slane %v926, 1
    %v928 = vmax.f32 %v926, %v927
    %v929 = vsel %vm921, %v288, -inf
    %v930 = vrot.slane %v929, 4
    %v931 = vmax.f32 %v929, %v930
    %v932 = vrot.slane %v931, 2
    %v933 = vmax.f32 %v931, %v932
    %v934 = vrot.slane %v933, 1
    %v935 = vmax.f32 %v933, %v934
    %v936 = vsel %vm921, %v295, -inf
    %v937 = vrot.slane %v936, 4
    %v938 = vmax.f32 %v936, %v937
    %v939 = vrot.slane %v938, 2
    %v940 = vmax.f32 %v938, %v939
    %v941 = vrot.slane %v940, 1
    %v942 = vmax.f32 %v940, %v941
    %v943 = vsel %vm921, %v296, -inf
    %v944 = vrot.slane %v943, 4
    %v945 = vmax.f32 %v943, %v944
    %v946 = vrot.slane %v945, 2
    %v947 = vmax.f32 %v945, %v946
    %v948 = vrot.slane %v947, 1
    %v949 = vmax.f32 %v947, %v948
    %v950 = vsel %vm921, %v303, -inf
    %v951 = vrot.slane %v950, 4
    %v952 = vmax.f32 %v950, %v951
    %v953 = vrot.slane %v952, 2
    %v954 = vmax.f32 %v952, %v953
    %v955 = vrot.slane %v954, 1
    %v956 = vmax.f32 %v954, %v955
    %v957 = vsel %vm921, %v304, -inf
    %v958 = vrot.slane %v957, 4
    %v959 = vmax.f32 %v957, %v958
    %v960 = vrot.slane %v959, 2
    %v961 = vmax.f32 %v959, %v960
    %v962 = vrot.slane %v961, 1
    %v963 = vmax.f32 %v961, %v962
    %v964 = vsel %vm921, %v311, -inf
    %v965 = vrot.slane %v964, 4
    %v966 = vmax.f32 %v964, %v965
    %v967 = vrot.slane %v966, 2
    %v968 = vmax.f32 %v966, %v967
    %v969 = vrot.slane %v968, 1
    %v970 = vmax.f32 %v968, %v969
    %v971 = vsel %vm921, %v312, -inf
    %v972 = vrot.slane %v971, 4
    %v973 = vmax.f32 %v971, %v972
    %v974 = vrot.slane %v973, 2
    %v975 = vmax.f32 %v973, %v974
    %v976 = vrot.slane %v975, 1
    %v977 = vmax.f32 %v975, %v976
    %v978 = vsel %vm921, %v319, -inf
    %v979 = vrot.slane %v978, 4
    %v980 = vmax.f32 %v978, %v979
    %v981 = vrot.slane %v980, 2
    %v982 = vmax.f32 %v980, %v981
    %v983 = vrot.slane %v982, 1
    %v984 = vmax.f32 %v982, %v983
    %v985 = vsel %vm921, %v320, -inf
    %v986 = vrot.slane %v985, 4
    %v987 = vmax.f32 %v985, %v986
    %v988 = vrot.slane %v987, 2
    %v989 = vmax.f32 %v987, %v988
    %v990 = vrot.slane %v989, 1
    %v991 = vmax.f32 %v989, %v990
    %v992 = vsel %vm921, %v327, -inf
    %v993 = vrot.slane %v992, 4
    %v994 = vmax.f32 %v992, %v993
    %v995 = vrot.slane %v994, 2
    %v996 = vmax.f32 %v994, %v995
    %v997 = vrot.slane %v996, 1
    %v998 = vmax.f32 %v996, %v997
    %v999 = vsel %vm921, %v328, -inf
    %v1000 = vrot.slane %v999, 4
    %v1001 = vmax.f32 %v999, %v1000
    %v1002 = vrot.slane %v1001, 2
    %v1003 = vmax.f32 %v1001, %v1002
    %v1004 = vrot.slane %v1003, 1
    %v1005 = vmax.f32 %v1003, %v1004
    %v1006 = vsel %vm921, %v335, -inf
    %v1007 = vrot.slane %v1006, 4
    %v1008 = vmax.f32 %v1006, %v1007
    %v1009 = vrot.slane %v1008, 2
    %v1010 = vmax.f32 %v1008, %v1009
    %v1011 = vrot.slane %v1010, 1
    %v1012 = vmax.f32 %v1010, %v1011
    %v1013 = vsel %vm921, %v336, -inf
    %v1014 = vrot.slane %v1013, 4
    %v1015 = vmax.f32 %v1013, %v1014
    %v1016 = vrot.slane %v1015, 2
    %v1017 = vmax.f32 %v1015, %v1016
    %v1018 = vrot.slane %v1017, 1
    %v1019 = vmax.f32 %v1017, %v1018
    %v1020 = vsel %vm921, %v343, -inf
    %v1021 = vrot.slane %v1020, 4
    %v1022 = vmax.f32 %v1020, %v1021
    %v1023 = vrot.slane %v1022, 2
    %v1024 = vmax.f32 %v1022, %v1023
    %v1025 = vrot.slane %v1024, 1
    %v1026 = vmax.f32 %v1024, %v1025
    %v1027 = vsel %vm921, %v344, -inf
    %v1028 = vrot.slane %v1027, 4
    %v1029 = vmax.f32 %v1027, %v1028
    %v1030 = vrot.slane %v1029, 2
    %v1031 = vmax.f32 %v1029, %v1030
    %v1032 = vrot.slane %v1031, 1
    %v1033 = vmax.f32 %v1031, %v1032
    %v1034 = vsel %vm921, %v351, -inf
    %v1035 = vrot.slane %v1034, 4
    %v1036 = vmax.f32 %v1034, %v1035
    %v1037 = vrot.slane %v1036, 2
    %v1038 = vmax.f32 %v1036, %v1037
    %v1039 = vrot.slane %v1038, 1
    %v1040 = vmax.f32 %v1038, %v1039
    %v1041 = vsel %vm921, %v352, -inf
    %v1042 = vrot.slane %v1041, 4
    %v1043 = vmax.f32 %v1041, %v1042
    %v1044 = vrot.slane %v1043, 2
    %v1045 = vmax.f32 %v1043, %v1044
    %v1046 = vrot.slane %v1045, 1
    %v1047 = vmax.f32 %v1045, %v1046
    %v1048 = vsel %vm921, %v359, -inf
    %v1049 = vrot.slane %v1048, 4
    %v1050 = vmax.f32 %v1048, %v1049
    %v1051 = vrot.slane %v1050, 2
    %v1052 = vmax.f32 %v1050, %v1051
    %v1053 = vrot.slane %v1052, 1
    %v1054 = vmax.f32 %v1052, %v1053
    %v1055 = vsel %vm921, %v360, -inf
    %v1056 = vrot.slane %v1055, 4
    %v1057 = vmax.f32 %v1055, %v1056
    %v1058 = vrot.slane %v1057, 2
    %v1059 = vmax.f32 %v1057, %v1058
    %v1060 = vrot.slane %v1059, 1
    %v1061 = vmax.f32 %v1059, %v1060
    %v1062 = vsel %vm921, %v367, -inf
    %v1063 = vrot.slane %v1062, 4
    %v1064 = vmax.f32 %v1062, %v1063
    %v1065 = vrot.slane %v1064, 2
    %v1066 = vmax.f32 %v1064, %v1065
    %v1067 = vrot.slane %v1066, 1
    %v1068 = vmax.f32 %v1066, %v1067
    %v1069 = vsel %vm921, %v368, -inf
    %v1070 = vrot.slane %v1069, 4
    %v1071 = vmax.f32 %v1069, %v1070
    %v1072 = vrot.slane %v1071, 2
    %v1073 = vmax.f32 %v1071, %v1072
    %v1074 = vrot.slane %v1073, 1
    %v1075 = vmax.f32 %v1073, %v1074
    %v1076 = vsel %vm921, %v375, -inf
    %v1077 = vrot.slane %v1076, 4
    %v1078 = vmax.f32 %v1076, %v1077
    %v1079 = vrot.slane %v1078, 2
    %v1080 = vmax.f32 %v1078, %v1079
    %v1081 = vrot.slane %v1080, 1
    %v1082 = vmax.f32 %v1080, %v1081
    %v1083 = vsel %vm921, %v376, -inf
    %v1084 = vrot.slane %v1083, 4
    %v1085 = vmax.f32 %v1083, %v1084
    %v1086 = vrot.slane %v1085, 2
    %v1087 = vmax.f32 %v1085, %v1086
    %v1088 = vrot.slane %v1087, 1
    %v1089 = vmax.f32 %v1087, %v1088
    %v1090 = vsel %vm921, %v383, -inf
    %v1091 = vrot.slane %v1090, 4
    %v1092 = vmax.f32 %v1090, %v1091
    %v1093 = vrot.slane %v1092, 2
    %v1094 = vmax.f32 %v1092, %v1093
    %v1095 = vrot.slane %v1094, 1
    %v1096 = vmax.f32 %v1094, %v1095
    %v1097 = vsel %vm921, %v384, -inf
    %v1098 = vrot.slane %v1097, 4
    %v1099 = vmax.f32 %v1097, %v1098
    %v1100 = vrot.slane %v1099, 2
    %v1101 = vmax.f32 %v1099, %v1100
    %v1102 = vrot.slane %v1101, 1
    %v1103 = vmax.f32 %v1101, %v1102
    %v1104 = vsel %vm921, %v391, -inf
    %v1105 = vrot.slane %v1104, 4
    %v1106 = vmax.f32 %v1104, %v1105
    %v1107 = vrot.slane %v1106, 2
    %v1108 = vmax.f32 %v1106, %v1107
    %v1109 = vrot.slane %v1108, 1
    %v1110 = vmax.f32 %v1108, %v1109
    %v1111 = vsel %vm921, %v392, -inf
    %v1112 = vrot.slane %v1111, 4
    %v1113 = vmax.f32 %v1111, %v1112
    %v1114 = vrot.slane %v1113, 2
    %v1115 = vmax.f32 %v1113, %v1114
    %v1116 = vrot.slane %v1115, 1
    %v1117 = vmax.f32 %v1115, %v1116
    %v1118 = vsel %vm921, %v399, -inf
    %v1119 = vrot.slane %v1118, 4
    %v1120 = vmax.f32 %v1118, %v1119
    %v1121 = vrot.slane %v1120, 2
    %v1122 = vmax.f32 %v1120, %v1121
    %v1123 = vrot.slane %v1122, 1
    %v1124 = vmax.f32 %v1122, %v1123
    %v1125 = vsel %vm921, %v400, -inf
    %v1126 = vrot.slane %v1125, 4
    %v1127 = vmax.f32 %v1125, %v1126
    %v1128 = vrot.slane %v1127, 2
    %v1129 = vmax.f32 %v1127, %v1128
    %v1130 = vrot.slane %v1129, 1
    %v1131 = vmax.f32 %v1129, %v1130
    %v1132 = vsel %vm921, %v407, -inf
    %v1133 = vrot.slane %v1132, 4
    %v1134 = vmax.f32 %v1132, %v1133
    %v1135 = vrot.slane %v1134, 2
    %v1136 = vmax.f32 %v1134, %v1135
    %v1137 = vrot.slane %v1136, 1
    %v1138 = vmax.f32 %v1136, %v1137
    %v1139 = vsel %vm921, %v408, -inf
    %v1140 = vrot.slane %v1139, 4
    %v1141 = vmax.f32 %v1139, %v1140
    %v1142 = vrot.slane %v1141, 2
    %v1143 = vmax.f32 %v1141, %v1142
    %v1144 = vrot.slane %v1143, 1
    %v1145 = vmax.f32 %v1143, %v1144
    %v1146 = vsel %vm921, %v415, -inf
    %v1147 = vrot.slane %v1146, 4
    %v1148 = vmax.f32 %v1146, %v1147
    %v1149 = vrot.slane %v1148, 2
    %v1150 = vmax.f32 %v1148, %v1149
    %v1151 = vrot.slane %v1150, 1
    %v1152 = vmax.f32 %v1150, %v1151
    %v1153 = vsel %vm921, %v416, -inf
    %v1154 = vrot.slane %v1153, 4
    %v1155 = vmax.f32 %v1153, %v1154
    %v1156 = vrot.slane %v1155, 2
    %v1157 = vmax.f32 %v1155, %v1156
    %v1158 = vrot.slane %v1157, 1
    %v1159 = vmax.f32 %v1157, %v1158
    %v1160 = vsel %vm921, %v423, -inf
    %v1161 = vrot.slane %v1160, 4
    %v1162 = vmax.f32 %v1160, %v1161
    %v1163 = vrot.slane %v1162, 2
    %v1164 = vmax.f32 %v1162, %v1163
    %v1165 = vrot.slane %v1164, 1
    %v1166 = vmax.f32 %v1164, %v1165
    %v1167 = vsel %vm921, %v424, -inf
    %v1168 = vrot.slane %v1167, 4
    %v1169 = vmax.f32 %v1167, %v1168
    %v1170 = vrot.slane %v1169, 2
    %v1171 = vmax.f32 %v1169, %v1170
    %v1172 = vrot.slane %v1171, 1
    %v1173 = vmax.f32 %v1171, %v1172
    %v1174 = vsel %vm921, %v431, -inf
    %v1175 = vrot.slane %v1174, 4
    %v1176 = vmax.f32 %v1174, %v1175
    %v1177 = vrot.slane %v1176, 2
    %v1178 = vmax.f32 %v1176, %v1177
    %v1179 = vrot.slane %v1178, 1
    %v1180 = vmax.f32 %v1178, %v1179
    %v1181 = vsel %vm921, %v432, -inf
    %v1182 = vrot.slane %v1181, 4
    %v1183 = vmax.f32 %v1181, %v1182
    %v1184 = vrot.slane %v1183, 2
    %v1185 = vmax.f32 %v1183, %v1184
    %v1186 = vrot.slane %v1185, 1
    %v1187 = vmax.f32 %v1185, %v1186
    %v1188 = vsel %vm921, %v439, -inf
    %v1189 = vrot.slane %v1188, 4
    %v1190 = vmax.f32 %v1188, %v1189
    %v1191 = vrot.slane %v1190, 2
    %v1192 = vmax.f32 %v1190, %v1191
    %v1193 = vrot.slane %v1192, 1
    %v1194 = vmax.f32 %v1192, %v1193
    %v1195 = vsel %vm921, %v440, -inf
    %v1196 = vrot.slane %v1195, 4
    %v1197 = vmax.f32 %v1195, %v1196
    %v1198 = vrot.slane %v1197, 2
    %v1199 = vmax.f32 %v1197, %v1198
    %v1200 = vrot.slane %v1199, 1
    %v1201 = vmax.f32 %v1199, %v1200
    %v1202 = vsel %vm921, %v447, -inf
    %v1203 = vrot.slane %v1202, 4
    %v1204 = vmax.f32 %v1202, %v1203
    %v1205 = vrot.slane %v1204, 2
    %v1206 = vmax.f32 %v1204, %v1205
    %v1207 = vrot.slane %v1206, 1
    %v1208 = vmax.f32 %v1206, %v1207
    %v1209 = vsel %vm921, %v448, -inf
    %v1210 = vrot.slane %v1209, 4
    %v1211 = vmax.f32 %v1209, %v1210
    %v1212 = vrot.slane %v1211, 2
    %v1213 = vmax.f32 %v1211, %v1212
    %v1214 = vrot.slane %v1213, 1
    %v1215 = vmax.f32 %v1213, %v1214
    %v1216 = vsel %vm921, %v455, -inf
    %v1217 = vrot.slane %v1216, 4
    %v1218 = vmax.f32 %v1216, %v1217
    %v1219 = vrot.slane %v1218, 2
    %v1220 = vmax.f32 %v1218, %v1219
    %v1221 = vrot.slane %v1220, 1
    %v1222 = vmax.f32 %v1220, %v1221
    %v1223 = vsel %vm921, %v456, -inf
    %v1224 = vrot.slane %v1223, 4
    %v1225 = vmax.f32 %v1223, %v1224
    %v1226 = vrot.slane %v1225, 2
    %v1227 = vmax.f32 %v1225, %v1226
    %v1228 = vrot.slane %v1227, 1
    %v1229 = vmax.f32 %v1227, %v1228
    %v1230 = vsel %vm921, %v463, -inf
    %v1231 = vrot.slane %v1230, 4
    %v1232 = vmax.f32 %v1230, %v1231
    %v1233 = vrot.slane %v1232, 2
    %v1234 = vmax.f32 %v1232, %v1233
    %v1235 = vrot.slane %v1234, 1
    %v1236 = vmax.f32 %v1234, %v1235
    %v1237 = vsel %vm921, %v464, -inf
    %v1238 = vrot.slane %v1237, 4
    %v1239 = vmax.f32 %v1237, %v1238
    %v1240 = vrot.slane %v1239, 2
    %v1241 = vmax.f32 %v1239, %v1240
    %v1242 = vrot.slane %v1241, 1
    %v1243 = vmax.f32 %v1241, %v1242
    %v1244 = vsel %vm921, %v471, -inf
    %v1245 = vrot.slane %v1244, 4
    %v1246 = vmax.f32 %v1244, %v1245
    %v1247 = vrot.slane %v1246, 2
    %v1248 = vmax.f32 %v1246, %v1247
    %v1249 = vrot.slane %v1248, 1
    %v1250 = vmax.f32 %v1248, %v1249
    %v1251 = vsel %vm921, %v472, -inf
    %v1252 = vrot.slane %v1251, 4
    %v1253 = vmax.f32 %v1251, %v1252
    %v1254 = vrot.slane %v1253, 2
    %v1255 = vmax.f32 %v1253, %v1254
    %v1256 = vrot.slane %v1255, 1
    %v1257 = vmax.f32 %v1255, %v1256
    %v1258 = vsel %vm921, %v479, -inf
    %v1259 = vrot.slane %v1258, 4
    %v1260 = vmax.f32 %v1258, %v1259
    %v1261 = vrot.slane %v1260, 2
    %v1262 = vmax.f32 %v1260, %v1261
    %v1263 = vrot.slane %v1262, 1
    %v1264 = vmax.f32 %v1262, %v1263
    %v1265 = vsel %vm921, %v480, -inf
    %v1266 = vrot.slane %v1265, 4
    %v1267 = vmax.f32 %v1265, %v1266
    %v1268 = vrot.slane %v1267, 2
    %v1269 = vmax.f32 %v1267, %v1268
    %v1270 = vrot.slane %v1269, 1
    %v1271 = vmax.f32 %v1269, %v1270
    %v1272 = vsel %vm921, %v487, -inf
    %v1273 = vrot.slane %v1272, 4
    %v1274 = vmax.f32 %v1272, %v1273
    %v1275 = vrot.slane %v1274, 2
    %v1276 = vmax.f32 %v1274, %v1275
    %v1277 = vrot.slane %v1276, 1
    %v1278 = vmax.f32 %v1276, %v1277
    %v1279 = vsel %vm921, %v488, -inf
    %v1280 = vrot.slane %v1279, 4
    %v1281 = vmax.f32 %v1279, %v1280
    %v1282 = vrot.slane %v1281, 2
    %v1283 = vmax.f32 %v1281, %v1282
    %v1284 = vrot.slane %v1283, 1
    %v1285 = vmax.f32 %v1283, %v1284
    %v1286 = vsel %vm921, %v495, -inf
    %v1287 = vrot.slane %v1286, 4
    %v1288 = vmax.f32 %v1286, %v1287
    %v1289 = vrot.slane %v1288, 2
    %v1290 = vmax.f32 %v1288, %v1289
    %v1291 = vrot.slane %v1290, 1
    %v1292 = vmax.f32 %v1290, %v1291
    %v1293 = vsel %vm921, %v496, -inf
    %v1294 = vrot.slane %v1293, 4
    %v1295 = vmax.f32 %v1293, %v1294
    %v1296 = vrot.slane %v1295, 2
    %v1297 = vmax.f32 %v1295, %v1296
    %v1298 = vrot.slane %v1297, 1
    %v1299 = vmax.f32 %v1297, %v1298
    %v1300 = vsel %vm921, %v503, -inf
    %v1301 = vrot.slane %v1300, 4
    %v1302 = vmax.f32 %v1300, %v1301
    %v1303 = vrot.slane %v1302, 2
    %v1304 = vmax.f32 %v1302, %v1303
    %v1305 = vrot.slane %v1304, 1
    %v1306 = vmax.f32 %v1304, %v1305
    %v1307 = vsel %vm921, %v504, -inf
    %v1308 = vrot.slane %v1307, 4
    %v1309 = vmax.f32 %v1307, %v1308
    %v1310 = vrot.slane %v1309, 2
    %v1311 = vmax.f32 %v1309, %v1310
    %v1312 = vrot.slane %v1311, 1
    %v1313 = vmax.f32 %v1311, %v1312
    %v1314 = vsel %vm921, %v511, -inf
    %v1315 = vrot.slane %v1314, 4
    %v1316 = vmax.f32 %v1314, %v1315
    %v1317 = vrot.slane %v1316, 2
    %v1318 = vmax.f32 %v1316, %v1317
    %v1319 = vrot.slane %v1318, 1
    %v1320 = vmax.f32 %v1318, %v1319
    %v1321 = vsel %vm921, %v512, -inf
    %v1322 = vrot.slane %v1321, 4
    %v1323 = vmax.f32 %v1321, %v1322
    %v1324 = vrot.slane %v1323, 2
    %v1325 = vmax.f32 %v1323, %v1324
    %v1326 = vrot.slane %v1325, 1
    %v1327 = vmax.f32 %v1325, %v1326
    %v1328 = vsel %vm921, %v519, -inf
    %v1329 = vrot.slane %v1328, 4
    %v1330 = vmax.f32 %v1328, %v1329
    %v1331 = vrot.slane %v1330, 2
    %v1332 = vmax.f32 %v1330, %v1331
    %v1333 = vrot.slane %v1332, 1
    %v1334 = vmax.f32 %v1332, %v1333
    %v1335 = vsel %vm921, %v520, -inf
    %v1336 = vrot.slane %v1335, 4
    %v1337 = vmax.f32 %v1335, %v1336
    %v1338 = vrot.slane %v1337, 2
    %v1339 = vmax.f32 %v1337, %v1338
    %v1340 = vrot.slane %v1339, 1
    %v1341 = vmax.f32 %v1339, %v1340
    %v1342 = vsel %vm921, %v527, -inf
    %v1343 = vrot.slane %v1342, 4
    %v1344 = vmax.f32 %v1342, %v1343
    %v1345 = vrot.slane %v1344, 2
    %v1346 = vmax.f32 %v1344, %v1345
    %v1347 = vrot.slane %v1346, 1
    %v1348 = vmax.f32 %v1346, %v1347
    %v1349 = vsel %vm921, %v528, -inf
    %v1350 = vrot.slane %v1349, 4
    %v1351 = vmax.f32 %v1349, %v1350
    %v1352 = vrot.slane %v1351, 2
    %v1353 = vmax.f32 %v1351, %v1352
    %v1354 = vrot.slane %v1353, 1
    %v1355 = vmax.f32 %v1353, %v1354
    %v1356 = vsel %vm921, %v535, -inf
    %v1357 = vrot.slane %v1356, 4
    %v1358 = vmax.f32 %v1356, %v1357
    %v1359 = vrot.slane %v1358, 2
    %v1360 = vmax.f32 %v1358, %v1359
    %v1361 = vrot.slane %v1360, 1
    %v1362 = vmax.f32 %v1360, %v1361
    %v1363 = vsel %vm921, %v536, -inf
    %v1364 = vrot.slane %v1363, 4
    %v1365 = vmax.f32 %v1363, %v1364
    %v1366 = vrot.slane %v1365, 2
    %v1367 = vmax.f32 %v1365, %v1366
    %v1368 = vrot.slane %v1367, 1
    %v1369 = vmax.f32 %v1367, %v1368
    %v1370 = vsel %vm921, %v543, -inf
    %v1371 = vrot.slane %v1370, 4
    %v1372 = vmax.f32 %v1370, %v1371
    %v1373 = vrot.slane %v1372, 2
    %v1374 = vmax.f32 %v1372, %v1373
    %v1375 = vrot.slane %v1374, 1
    %v1376 = vmax.f32 %v1374, %v1375
    %v1377 = vsel %vm921, %v544, -inf
    %v1378 = vrot.slane %v1377, 4
    %v1379 = vmax.f32 %v1377, %v1378
    %v1380 = vrot.slane %v1379, 2
    %v1381 = vmax.f32 %v1379, %v1380
    %v1382 = vrot.slane %v1381, 1
    %v1383 = vmax.f32 %v1381, %v1382
    %v1384 = vsel %vm921, %v551, -inf
    %v1385 = vrot.slane %v1384, 4
    %v1386 = vmax.f32 %v1384, %v1385
    %v1387 = vrot.slane %v1386, 2
    %v1388 = vmax.f32 %v1386, %v1387
    %v1389 = vrot.slane %v1388, 1
    %v1390 = vmax.f32 %v1388, %v1389
    %v1391 = vsel %vm921, %v552, -inf
    %v1392 = vrot.slane %v1391, 4
    %v1393 = vmax.f32 %v1391, %v1392
    %v1394 = vrot.slane %v1393, 2
    %v1395 = vmax.f32 %v1393, %v1394
    %v1396 = vrot.slane %v1395, 1
    %v1397 = vmax.f32 %v1395, %v1396
    %v1398 = vsel %vm921, %v559, -inf
    %v1399 = vrot.slane %v1398, 4
    %v1400 = vmax.f32 %v1398, %v1399
    %v1401 = vrot.slane %v1400, 2
    %v1402 = vmax.f32 %v1400, %v1401
    %v1403 = vrot.slane %v1402, 1
    %v1404 = vmax.f32 %v1402, %v1403
    %v1405 = vsel %vm921, %v560, -inf
    %v1406 = vrot.slane %v1405, 4
    %v1407 = vmax.f32 %v1405, %v1406
    %v1408 = vrot.slane %v1407, 2
    %v1409 = vmax.f32 %v1407, %v1408
    %v1410 = vrot.slane %v1409, 1
    %v1411 = vmax.f32 %v1409, %v1410
    %v1412 = vsel %vm921, %v567, -inf
    %v1413 = vrot.slane %v1412, 4
    %v1414 = vmax.f32 %v1412, %v1413
    %v1415 = vrot.slane %v1414, 2
    %v1416 = vmax.f32 %v1414, %v1415
    %v1417 = vrot.slane %v1416, 1
    %v1418 = vmax.f32 %v1416, %v1417
    %v1419 = vsel %vm921, %v568, -inf
    %v1420 = vrot.slane %v1419, 4
    %v1421 = vmax.f32 %v1419, %v1420
    %v1422 = vrot.slane %v1421, 2
    %v1423 = vmax.f32 %v1421, %v1422
    %v1424 = vrot.slane %v1423, 1
    %v1425 = vmax.f32 %v1423, %v1424
    %v1426 = vsel %vm921, %v575, -inf
    %v1427 = vrot.slane %v1426, 4
    %v1428 = vmax.f32 %v1426, %v1427
    %v1429 = vrot.slane %v1428, 2
    %v1430 = vmax.f32 %v1428, %v1429
    %v1431 = vrot.slane %v1430, 1
    %v1432 = vmax.f32 %v1430, %v1431
    %v1433 = vsel %vm921, %v576, -inf
    %v1434 = vrot.slane %v1433, 4
    %v1435 = vmax.f32 %v1433, %v1434
    %v1436 = vrot.slane %v1435, 2
    %v1437 = vmax.f32 %v1435, %v1436
    %v1438 = vrot.slane %v1437, 1
    %v1439 = vmax.f32 %v1437, %v1438
    %v1440 = vsel %vm921, %v583, -inf
    %v1441 = vrot.slane %v1440, 4
    %v1442 = vmax.f32 %v1440, %v1441
    %v1443 = vrot.slane %v1442, 2
    %v1444 = vmax.f32 %v1442, %v1443
    %v1445 = vrot.slane %v1444, 1
    %v1446 = vmax.f32 %v1444, %v1445
    %v1447 = vsel %vm921, %v584, -inf
    %v1448 = vrot.slane %v1447, 4
    %v1449 = vmax.f32 %v1447, %v1448
    %v1450 = vrot.slane %v1449, 2
    %v1451 = vmax.f32 %v1449, %v1450
    %v1452 = vrot.slane %v1451, 1
    %v1453 = vmax.f32 %v1451, %v1452
    %v1454 = vsel %vm921, %v591, -inf
    %v1455 = vrot.slane %v1454, 4
    %v1456 = vmax.f32 %v1454, %v1455
    %v1457 = vrot.slane %v1456, 2
    %v1458 = vmax.f32 %v1456, %v1457
    %v1459 = vrot.slane %v1458, 1
    %v1460 = vmax.f32 %v1458, %v1459
    %v1461 = vsel %vm921, %v592, -inf
    %v1462 = vrot.slane %v1461, 4
    %v1463 = vmax.f32 %v1461, %v1462
    %v1464 = vrot.slane %v1463, 2
    %v1465 = vmax.f32 %v1463, %v1464
    %v1466 = vrot.slane %v1465, 1
    %v1467 = vmax.f32 %v1465, %v1466
    %v1468 = vsel %vm921, %v599, -inf
    %v1469 = vrot.slane %v1468, 4
    %v1470 = vmax.f32 %v1468, %v1469
    %v1471 = vrot.slane %v1470, 2
    %v1472 = vmax.f32 %v1470, %v1471
    %v1473 = vrot.slane %v1472, 1
    %v1474 = vmax.f32 %v1472, %v1473
    %v1475 = vsel %vm921, %v600, -inf
    %v1476 = vrot.slane %v1475, 4
    %v1477 = vmax.f32 %v1475, %v1476
    %v1478 = vrot.slane %v1477, 2
    %v1479 = vmax.f32 %v1477, %v1478
    %v1480 = vrot.slane %v1479, 1
    %v1481 = vmax.f32 %v1479, %v1480
    %v1482 = vsel %vm921, %v607, -inf
    %v1483 = vrot.slane %v1482, 4
    %v1484 = vmax.f32 %v1482, %v1483
    %v1485 = vrot.slane %v1484, 2
    %v1486 = vmax.f32 %v1484, %v1485
    %v1487 = vrot.slane %v1486, 1
    %v1488 = vmax.f32 %v1486, %v1487
    %v1489 = vsel %vm921, %v608, -inf
    %v1490 = vrot.slane %v1489, 4
    %v1491 = vmax.f32 %v1489, %v1490
    %v1492 = vrot.slane %v1491, 2
    %v1493 = vmax.f32 %v1491, %v1492
    %v1494 = vrot.slane %v1493, 1
    %v1495 = vmax.f32 %v1493, %v1494
    %v1496 = vsel %vm921, %v615, -inf
    %v1497 = vrot.slane %v1496, 4
    %v1498 = vmax.f32 %v1496, %v1497
    %v1499 = vrot.slane %v1498, 2
    %v1500 = vmax.f32 %v1498, %v1499
    %v1501 = vrot.slane %v1500, 1
    %v1502 = vmax.f32 %v1500, %v1501
    %v1503 = vsel %vm921, %v616, -inf
    %v1504 = vrot.slane %v1503, 4
    %v1505 = vmax.f32 %v1503, %v1504
    %v1506 = vrot.slane %v1505, 2
    %v1507 = vmax.f32 %v1505, %v1506
    %v1508 = vrot.slane %v1507, 1
    %v1509 = vmax.f32 %v1507, %v1508
    %v1510 = vsel %vm921, %v623, -inf
    %v1511 = vrot.slane %v1510, 4
    %v1512 = vmax.f32 %v1510, %v1511
    %v1513 = vrot.slane %v1512, 2
    %v1514 = vmax.f32 %v1512, %v1513
    %v1515 = vrot.slane %v1514, 1
    %v1516 = vmax.f32 %v1514, %v1515
    %v1517 = vsel %vm921, %v624, -inf
    %v1518 = vrot.slane %v1517, 4
    %v1519 = vmax.f32 %v1517, %v1518
    %v1520 = vrot.slane %v1519, 2
    %v1521 = vmax.f32 %v1519, %v1520
    %v1522 = vrot.slane %v1521, 1
    %v1523 = vmax.f32 %v1521, %v1522
    %v1524 = vsel %vm921, %v631, -inf
    %v1525 = vrot.slane %v1524, 4
    %v1526 = vmax.f32 %v1524, %v1525
    %v1527 = vrot.slane %v1526, 2
    %v1528 = vmax.f32 %v1526, %v1527
    %v1529 = vrot.slane %v1528, 1
    %v1530 = vmax.f32 %v1528, %v1529
    %v1531 = vsel %vm921, %v632, -inf
    %v1532 = vrot.slane %v1531, 4
    %v1533 = vmax.f32 %v1531, %v1532
    %v1534 = vrot.slane %v1533, 2
    %v1535 = vmax.f32 %v1533, %v1534
    %v1536 = vrot.slane %v1535, 1
    %v1537 = vmax.f32 %v1535, %v1536
    %v1538 = vsel %vm921, %v639, -inf
    %v1539 = vrot.slane %v1538, 4
    %v1540 = vmax.f32 %v1538, %v1539
    %v1541 = vrot.slane %v1540, 2
    %v1542 = vmax.f32 %v1540, %v1541
    %v1543 = vrot.slane %v1542, 1
    %v1544 = vmax.f32 %v1542, %v1543
    %v1545 = vsel %vm921, %v640, -inf
    %v1546 = vrot.slane %v1545, 4
    %v1547 = vmax.f32 %v1545, %v1546
    %v1548 = vrot.slane %v1547, 2
    %v1549 = vmax.f32 %v1547, %v1548
    %v1550 = vrot.slane %v1549, 1
    %v1551 = vmax.f32 %v1549, %v1550
    %v1552 = vsel %vm921, %v647, -inf
    %v1553 = vrot.slane %v1552, 4
    %v1554 = vmax.f32 %v1552, %v1553
    %v1555 = vrot.slane %v1554, 2
    %v1556 = vmax.f32 %v1554, %v1555
    %v1557 = vrot.slane %v1556, 1
    %v1558 = vmax.f32 %v1556, %v1557
    %v1559 = vsel %vm921, %v648, -inf
    %v1560 = vrot.slane %v1559, 4
    %v1561 = vmax.f32 %v1559, %v1560
    %v1562 = vrot.slane %v1561, 2
    %v1563 = vmax.f32 %v1561, %v1562
    %v1564 = vrot.slane %v1563, 1
    %v1565 = vmax.f32 %v1563, %v1564
    %v1566 = vsel %vm921, %v655, -inf
    %v1567 = vrot.slane %v1566, 4
    %v1568 = vmax.f32 %v1566, %v1567
    %v1569 = vrot.slane %v1568, 2
    %v1570 = vmax.f32 %v1568, %v1569
    %v1571 = vrot.slane %v1570, 1
    %v1572 = vmax.f32 %v1570, %v1571
    %v1573 = vsel %vm921, %v656, -inf
    %v1574 = vrot.slane %v1573, 4
    %v1575 = vmax.f32 %v1573, %v1574
    %v1576 = vrot.slane %v1575, 2
    %v1577 = vmax.f32 %v1575, %v1576
    %v1578 = vrot.slane %v1577, 1
    %v1579 = vmax.f32 %v1577, %v1578
    %v1580 = vsel %vm921, %v663, -inf
    %v1581 = vrot.slane %v1580, 4
    %v1582 = vmax.f32 %v1580, %v1581
    %v1583 = vrot.slane %v1582, 2
    %v1584 = vmax.f32 %v1582, %v1583
    %v1585 = vrot.slane %v1584, 1
    %v1586 = vmax.f32 %v1584, %v1585
    %v1587 = vsel %vm921, %v664, -inf
    %v1588 = vrot.slane %v1587, 4
    %v1589 = vmax.f32 %v1587, %v1588
    %v1590 = vrot.slane %v1589, 2
    %v1591 = vmax.f32 %v1589, %v1590
    %v1592 = vrot.slane %v1591, 1
    %v1593 = vmax.f32 %v1591, %v1592
    %v1594 = vsel %vm921, %v671, -inf
    %v1595 = vrot.slane %v1594, 4
    %v1596 = vmax.f32 %v1594, %v1595
    %v1597 = vrot.slane %v1596, 2
    %v1598 = vmax.f32 %v1596, %v1597
    %v1599 = vrot.slane %v1598, 1
    %v1600 = vmax.f32 %v1598, %v1599
    %v1601 = vsel %vm921, %v672, -inf
    %v1602 = vrot.slane %v1601, 4
    %v1603 = vmax.f32 %v1601, %v1602
    %v1604 = vrot.slane %v1603, 2
    %v1605 = vmax.f32 %v1603, %v1604
    %v1606 = vrot.slane %v1605, 1
    %v1607 = vmax.f32 %v1605, %v1606
    %v1608 = vsel %vm921, %v679, -inf
    %v1609 = vrot.slane %v1608, 4
    %v1610 = vmax.f32 %v1608, %v1609
    %v1611 = vrot.slane %v1610, 2
    %v1612 = vmax.f32 %v1610, %v1611
    %v1613 = vrot.slane %v1612, 1
    %v1614 = vmax.f32 %v1612, %v1613
    %v1615 = vsel %vm921, %v680, -inf
    %v1616 = vrot.slane %v1615, 4
    %v1617 = vmax.f32 %v1615, %v1616
    %v1618 = vrot.slane %v1617, 2
    %v1619 = vmax.f32 %v1617, %v1618
    %v1620 = vrot.slane %v1619, 1
    %v1621 = vmax.f32 %v1619, %v1620
    %v1622 = vsel %vm921, %v687, -inf
    %v1623 = vrot.slane %v1622, 4
    %v1624 = vmax.f32 %v1622, %v1623
    %v1625 = vrot.slane %v1624, 2
    %v1626 = vmax.f32 %v1624, %v1625
    %v1627 = vrot.slane %v1626, 1
    %v1628 = vmax.f32 %v1626, %v1627
    %v1629 = vsel %vm921, %v688, -inf
    %v1630 = vrot.slane %v1629, 4
    %v1631 = vmax.f32 %v1629, %v1630
    %v1632 = vrot.slane %v1631, 2
    %v1633 = vmax.f32 %v1631, %v1632
    %v1634 = vrot.slane %v1633, 1
    %v1635 = vmax.f32 %v1633, %v1634
    %v1636 = vsel %vm921, %v695, -inf
    %v1637 = vrot.slane %v1636, 4
    %v1638 = vmax.f32 %v1636, %v1637
    %v1639 = vrot.slane %v1638, 2
    %v1640 = vmax.f32 %v1638, %v1639
    %v1641 = vrot.slane %v1640, 1
    %v1642 = vmax.f32 %v1640, %v1641
    %v1643 = vsel %vm921, %v696, -inf
    %v1644 = vrot.slane %v1643, 4
    %v1645 = vmax.f32 %v1643, %v1644
    %v1646 = vrot.slane %v1645, 2
    %v1647 = vmax.f32 %v1645, %v1646
    %v1648 = vrot.slane %v1647, 1
    %v1649 = vmax.f32 %v1647, %v1648
    %v1650 = vsel %vm921, %v703, -inf
    %v1651 = vrot.slane %v1650, 4
    %v1652 = vmax.f32 %v1650, %v1651
    %v1653 = vrot.slane %v1652, 2
    %v1654 = vmax.f32 %v1652, %v1653
    %v1655 = vrot.slane %v1654, 1
    %v1656 = vmax.f32 %v1654, %v1655
    %v1657 = vsel %vm921, %v704, -inf
    %v1658 = vrot.slane %v1657, 4
    %v1659 = vmax.f32 %v1657, %v1658
    %v1660 = vrot.slane %v1659, 2
    %v1661 = vmax.f32 %v1659, %v1660
    %v1662 = vrot.slane %v1661, 1
    %v1663 = vmax.f32 %v1661, %v1662
    %v1664 = vsel %vm921, %v711, -inf
    %v1665 = vrot.slane %v1664, 4
    %v1666 = vmax.f32 %v1664, %v1665
    %v1667 = vrot.slane %v1666, 2
    %v1668 = vmax.f32 %v1666, %v1667
    %v1669 = vrot.slane %v1668, 1
    %v1670 = vmax.f32 %v1668, %v1669
    %v1671 = vsel %vm921, %v712, -inf
    %v1672 = vrot.slane %v1671, 4
    %v1673 = vmax.f32 %v1671, %v1672
    %v1674 = vrot.slane %v1673, 2
    %v1675 = vmax.f32 %v1673, %v1674
    %v1676 = vrot.slane %v1675, 1
    %v1677 = vmax.f32 %v1675, %v1676
    %v1678 = vsel %vm921, %v719, -inf
    %v1679 = vrot.slane %v1678, 4
    %v1680 = vmax.f32 %v1678, %v1679
    %v1681 = vrot.slane %v1680, 2
    %v1682 = vmax.f32 %v1680, %v1681
    %v1683 = vrot.slane %v1682, 1
    %v1684 = vmax.f32 %v1682, %v1683
    %v1685 = vsel %vm921, %v720, -inf
    %v1686 = vrot.slane %v1685, 4
    %v1687 = vmax.f32 %v1685, %v1686
    %v1688 = vrot.slane %v1687, 2
    %v1689 = vmax.f32 %v1687, %v1688
    %v1690 = vrot.slane %v1689, 1
    %v1691 = vmax.f32 %v1689, %v1690
    %v1692 = vsel %vm921, %v727, -inf
    %v1693 = vrot.slane %v1692, 4
    %v1694 = vmax.f32 %v1692, %v1693
    %v1695 = vrot.slane %v1694, 2
    %v1696 = vmax.f32 %v1694, %v1695
    %v1697 = vrot.slane %v1696, 1
    %v1698 = vmax.f32 %v1696, %v1697
    %v1699 = vsel %vm921, %v728, -inf
    %v1700 = vrot.slane %v1699, 4
    %v1701 = vmax.f32 %v1699, %v1700
    %v1702 = vrot.slane %v1701, 2
    %v1703 = vmax.f32 %v1701, %v1702
    %v1704 = vrot.slane %v1703, 1
    %v1705 = vmax.f32 %v1703, %v1704
    %v1706 = vsel %vm921, %v735, -inf
    %v1707 = vrot.slane %v1706, 4
    %v1708 = vmax.f32 %v1706, %v1707
    %v1709 = vrot.slane %v1708, 2
    %v1710 = vmax.f32 %v1708, %v1709
    %v1711 = vrot.slane %v1710, 1
    %v1712 = vmax.f32 %v1710, %v1711
    %v1713 = vsel %vm921, %v736, -inf
    %v1714 = vrot.slane %v1713, 4
    %v1715 = vmax.f32 %v1713, %v1714
    %v1716 = vrot.slane %v1715, 2
    %v1717 = vmax.f32 %v1715, %v1716
    %v1718 = vrot.slane %v1717, 1
    %v1719 = vmax.f32 %v1717, %v1718
    %v1720 = vsel %vm921, %v743, -inf
    %v1721 = vrot.slane %v1720, 4
    %v1722 = vmax.f32 %v1720, %v1721
    %v1723 = vrot.slane %v1722, 2
    %v1724 = vmax.f32 %v1722, %v1723
    %v1725 = vrot.slane %v1724, 1
    %v1726 = vmax.f32 %v1724, %v1725
    %v1727 = vsel %vm921, %v744, -inf
    %v1728 = vrot.slane %v1727, 4
    %v1729 = vmax.f32 %v1727, %v1728
    %v1730 = vrot.slane %v1729, 2
    %v1731 = vmax.f32 %v1729, %v1730
    %v1732 = vrot.slane %v1731, 1
    %v1733 = vmax.f32 %v1731, %v1732
    %v1734 = vsel %vm921, %v751, -inf
    %v1735 = vrot.slane %v1734, 4
    %v1736 = vmax.f32 %v1734, %v1735
    %v1737 = vrot.slane %v1736, 2
    %v1738 = vmax.f32 %v1736, %v1737
    %v1739 = vrot.slane %v1738, 1
    %v1740 = vmax.f32 %v1738, %v1739
    %v1741 = vsel %vm921, %v752, -inf
    %v1742 = vrot.slane %v1741, 4
    %v1743 = vmax.f32 %v1741, %v1742
    %v1744 = vrot.slane %v1743, 2
    %v1745 = vmax.f32 %v1743, %v1744
    %v1746 = vrot.slane %v1745, 1
    %v1747 = vmax.f32 %v1745, %v1746
    %v1748 = vsel %vm921, %v759, -inf
    %v1749 = vrot.slane %v1748, 4
    %v1750 = vmax.f32 %v1748, %v1749
    %v1751 = vrot.slane %v1750, 2
    %v1752 = vmax.f32 %v1750, %v1751
    %v1753 = vrot.slane %v1752, 1
    %v1754 = vmax.f32 %v1752, %v1753
    %v1755 = vsel %vm921, %v760, -inf
    %v1756 = vrot.slane %v1755, 4
    %v1757 = vmax.f32 %v1755, %v1756
    %v1758 = vrot.slane %v1757, 2
    %v1759 = vmax.f32 %v1757, %v1758
    %v1760 = vrot.slane %v1759, 1
    %v1761 = vmax.f32 %v1759, %v1760
    %v1762 = vsel %vm921, %v767, -inf
    %v1763 = vrot.slane %v1762, 4
    %v1764 = vmax.f32 %v1762, %v1763
    %v1765 = vrot.slane %v1764, 2
    %v1766 = vmax.f32 %v1764, %v1765
    %v1767 = vrot.slane %v1766, 1
    %v1768 = vmax.f32 %v1766, %v1767
    %v1769 = vsel %vm921, %v768, -inf
    %v1770 = vrot.slane %v1769, 4
    %v1771 = vmax.f32 %v1769, %v1770
    %v1772 = vrot.slane %v1771, 2
    %v1773 = vmax.f32 %v1771, %v1772
    %v1774 = vrot.slane %v1773, 1
    %v1775 = vmax.f32 %v1773, %v1774
    %v1776 = vsel %vm921, %v775, -inf
    %v1777 = vrot.slane %v1776, 4
    %v1778 = vmax.f32 %v1776, %v1777
    %v1779 = vrot.slane %v1778, 2
    %v1780 = vmax.f32 %v1778, %v1779
    %v1781 = vrot.slane %v1780, 1
    %v1782 = vmax.f32 %v1780, %v1781
    %v1783 = vsel %vm921, %v776, -inf
    %v1784 = vrot.slane %v1783, 4
    %v1785 = vmax.f32 %v1783, %v1784
    %v1786 = vrot.slane %v1785, 2
    %v1787 = vmax.f32 %v1785, %v1786
    %v1788 = vrot.slane %v1787, 1
    %v1789 = vmax.f32 %v1787, %v1788
    %v1790 = vsel %vm921, %v783, -inf
    %v1791 = vrot.slane %v1790, 4
    %v1792 = vmax.f32 %v1790, %v1791
    %v1793 = vrot.slane %v1792, 2
    %v1794 = vmax.f32 %v1792, %v1793
    %v1795 = vrot.slane %v1794, 1
    %v1796 = vmax.f32 %v1794, %v1795
    %v1797 = vsel %vm921, %v784, -inf
    %v1798 = vrot.slane %v1797, 4
    %v1799 = vmax.f32 %v1797, %v1798
    %v1800 = vrot.slane %v1799, 2
    %v1801 = vmax.f32 %v1799, %v1800
    %v1802 = vrot.slane %v1801, 1
    %v1803 = vmax.f32 %v1801, %v1802
    %v1804 = vsel %vm921, %v791, -inf
    %v1805 = vrot.slane %v1804, 4
    %v1806 = vmax.f32 %v1804, %v1805
    %v1807 = vrot.slane %v1806, 2
    %v1808 = vmax.f32 %v1806, %v1807
    %v1809 = vrot.slane %v1808, 1
    %v1810 = vmax.f32 %v1808, %v1809
    %v1811 = vsel %vm921, %v792, -inf
    %v1812 = vrot.slane %v1811, 4
    %v1813 = vmax.f32 %v1811, %v1812
    %v1814 = vrot.slane %v1813, 2
    %v1815 = vmax.f32 %v1813, %v1814
    %v1816 = vrot.slane %v1815, 1
    %v1817 = vmax.f32 %v1815, %v1816
    %v1818 = vmax.f32 %v928, %v984
    %v1819 = vmax.f32 %v935, %v991
    %v1820 = vmax.f32 %v942, %v998
    %v1821 = vmax.f32 %v949, %v1005
    %v1822 = vmax.f32 %v956, %v1012
    %v1823 = vmax.f32 %v963, %v1019
    %v1824 = vmax.f32 %v970, %v1026
    %v1825 = vmax.f32 %v977, %v1033
    %v1826 = vmax.f32 %v1040, %v1096
    %v1827 = vmax.f32 %v1047, %v1103
    %v1828 = vmax.f32 %v1054, %v1110
    %v1829 = vmax.f32 %v1061, %v1117
    %v1830 = vmax.f32 %v1068, %v1124
    %v1831 = vmax.f32 %v1075, %v1131
    %v1832 = vmax.f32 %v1082, %v1138
    %v1833 = vmax.f32 %v1089, %v1145
    %v1834 = vmax.f32 %v1152, %v1208
    %v1835 = vmax.f32 %v1159, %v1215
    %v1836 = vmax.f32 %v1166, %v1222
    %v1837 = vmax.f32 %v1173, %v1229
    %v1838 = vmax.f32 %v1180, %v1236
    %v1839 = vmax.f32 %v1187, %v1243
    %v1840 = vmax.f32 %v1194, %v1250
    %v1841 = vmax.f32 %v1201, %v1257
    %v1842 = vmax.f32 %v1264, %v1320
    %v1843 = vmax.f32 %v1271, %v1327
    %v1844 = vmax.f32 %v1278, %v1334
    %v1845 = vmax.f32 %v1285, %v1341
    %v1846 = vmax.f32 %v1292, %v1348
    %v1847 = vmax.f32 %v1299, %v1355
    %v1848 = vmax.f32 %v1306, %v1362
    %v1849 = vmax.f32 %v1313, %v1369
    %v1850 = vmax.f32 %v1376, %v1432
    %v1851 = vmax.f32 %v1383, %v1439
    %v1852 = vmax.f32 %v1390, %v1446
    %v1853 = vmax.f32 %v1397, %v1453
    %v1854 = vmax.f32 %v1404, %v1460
    %v1855 = vmax.f32 %v1411, %v1467
    %v1856 = vmax.f32 %v1418, %v1474
    %v1857 = vmax.f32 %v1425, %v1481
    %v1858 = vmax.f32 %v1488, %v1544
    %v1859 = vmax.f32 %v1495, %v1551
    %v1860 = vmax.f32 %v1502, %v1558
    %v1861 = vmax.f32 %v1509, %v1565
    %v1862 = vmax.f32 %v1516, %v1572
    %v1863 = vmax.f32 %v1523, %v1579
    %v1864 = vmax.f32 %v1530, %v1586
    %v1865 = vmax.f32 %v1537, %v1593
    %v1866 = vmax.f32 %v1600, %v1656
    %v1867 = vmax.f32 %v1607, %v1663
    %v1868 = vmax.f32 %v1614, %v1670
    %v1869 = vmax.f32 %v1621, %v1677
    %v1870 = vmax.f32 %v1628, %v1684
    %v1871 = vmax.f32 %v1635, %v1691
    %v1872 = vmax.f32 %v1642, %v1698
    %v1873 = vmax.f32 %v1649, %v1705
    %v1874 = vmax.f32 %v1712, %v1768
    %v1875 = vmax.f32 %v1719, %v1775
    %v1876 = vmax.f32 %v1726, %v1782
    %v1877 = vmax.f32 %v1733, %v1789
    %v1878 = vmax.f32 %v1740, %v1796
    %v1879 = vmax.f32 %v1747, %v1803
    %v1880 = vmax.f32 %v1754, %v1810
    %v1881 = vmax.f32 %v1761, %v1817
    %1882 = vst [vmem:[#allocation2] sm:$0xff] 0.0
    %1883 = vst [vmem:[#allocation2 + $0x8] sm:$0xff] 0.0
    %1884 = vst [vmem:[#allocation2 + $0x10] sm:$0xff] 0.0
    %1885 = vst [vmem:[#allocation2 + $0x18] sm:$0xff] 0.0
    %1886 = vst [vmem:[#allocation2 + $0x20] sm:$0xff] 0.0
    %1887 = vst [vmem:[#allocation2 + $0x28] sm:$0xff] 0.0
    %1888 = vst [vmem:[#allocation2 + $0x30] sm:$0xff] 0.0
    %1889 = vst [vmem:[#allocation2 + $0x38] sm:$0xff] 0.0
    %1890 = vst [vmem:[#allocation2 + $0x40] sm:$0xff] 0.0
    %1891 = vst [vmem:[#allocation2 + $0x48] sm:$0xff] 0.0
    %1892 = vst [vmem:[#allocation2 + $0x50] sm:$0xff] 0.0
    %1893 = vst [vmem:[#allocation2 + $0x58] sm:$0xff] 0.0
    %1894 = vst [vmem:[#allocation2 + $0x60] sm:$0xff] 0.0
    %1895 = vst [vmem:[#allocation2 + $0x68] sm:$0xff] 0.0
    %1896 = vst [vmem:[#allocation2 + $0x70] sm:$0xff] 0.0
    %1897 = vst [vmem:[#allocation2 + $0x78] sm:$0xff] 0.0
    %1898 = vst [vmem:[#allocation2 + $0x80] sm:$0xff] 0.0
    %1899 = vst [vmem:[#allocation2 + $0x88] sm:$0xff] 0.0
    %1900 = vst [vmem:[#allocation2 + $0x90] sm:$0xff] 0.0
    %1901 = vst [vmem:[#allocation2 + $0x98] sm:$0xff] 0.0
    %1902 = vst [vmem:[#allocation2 + $0xa0] sm:$0xff] 0.0
    %1903 = vst [vmem:[#allocation2 + $0xa8] sm:$0xff] 0.0
    %1904 = vst [vmem:[#allocation2 + $0xb0] sm:$0xff] 0.0
    %1905 = vst [vmem:[#allocation2 + $0xb8] sm:$0xff] 0.0
    %vm1970 = vcmask 1042434
    %v1971 = vsel %vm1970, %v1820, %v1818
    %vm1972 = vcmask 1043459
    %v1973 = vsel %vm1972, %v1822, %v1971
    %vm1974 = vcmask 1044484
    %v1975 = vsel %vm1974, %v1824, %v1973
    %v1976 = vsel %vm1970, %v1821, %v1819
    %v1977 = vsel %vm1972, %v1823, %v1976
    %v1978 = vsel %vm1974, %v1825, %v1977
    %v1979 = vsel %vm1970, %v1828, %v1826
    %v1980 = vsel %vm1972, %v1830, %v1979
    %v1981 = vsel %vm1974, %v1832, %v1980
    %v1982 = vsel %vm1970, %v1829, %v1827
    %v1983 = vsel %vm1972, %v1831, %v1982
    %v1984 = vsel %vm1974, %v1833, %v1983
    %v1985 = vsel %vm1970, %v1836, %v1834
    %v1986 = vsel %vm1972, %v1838, %v1985
    %v1987 = vsel %vm1974, %v1840, %v1986
    %v1988 = vsel %vm1970, %v1837, %v1835
    %v1989 = vsel %vm1972, %v1839, %v1988
    %v1990 = vsel %vm1974, %v1841, %v1989
    %v1991 = vsel %vm1970, %v1844, %v1842
    %v1992 = vsel %vm1972, %v1846, %v1991
    %v1993 = vsel %vm1974, %v1848, %v1992
    %v1994 = vsel %vm1970, %v1845, %v1843
    %v1995 = vsel %vm1972, %v1847, %v1994
    %v1996 = vsel %vm1974, %v1849, %v1995
    %v1997 = vsel %vm1970, %v1852, %v1850
    %v1998 = vsel %vm1972, %v1854, %v1997
    %v1999 = vsel %vm1974, %v1856, %v1998
    %v2000 = vsel %vm1970, %v1853, %v1851
    %v2001 = vsel %vm1972, %v1855, %v2000
    %v2002 = vsel %vm1974, %v1857, %v2001
    %v2003 = vsel %vm1970, %v1860, %v1858
    %v2004 = vsel %vm1972, %v1862, %v2003
    %v2005 = vsel %vm1974, %v1864, %v2004
    %v2006 = vsel %vm1970, %v1861, %v1859
    %v2007 = vsel %vm1972, %v1863, %v2006
    %v2008 = vsel %vm1974, %v1865, %v2007
    %v2009 = vsel %vm1970, %v1868, %v1866
    %v2010 = vsel %vm1972, %v1870, %v2009
    %v2011 = vsel %vm1974, %v1872, %v2010
    %v2012 = vsel %vm1970, %v1869, %v1867
    %v2013 = vsel %vm1972, %v1871, %v2012
    %v2014 = vsel %vm1974, %v1873, %v2013
    %v2015 = vsel %vm1970, %v1876, %v1874
    %v2016 = vsel %vm1972, %v1878, %v2015
    %v2017 = vsel %vm1974, %v1880, %v2016
    %v2018 = vsel %vm1970, %v1877, %v1875
    %v2019 = vsel %vm1972, %v1879, %v2018
    %v2020 = vsel %vm1974, %v1881, %v2019
    %s2037 = scalar_lea.vmem [#allocation2], 16
    %2038 = vst [vmem:[%s2037] sm:$0x1e] %v1975
    %2039 = vst [vmem:[%s2037 + $0x8] sm:$0x1e] %v1978
    %2040 = vst [vmem:[%s2037 + $0x10] sm:$0x1e] %v1981
    %2041 = vst [vmem:[%s2037 + $0x18] sm:$0x1e] %v1984
    %2042 = vst [vmem:[%s2037 + $0x20] sm:$0x1e] %v1987
    %2043 = vst [vmem:[%s2037 + $0x28] sm:$0x1e] %v1990
    %2044 = vst [vmem:[%s2037 + $0x30] sm:$0x1e] %v1993
    %2045 = vst [vmem:[%s2037 + $0x38] sm:$0x1e] %v1996
    %2046 = vst [vmem:[%s2037 + $0x60] sm:$0x1e] %v1999
    %2047 = vst [vmem:[%s2037 + $0x68] sm:$0x1e] %v2002
    %2048 = vst [vmem:[%s2037 + $0x70] sm:$0x1e] %v2005
    %2049 = vst [vmem:[%s2037 + $0x78] sm:$0x1e] %v2008
    %2050 = vst [vmem:[%s2037 + $0x80] sm:$0x1e] %v2011
    %2051 = vst [vmem:[%s2037 + $0x88] sm:$0x1e] %v2014
    %2052 = vst [vmem:[%s2037 + $0x90] sm:$0x1e] %v2017
    %2053 = vst [vmem:[%s2037 + $0x98] sm:$0x1e] %v2020
    %v2054 = vld [vmem:[#allocation2] sm:$0xff]
    %v2055 = vld [vmem:[#allocation2 + $0x8] sm:$0xff]
    %v2056 = vld [vmem:[#allocation2 + $0x60] sm:$0xff]
    %v2057 = vld [vmem:[#allocation2 + $0x68] sm:$0xff]
    %s2058 = scalar_lea.vmem [#allocation2], 32
    %v2059 = vld [vmem:[%s2058] sm:$0xff]
    %v2060 = vld [vmem:[%s2058 + $0x8] sm:$0xff]
    %v2061 = vld [vmem:[%s2058 + $0x60] sm:$0xff]
    %v2062 = vld [vmem:[%s2058 + $0x68] sm:$0xff]
    %v2067 = vrot.slane %v2056, 7
    %vm2068 = vcmask 1041409
    %v2069 = vsel %vm2068, %v2067, %v2054
    %v2070 = vrot.slane %v2057, 7
    %v2071 = vsel %vm2068, %v2070, %v2055
    %v2074 = vsel %vm1972, %v2067, %v2054
    %v2075 = vsel %vm1972, %v2070, %v2055
    %v2082 = vrot.slane %v2059, 4
    %v2083 = vrot.slane %v2061, 3
    %vm2084 = vcmask 1045509
    %v2085 = vsel %vm2084, %v2083, %v2082
    %v2086 = vrot.slane %v2060, 4
    %v2087 = vrot.slane %v2062, 3
    %v2088 = vsel %vm2084, %v2087, %v2086
    %vm2091 = vcmask 1047559
    %v2092 = vsel %vm2091, %v2083, %v2082
    %v2093 = vsel %vm2091, %v2087, %v2086
    %v2096 = vsel %vm921, %v2069, %v2074
    %v2097 = vsel %vm921, %v2071, %v2075
    %vm2098 = vcmask 1043456
    %v2099 = vsel %vm2098, %v2096, %v2085
    %v2100 = vsel %vm2098, %v2097, %v2088
    %vm2101 = vcmask 1045504
    %v2102 = vsel %vm2101, %v2099, %v2092
    %v2103 = vsel %vm2101, %v2100, %v2093
    %2104 = vst [vmem:[#allocation3] sm:$0xff] %v2102
    %2105 = vst [vmem:[#allocation3 + $0x8] sm:$0xff] %v2103
    %v2106 = vrot.slane %v2054, 1
    %v2107 = vsel %vm2068, %v2056, %v2106
    %v2108 = vrot.slane %v2055, 1
    %v2109 = vsel %vm2068, %v2057, %v2108
    %v2112 = vsel %vm1972, %v2056, %v2106
    %v2113 = vsel %vm1972, %v2057, %v2108
    %v2116 = vrot.slane %v2059, 5
    %v2117 = vrot.slane %v2061, 4
    %v2118 = vsel %vm2084, %v2117, %v2116
    %v2119 = vrot.slane %v2060, 5
    %v2120 = vrot.slane %v2062, 4
    %v2121 = vsel %vm2084, %v2120, %v2119
    %v2124 = vsel %vm2091, %v2117, %v2116
    %v2125 = vsel %vm2091, %v2120, %v2119
    %v2128 = vsel %vm921, %v2107, %v2112
    %v2129 = vsel %vm921, %v2109, %v2113
    %v2130 = vsel %vm2098, %v2128, %v2118
    %v2131 = vsel %vm2098, %v2129, %v2121
    %v2132 = vsel %vm2101, %v2130, %v2124
    %v2133 = vsel %vm2101, %v2131, %v2125
    %2134 = vst [vmem:[#allocation3 + $0x10] sm:$0xff] %v2132
    %2135 = vst [vmem:[#allocation3 + $0x18] sm:$0xff] %v2133
    %v2136 = vrot.slane %v2054, 2
    %v2137 = vrot.slane %v2056, 1
    %v2138 = vsel %vm2068, %v2137, %v2136
    %v2139 = vrot.slane %v2055, 2
    %v2140 = vrot.slane %v2057, 1
    %v2141 = vsel %vm2068, %v2140, %v2139
    %v2144 = vsel %vm1972, %v2137, %v2136
    %v2145 = vsel %vm1972, %v2140, %v2139
    %v2148 = vrot.slane %v2059, 6
    %v2149 = vrot.slane %v2061, 5
    %v2150 = vsel %vm2084, %v2149, %v2148
    %v2151 = vrot.slane %v2060, 6
    %v2152 = vrot.slane %v2062, 5
    %v2153 = vsel %vm2084, %v2152, %v2151
    %v2156 = vsel %vm2091, %v2149, %v2148
    %v2157 = vsel %vm2091, %v2152, %v2151
    %v2160 = vsel %vm921, %v2138, %v2144
    %v2161 = vsel %vm921, %v2141, %v2145
    %v2162 = vsel %vm2098, %v2160, %v2150
    %v2163 = vsel %vm2098, %v2161, %v2153
    %v2164 = vsel %vm2101, %v2162, %v2156
    %v2165 = vsel %vm2101, %v2163, %v2157
    %2166 = vst [vmem:[#allocation3 + $0x20] sm:$0xff] %v2164
    %2167 = vst [vmem:[#allocation3 + $0x28] sm:$0xff] %v2165
    %v2168 = vld [vmem:[%s2037] sm:$0xff]
    %v2169 = vld [vmem:[%s2037 + $0x8] sm:$0xff]
    %v2170 = vld [vmem:[%s2037 + $0x60] sm:$0xff]
    %v2171 = vld [vmem:[%s2037 + $0x68] sm:$0xff]
    %s2172 = scalar_lea.vmem [#allocation2], 48
    %v2173 = vld [vmem:[%s2172] sm:$0xff]
    %v2174 = vld [vmem:[%s2172 + $0x8] sm:$0xff]
    %v2175 = vld [vmem:[%s2172 + $0x60] sm:$0xff]
    %v2176 = vld [vmem:[%s2172 + $0x68] sm:$0xff]
    %v2181 = vrot.slane %v2170, 7
    %v2182 = vsel %vm2068, %v2181, %v2168
    %v2183 = vrot.slane %v2171, 7
    %v2184 = vsel %vm2068, %v2183, %v2169
    %v2187 = vsel %vm1972, %v2181, %v2168
    %v2188 = vsel %vm1972, %v2183, %v2169
    %v2195 = vrot.slane %v2173, 4
    %v2196 = vrot.slane %v2175, 3
    %v2197 = vsel %vm2084, %v2196, %v2195
    %v2198 = vrot.slane %v2174, 4
    %v2199 = vrot.slane %v2176, 3
    %v2200 = vsel %vm2084, %v2199, %v2198
    %v2203 = vsel %vm2091, %v2196, %v2195
    %v2204 = vsel %vm2091, %v2199, %v2198
    %v2207 = vsel %vm921, %v2182, %v2187
    %v2208 = vsel %vm921, %v2184, %v2188
    %v2209 = vsel %vm2098, %v2207, %v2197
    %v2210 = vsel %vm2098, %v2208, %v2200
    %v2211 = vsel %vm2101, %v2209, %v2203
    %v2212 = vsel %vm2101, %v2210, %v2204
    %2213 = vst [vmem:[#allocation3 + $0x30] sm:$0xff] %v2211
    %2214 = vst [vmem:[#allocation3 + $0x38] sm:$0xff] %v2212
    %v2215 = vrot.slane %v2168, 1
    %v2216 = vsel %vm2068, %v2170, %v2215
    %v2217 = vrot.slane %v2169, 1
    %v2218 = vsel %vm2068, %v2171, %v2217
    %v2221 = vsel %vm1972, %v2170, %v2215
    %v2222 = vsel %vm1972, %v2171, %v2217
    %v2225 = vrot.slane %v2173, 5
    %v2226 = vrot.slane %v2175, 4
    %v2227 = vsel %vm2084, %v2226, %v2225
    %v2228 = vrot.slane %v2174, 5
    %v2229 = vrot.slane %v2176, 4
    %v2230 = vsel %vm2084, %v2229, %v2228
    %v2233 = vsel %vm2091, %v2226, %v2225
    %v2234 = vsel %vm2091, %v2229, %v2228
    %v2237 = vsel %vm921, %v2216, %v2221
    %v2238 = vsel %vm921, %v2218, %v2222
    %v2239 = vsel %vm2098, %v2237, %v2227
    %v2240 = vsel %vm2098, %v2238, %v2230
    %v2241 = vsel %vm2101, %v2239, %v2233
    %v2242 = vsel %vm2101, %v2240, %v2234
    %2243 = vst [vmem:[#allocation3 + $0x40] sm:$0xff] %v2241
    %2244 = vst [vmem:[#allocation3 + $0x48] sm:$0xff] %v2242
    %v2245 = vrot.slane %v2168, 2
    %v2246 = vrot.slane %v2170, 1
    %v2247 = vsel %vm2068, %v2246, %v2245
    %v2248 = vrot.slane %v2169, 2
    %v2249 = vrot.slane %v2171, 1
    %v2250 = vsel %vm2068, %v2249, %v2248
    %v2253 = vsel %vm1972, %v2246, %v2245
    %v2254 = vsel %vm1972, %v2249, %v2248
    %v2257 = vrot.slane %v2173, 6
    %v2258 = vrot.slane %v2175, 5
    %v2259 = vsel %vm2084, %v2258, %v2257
    %v2260 = vrot.slane %v2174, 6
    %v2261 = vrot.slane %v2176, 5
    %v2262 = vsel %vm2084, %v2261, %v2260
    %v2265 = vsel %vm2091, %v2258, %v2257
    %v2266 = vsel %vm2091, %v2261, %v2260
    %v2269 = vsel %vm921, %v2247, %v2253
    %v2270 = vsel %vm921, %v2250, %v2254
    %v2271 = vsel %vm2098, %v2269, %v2259
    %v2272 = vsel %vm2098, %v2270, %v2262
    %v2273 = vsel %vm2101, %v2271, %v2265
    %v2274 = vsel %vm2101, %v2272, %v2266
    %2275 = vst [vmem:[#allocation3 + $0x50] sm:$0xff] %v2273
    %2276 = vst [vmem:[#allocation3 + $0x58] sm:$0xff] %v2274
    %v2277 = vld [vmem:[%s2058] sm:$0xff]
    %v2278 = vld [vmem:[%s2058 + $0x8] sm:$0xff]
    %v2279 = vld [vmem:[%s2058 + $0x60] sm:$0xff]
    %v2280 = vld [vmem:[%s2058 + $0x68] sm:$0xff]
    %s2281 = scalar_lea.vmem [#allocation2], 64
    %v2282 = vld [vmem:[%s2281] sm:$0xff]
    %v2283 = vld [vmem:[%s2281 + $0x8] sm:$0xff]
    %v2284 = vld [vmem:[%s2281 + $0x60] sm:$0xff]
    %v2285 = vld [vmem:[%s2281 + $0x68] sm:$0xff]
    %v2290 = vrot.slane %v2279, 7
    %v2291 = vsel %vm2068, %v2290, %v2277
    %v2292 = vrot.slane %v2280, 7
    %v2293 = vsel %vm2068, %v2292, %v2278
    %v2296 = vsel %vm1972, %v2290, %v2277
    %v2297 = vsel %vm1972, %v2292, %v2278
    %v2304 = vrot.slane %v2282, 4
    %v2305 = vrot.slane %v2284, 3
    %v2306 = vsel %vm2084, %v2305, %v2304
    %v2307 = vrot.slane %v2283, 4
    %v2308 = vrot.slane %v2285, 3
    %v2309 = vsel %vm2084, %v2308, %v2307
    %v2312 = vsel %vm2091, %v2305, %v2304
    %v2313 = vsel %vm2091, %v2308, %v2307
    %v2316 = vsel %vm921, %v2291, %v2296
    %v2317 = vsel %vm921, %v2293, %v2297
    %v2318 = vsel %vm2098, %v2316, %v2306
    %v2319 = vsel %vm2098, %v2317, %v2309
    %v2320 = vsel %vm2101, %v2318, %v2312
    %v2321 = vsel %vm2101, %v2319, %v2313
    %2322 = vst [vmem:[#allocation3 + $0x60] sm:$0xff] %v2320
    %2323 = vst [vmem:[#allocation3 + $0x68] sm:$0xff] %v2321
    %v2324 = vrot.slane %v2277, 1
    %v2325 = vsel %vm2068, %v2279, %v2324
    %v2326 = vrot.slane %v2278, 1
    %v2327 = vsel %vm2068, %v2280, %v2326
    %v2330 = vsel %vm1972, %v2279, %v2324
    %v2331 = vsel %vm1972, %v2280, %v2326
    %v2334 = vrot.slane %v2282, 5
    %v2335 = vrot.slane %v2284, 4
    %v2336 = vsel %vm2084, %v2335, %v2334
    %v2337 = vrot.slane %v2283, 5
    %v2338 = vrot.slane %v2285, 4
    %v2339 = vsel %vm2084, %v2338, %v2337
    %v2342 = vsel %vm2091, %v2335, %v2334
    %v2343 = vsel %vm2091, %v2338, %v2337
    %v2346 = vsel %vm921, %v2325, %v2330
    %v2347 = vsel %vm921, %v2327, %v2331
    %v2348 = vsel %vm2098, %v2346, %v2336
    %v2349 = vsel %vm2098, %v2347, %v2339
    %v2350 = vsel %vm2101, %v2348, %v2342
    %v2351 = vsel %vm2101, %v2349, %v2343
    %2352 = vst [vmem:[#allocation3 + $0x70] sm:$0xff] %v2350
    %2353 = vst [vmem:[#allocation3 + $0x78] sm:$0xff] %v2351
    %v2354 = vrot.slane %v2277, 2
    %v2355 = vrot.slane %v2279, 1
    %v2356 = vsel %vm2068, %v2355, %v2354
    %v2357 = vrot.slane %v2278, 2
    %v2358 = vrot.slane %v2280, 1
    %v2359 = vsel %vm2068, %v2358, %v2357
    %v2362 = vsel %vm1972, %v2355, %v2354
    %v2363 = vsel %vm1972, %v2358, %v2357
    %v2366 = vrot.slane %v2282, 6
    %v2367 = vrot.slane %v2284, 5
    %v2368 = vsel %vm2084, %v2367, %v2366
    %v2369 = vrot.slane %v2283, 6
    %v2370 = vrot.slane %v2285, 5
    %v2371 = vsel %vm2084, %v2370, %v2369
    %v2374 = vsel %vm2091, %v2367, %v2366
    %v2375 = vsel %vm2091, %v2370, %v2369
    %v2378 = vsel %vm921, %v2356, %v2362
    %v2379 = vsel %vm921, %v2359, %v2363
    %v2380 = vsel %vm2098, %v2378, %v2368
    %v2381 = vsel %vm2098, %v2379, %v2371
    %v2382 = vsel %vm2101, %v2380, %v2374
    %v2383 = vsel %vm2101, %v2381, %v2375
    %2384 = vst [vmem:[#allocation3 + $0x80] sm:$0xff] %v2382
    %2385 = vst [vmem:[#allocation3 + $0x88] sm:$0xff] %v2383
    %s2386 = smul.u32 4, 288
    %s2387 = smul.u32 %s2386, 2
    %s2388 = sshll.u32 %s2387, 4
    %2389 = dma.done [#allocation5], %s2388
    %v2390 = vld [vmem:[#allocation3] sm:$0xff]
    %v2391 = vld [vmem:[#allocation3 + $0x8] sm:$0xff]
    %v2392 = vld [vmem:[#allocation3 + $0x10] sm:$0xff]
    %v2393 = vld [vmem:[#allocation3 + $0x18] sm:$0xff]
    %v2394 = vld [vmem:[#allocation3 + $0x20] sm:$0xff]
    %v2395 = vld [vmem:[#allocation3 + $0x28] sm:$0xff]
    %v2396 = vld [vmem:[#allocation3 + $0x30] sm:$0xff]
    %v2397 = vld [vmem:[#allocation3 + $0x38] sm:$0xff]
    %v2398 = vld [vmem:[#allocation3 + $0x40] sm:$0xff]
    %v2399 = vld [vmem:[#allocation3 + $0x48] sm:$0xff]
    %v2400 = vld [vmem:[#allocation3 + $0x50] sm:$0xff]
    %v2401 = vld [vmem:[#allocation3 + $0x58] sm:$0xff]
    %v2402 = vld [vmem:[#allocation3 + $0x60] sm:$0xff]
    %v2403 = vld [vmem:[#allocation3 + $0x68] sm:$0xff]
    %v2404 = vld [vmem:[#allocation3 + $0x70] sm:$0xff]
    %v2405 = vld [vmem:[#allocation3 + $0x78] sm:$0xff]
    %v2406 = vld [vmem:[#allocation3 + $0x80] sm:$0xff]
    %v2407 = vld [vmem:[#allocation3 + $0x88] sm:$0xff]
    %v2408 = vpack.c.bf16 %v2390, %v2390
    %v2409 = vpack.c.bf16 %v2391, %v2391
    %v2410 = vpack.c.bf16 %v2392, %v2392
    %v2411 = vpack.c.bf16 %v2393, %v2393
    %v2412 = vpack.c.bf16 %v2394, %v2394
    %v2413 = vpack.c.bf16 %v2395, %v2395
    %v2414 = vpack.c.bf16 %v2396, %v2396
    %v2415 = vpack.c.bf16 %v2397, %v2397
    %v2416 = vpack.c.bf16 %v2398, %v2398
    %v2417 = vpack.c.bf16 %v2399, %v2399
    %v2418 = vpack.c.bf16 %v2400, %v2400
    %v2419 = vpack.c.bf16 %v2401, %v2401
    %v2420 = vpack.c.bf16 %v2402, %v2402
    %v2421 = vpack.c.bf16 %v2403, %v2403
    %v2422 = vpack.c.bf16 %v2404, %v2404
    %v2423 = vpack.c.bf16 %v2405, %v2405
    %v2424 = vpack.c.bf16 %v2406, %v2406
    %v2425 = vpack.c.bf16 %v2407, %v2407
    %v2426 = vld [vmem:[#allocation4] sm:$0xff]
    %v2427 = vld [vmem:[#allocation4 + $0x8] sm:$0xff]
    %v2428 = vld [vmem:[#allocation4 + $0x10] sm:$0xff]
    %v2429 = vld [vmem:[#allocation4 + $0x18] sm:$0xff]
    %v2430 = vld [vmem:[#allocation4 + $0x20] sm:$0xff]
    %v2431 = vld [vmem:[#allocation4 + $0x28] sm:$0xff]
    %v2432 = vld [vmem:[#allocation4 + $0x30] sm:$0xff]
    %v2433 = vld [vmem:[#allocation4 + $0x38] sm:$0xff]
    %v2434 = vld [vmem:[#allocation4 + $0x40] sm:$0xff]
    %v2435 = vld [vmem:[#allocation4 + $0x48] sm:$0xff]
    %v2436 = vld [vmem:[#allocation4 + $0x50] sm:$0xff]
    %v2437 = vld [vmem:[#allocation4 + $0x58] sm:$0xff]
    %v2438 = vld [vmem:[#allocation4 + $0x60] sm:$0xff]
    %v2439 = vld [vmem:[#allocation4 + $0x68] sm:$0xff]
    %v2440 = vld [vmem:[#allocation4 + $0x70] sm:$0xff]
    %v2441 = vld [vmem:[#allocation4 + $0x78] sm:$0xff]
    %v2442 = vld [vmem:[#allocation4 + $0x80] sm:$0xff]
    %v2443 = vld [vmem:[#allocation4 + $0x88] sm:$0xff]
    %v2444 = vld [vmem:[#allocation4 + $0x90] sm:$0xff]
    %v2445 = vld [vmem:[#allocation4 + $0x98] sm:$0xff]
    %v2446 = vld [vmem:[#allocation4 + $0xa0] sm:$0xff]
    %v2447 = vld [vmem:[#allocation4 + $0xa8] sm:$0xff]
    %v2448 = vld [vmem:[#allocation4 + $0xb0] sm:$0xff]
    %v2449 = vld [vmem:[#allocation4 + $0xb8] sm:$0xff]
    %v2450 = vld [vmem:[#allocation4 + $0xc0] sm:$0xff]
    %v2451 = vld [vmem:[#allocation4 + $0xc8] sm:$0xff]
    %v2452 = vld [vmem:[#allocation4 + $0xd0] sm:$0xff]
    %v2453 = vld [vmem:[#allocation4 + $0xd8] sm:$0xff]
    %v2454 = vld [vmem:[#allocation4 + $0xe0] sm:$0xff]
    %v2455 = vld [vmem:[#allocation4 + $0xe8] sm:$0xff]
    %v2456 = vld [vmem:[#allocation4 + $0xf0] sm:$0xff]
    %v2457 = vld [vmem:[#allocation4 + $0xf8] sm:$0xff]
    %v2458 = vld [vmem:[#allocation4 + $0x100] sm:$0xff]
    %v2459 = vld [vmem:[#allocation4 + $0x108] sm:$0xff]
    %v2460 = vld [vmem:[#allocation4 + $0x110] sm:$0xff]
    %v2461 = vld [vmem:[#allocation4 + $0x118] sm:$0xff]
    %v2462 = vld [vmem:[#allocation4 + $0x120] sm:$0xff]
    %v2463 = vld [vmem:[#allocation4 + $0x128] sm:$0xff]
    %v2464 = vld [vmem:[#allocation4 + $0x130] sm:$0xff]
    %v2465 = vld [vmem:[#allocation4 + $0x138] sm:$0xff]
    %v2466 = vld [vmem:[#allocation4 + $0x140] sm:$0xff]
    %v2467 = vld [vmem:[#allocation4 + $0x148] sm:$0xff]
    %v2468 = vld [vmem:[#allocation4 + $0x150] sm:$0xff]
    %v2469 = vld [vmem:[#allocation4 + $0x158] sm:$0xff]
    %v2470 = vld [vmem:[#allocation4 + $0x160] sm:$0xff]
    %v2471 = vld [vmem:[#allocation4 + $0x168] sm:$0xff]
    %v2472 = vld [vmem:[#allocation4 + $0x170] sm:$0xff]
    %v2473 = vld [vmem:[#allocation4 + $0x178] sm:$0xff]
    %v2474 = vld [vmem:[#allocation4 + $0x180] sm:$0xff]
    %v2475 = vld [vmem:[#allocation4 + $0x188] sm:$0xff]
    %v2476 = vld [vmem:[#allocation4 + $0x190] sm:$0xff]
    %v2477 = vld [vmem:[#allocation4 + $0x198] sm:$0xff]
    %v2478 = vld [vmem:[#allocation4 + $0x1a0] sm:$0xff]
    %v2479 = vld [vmem:[#allocation4 + $0x1a8] sm:$0xff]
    %v2480 = vld [vmem:[#allocation4 + $0x1b0] sm:$0xff]
    %v2481 = vld [vmem:[#allocation4 + $0x1b8] sm:$0xff]
    %v2482 = vld [vmem:[#allocation4 + $0x1c0] sm:$0xff]
    %v2483 = vld [vmem:[#allocation4 + $0x1c8] sm:$0xff]
    %v2484 = vld [vmem:[#allocation4 + $0x1d0] sm:$0xff]
    %v2485 = vld [vmem:[#allocation4 + $0x1d8] sm:$0xff]
    %v2486 = vld [vmem:[#allocation4 + $0x1e0] sm:$0xff]
    %v2487 = vld [vmem:[#allocation4 + $0x1e8] sm:$0xff]
    %v2488 = vld [vmem:[#allocation4 + $0x1f0] sm:$0xff]
    %v2489 = vld [vmem:[#allocation4 + $0x1f8] sm:$0xff]
    %v2490 = vld [vmem:[#allocation4 + $0x200] sm:$0xff]
    %v2491 = vld [vmem:[#allocation4 + $0x208] sm:$0xff]
    %v2492 = vld [vmem:[#allocation4 + $0x210] sm:$0xff]
    %v2493 = vld [vmem:[#allocation4 + $0x218] sm:$0xff]
    %v2494 = vld [vmem:[#allocation4 + $0x220] sm:$0xff]
    %v2495 = vld [vmem:[#allocation4 + $0x228] sm:$0xff]
    %v2496 = vld [vmem:[#allocation4 + $0x230] sm:$0xff]
    %v2497 = vld [vmem:[#allocation4 + $0x238] sm:$0xff]
    %v2498 = vld [vmem:[#allocation4 + $0x240] sm:$0xff]
    %v2499 = vld [vmem:[#allocation4 + $0x248] sm:$0xff]
    %v2500 = vld [vmem:[#allocation4 + $0x250] sm:$0xff]
    %v2501 = vld [vmem:[#allocation4 + $0x258] sm:$0xff]
    %v2502 = vld [vmem:[#allocation4 + $0x260] sm:$0xff]
    %v2503 = vld [vmem:[#allocation4 + $0x268] sm:$0xff]
    %v2504 = vld [vmem:[#allocation4 + $0x270] sm:$0xff]
    %v2505 = vld [vmem:[#allocation4 + $0x278] sm:$0xff]
    %v2506 = vld [vmem:[#allocation4 + $0x280] sm:$0xff]
    %v2507 = vld [vmem:[#allocation4 + $0x288] sm:$0xff]
    %v2508 = vld [vmem:[#allocation4 + $0x290] sm:$0xff]
    %v2509 = vld [vmem:[#allocation4 + $0x298] sm:$0xff]
    %v2510 = vld [vmem:[#allocation4 + $0x2a0] sm:$0xff]
    %v2511 = vld [vmem:[#allocation4 + $0x2a8] sm:$0xff]
    %v2512 = vld [vmem:[#allocation4 + $0x2b0] sm:$0xff]
    %v2513 = vld [vmem:[#allocation4 + $0x2b8] sm:$0xff]
    %v2514 = vld [vmem:[#allocation4 + $0x2c0] sm:$0xff]
    %v2515 = vld [vmem:[#allocation4 + $0x2c8] sm:$0xff]
    %v2516 = vld [vmem:[#allocation4 + $0x2d0] sm:$0xff]
    %v2517 = vld [vmem:[#allocation4 + $0x2d8] sm:$0xff]
    %v2518 = vld [vmem:[#allocation4 + $0x2e0] sm:$0xff]
    %v2519 = vld [vmem:[#allocation4 + $0x2e8] sm:$0xff]
    %v2520 = vld [vmem:[#allocation4 + $0x2f0] sm:$0xff]
    %v2521 = vld [vmem:[#allocation4 + $0x2f8] sm:$0xff]
    %v2522 = vld [vmem:[#allocation4 + $0x300] sm:$0xff]
    %v2523 = vld [vmem:[#allocation4 + $0x308] sm:$0xff]
    %v2524 = vld [vmem:[#allocation4 + $0x310] sm:$0xff]
    %v2525 = vld [vmem:[#allocation4 + $0x318] sm:$0xff]
    %v2526 = vld [vmem:[#allocation4 + $0x320] sm:$0xff]
    %v2527 = vld [vmem:[#allocation4 + $0x328] sm:$0xff]
    %v2528 = vld [vmem:[#allocation4 + $0x330] sm:$0xff]
    %v2529 = vld [vmem:[#allocation4 + $0x338] sm:$0xff]
    %v2530 = vld [vmem:[#allocation4 + $0x340] sm:$0xff]
    %v2531 = vld [vmem:[#allocation4 + $0x348] sm:$0xff]
    %v2532 = vld [vmem:[#allocation4 + $0x350] sm:$0xff]
    %v2533 = vld [vmem:[#allocation4 + $0x358] sm:$0xff]
    %v2534 = vld [vmem:[#allocation4 + $0x360] sm:$0xff]
    %v2535 = vld [vmem:[#allocation4 + $0x368] sm:$0xff]
    %v2536 = vld [vmem:[#allocation4 + $0x370] sm:$0xff]
    %v2537 = vld [vmem:[#allocation4 + $0x378] sm:$0xff]
    %v2538 = vld [vmem:[#allocation4 + $0x380] sm:$0xff]
    %v2539 = vld [vmem:[#allocation4 + $0x388] sm:$0xff]
    %v2540 = vld [vmem:[#allocation4 + $0x390] sm:$0xff]
    %v2541 = vld [vmem:[#allocation4 + $0x398] sm:$0xff]
    %v2542 = vld [vmem:[#allocation4 + $0x3a0] sm:$0xff]
    %v2543 = vld [vmem:[#allocation4 + $0x3a8] sm:$0xff]
    %v2544 = vld [vmem:[#allocation4 + $0x3b0] sm:$0xff]
    %v2545 = vld [vmem:[#allocation4 + $0x3b8] sm:$0xff]
    %v2546 = vld [vmem:[#allocation4 + $0x3c0] sm:$0xff]
    %v2547 = vld [vmem:[#allocation4 + $0x3c8] sm:$0xff]
    %v2548 = vld [vmem:[#allocation4 + $0x3d0] sm:$0xff]
    %v2549 = vld [vmem:[#allocation4 + $0x3d8] sm:$0xff]
    %v2550 = vld [vmem:[#allocation4 + $0x3e0] sm:$0xff]
    %v2551 = vld [vmem:[#allocation4 + $0x3e8] sm:$0xff]
    %v2552 = vld [vmem:[#allocation4 + $0x3f0] sm:$0xff]
    %v2553 = vld [vmem:[#allocation4 + $0x3f8] sm:$0xff]
    %v2554 = vld [vmem:[#allocation4 + $0x400] sm:$0xff]
    %v2555 = vld [vmem:[#allocation4 + $0x408] sm:$0xff]
    %v2556 = vld [vmem:[#allocation4 + $0x410] sm:$0xff]
    %v2557 = vld [vmem:[#allocation4 + $0x418] sm:$0xff]
    %v2558 = vld [vmem:[#allocation4 + $0x420] sm:$0xff]
    %v2559 = vld [vmem:[#allocation4 + $0x428] sm:$0xff]
    %v2560 = vld [vmem:[#allocation4 + $0x430] sm:$0xff]
    %v2561 = vld [vmem:[#allocation4 + $0x438] sm:$0xff]
    %v2562 = vld [vmem:[#allocation4 + $0x440] sm:$0xff]
    %v2563 = vld [vmem:[#allocation4 + $0x448] sm:$0xff]
    %v2564 = vld [vmem:[#allocation4 + $0x450] sm:$0xff]
    %v2565 = vld [vmem:[#allocation4 + $0x458] sm:$0xff]
    %v2566 = vld [vmem:[#allocation4 + $0x460] sm:$0xff]
    %v2567 = vld [vmem:[#allocation4 + $0x468] sm:$0xff]
    %v2568 = vld [vmem:[#allocation4 + $0x470] sm:$0xff]
    %v2569 = vld [vmem:[#allocation4 + $0x478] sm:$0xff]
    %v2570 = vld [vmem:[#allocation4 + $0x480] sm:$0xff]
    %v2571 = vld [vmem:[#allocation4 + $0x488] sm:$0xff]
    %v2572 = vld [vmem:[#allocation4 + $0x490] sm:$0xff]
    %v2573 = vld [vmem:[#allocation4 + $0x498] sm:$0xff]
    %v2574 = vld [vmem:[#allocation4 + $0x4a0] sm:$0xff]
    %v2575 = vld [vmem:[#allocation4 + $0x4a8] sm:$0xff]
    %v2576 = vld [vmem:[#allocation4 + $0x4b0] sm:$0xff]
    %v2577 = vld [vmem:[#allocation4 + $0x4b8] sm:$0xff]
    %v2578 = vld [vmem:[#allocation4 + $0x4c0] sm:$0xff]
    %v2579 = vld [vmem:[#allocation4 + $0x4c8] sm:$0xff]
    %v2580 = vld [vmem:[#allocation4 + $0x4d0] sm:$0xff]
    %v2581 = vld [vmem:[#allocation4 + $0x4d8] sm:$0xff]
    %v2582 = vld [vmem:[#allocation4 + $0x4e0] sm:$0xff]
    %v2583 = vld [vmem:[#allocation4 + $0x4e8] sm:$0xff]
    %v2584 = vld [vmem:[#allocation4 + $0x4f0] sm:$0xff]
    %v2585 = vld [vmem:[#allocation4 + $0x4f8] sm:$0xff]
    %v2586 = vld [vmem:[#allocation4 + $0x500] sm:$0xff]
    %v2587 = vld [vmem:[#allocation4 + $0x508] sm:$0xff]
    %v2588 = vld [vmem:[#allocation4 + $0x510] sm:$0xff]
    %v2589 = vld [vmem:[#allocation4 + $0x518] sm:$0xff]
    %v2590 = vld [vmem:[#allocation4 + $0x520] sm:$0xff]
    %v2591 = vld [vmem:[#allocation4 + $0x528] sm:$0xff]
    %v2592 = vld [vmem:[#allocation4 + $0x530] sm:$0xff]
    %v2593 = vld [vmem:[#allocation4 + $0x538] sm:$0xff]
    %v2594 = vld [vmem:[#allocation4 + $0x540] sm:$0xff]
    %v2595 = vld [vmem:[#allocation4 + $0x548] sm:$0xff]
    %v2596 = vld [vmem:[#allocation4 + $0x550] sm:$0xff]
    %v2597 = vld [vmem:[#allocation4 + $0x558] sm:$0xff]
    %v2598 = vld [vmem:[#allocation4 + $0x560] sm:$0xff]
    %v2599 = vld [vmem:[#allocation4 + $0x568] sm:$0xff]
    %v2600 = vld [vmem:[#allocation4 + $0x570] sm:$0xff]
    %v2601 = vld [vmem:[#allocation4 + $0x578] sm:$0xff]
    %v2602 = vld [vmem:[#allocation4 + $0x580] sm:$0xff]
    %v2603 = vld [vmem:[#allocation4 + $0x588] sm:$0xff]
    %v2604 = vld [vmem:[#allocation4 + $0x590] sm:$0xff]
    %v2605 = vld [vmem:[#allocation4 + $0x598] sm:$0xff]
    %v2606 = vld [vmem:[#allocation4 + $0x5a0] sm:$0xff]
    %v2607 = vld [vmem:[#allocation4 + $0x5a8] sm:$0xff]
    %v2608 = vld [vmem:[#allocation4 + $0x5b0] sm:$0xff]
    %v2609 = vld [vmem:[#allocation4 + $0x5b8] sm:$0xff]
    %v2610 = vld [vmem:[#allocation4 + $0x5c0] sm:$0xff]
    %v2611 = vld [vmem:[#allocation4 + $0x5c8] sm:$0xff]
    %v2612 = vld [vmem:[#allocation4 + $0x5d0] sm:$0xff]
    %v2613 = vld [vmem:[#allocation4 + $0x5d8] sm:$0xff]
    %v2614 = vld [vmem:[#allocation4 + $0x5e0] sm:$0xff]
    %v2615 = vld [vmem:[#allocation4 + $0x5e8] sm:$0xff]
    %v2616 = vld [vmem:[#allocation4 + $0x5f0] sm:$0xff]
    %v2617 = vld [vmem:[#allocation4 + $0x5f8] sm:$0xff]
    %v2618 = vld [vmem:[#allocation4 + $0x600] sm:$0xff]
    %v2619 = vld [vmem:[#allocation4 + $0x608] sm:$0xff]
    %v2620 = vld [vmem:[#allocation4 + $0x610] sm:$0xff]
    %v2621 = vld [vmem:[#allocation4 + $0x618] sm:$0xff]
    %v2622 = vld [vmem:[#allocation4 + $0x620] sm:$0xff]
    %v2623 = vld [vmem:[#allocation4 + $0x628] sm:$0xff]
    %v2624 = vld [vmem:[#allocation4 + $0x630] sm:$0xff]
    %v2625 = vld [vmem:[#allocation4 + $0x638] sm:$0xff]
    %v2626 = vld [vmem:[#allocation4 + $0x640] sm:$0xff]
    %v2627 = vld [vmem:[#allocation4 + $0x648] sm:$0xff]
    %v2628 = vld [vmem:[#allocation4 + $0x650] sm:$0xff]
    %v2629 = vld [vmem:[#allocation4 + $0x658] sm:$0xff]
    %v2630 = vld [vmem:[#allocation4 + $0x660] sm:$0xff]
    %v2631 = vld [vmem:[#allocation4 + $0x668] sm:$0xff]
    %v2632 = vld [vmem:[#allocation4 + $0x670] sm:$0xff]
    %v2633 = vld [vmem:[#allocation4 + $0x678] sm:$0xff]
    %v2634 = vld [vmem:[#allocation4 + $0x680] sm:$0xff]
    %v2635 = vld [vmem:[#allocation4 + $0x688] sm:$0xff]
    %v2636 = vld [vmem:[#allocation4 + $0x690] sm:$0xff]
    %v2637 = vld [vmem:[#allocation4 + $0x698] sm:$0xff]
    %v2638 = vld [vmem:[#allocation4 + $0x6a0] sm:$0xff]
    %v2639 = vld [vmem:[#allocation4 + $0x6a8] sm:$0xff]
    %v2640 = vld [vmem:[#allocation4 + $0x6b0] sm:$0xff]
    %v2641 = vld [vmem:[#allocation4 + $0x6b8] sm:$0xff]
    %v2642 = vld [vmem:[#allocation4 + $0x6c0] sm:$0xff]
    %v2643 = vld [vmem:[#allocation4 + $0x6c8] sm:$0xff]
    %v2644 = vld [vmem:[#allocation4 + $0x6d0] sm:$0xff]
    %v2645 = vld [vmem:[#allocation4 + $0x6d8] sm:$0xff]
    %v2646 = vld [vmem:[#allocation4 + $0x6e0] sm:$0xff]
    %v2647 = vld [vmem:[#allocation4 + $0x6e8] sm:$0xff]
    %v2648 = vld [vmem:[#allocation4 + $0x6f0] sm:$0xff]
    %v2649 = vld [vmem:[#allocation4 + $0x6f8] sm:$0xff]
    %v2650 = vld [vmem:[#allocation4 + $0x700] sm:$0xff]
    %v2651 = vld [vmem:[#allocation4 + $0x708] sm:$0xff]
    %v2652 = vld [vmem:[#allocation4 + $0x710] sm:$0xff]
    %v2653 = vld [vmem:[#allocation4 + $0x718] sm:$0xff]
    %v2654 = vld [vmem:[#allocation4 + $0x720] sm:$0xff]
    %v2655 = vld [vmem:[#allocation4 + $0x728] sm:$0xff]
    %v2656 = vld [vmem:[#allocation4 + $0x730] sm:$0xff]
    %v2657 = vld [vmem:[#allocation4 + $0x738] sm:$0xff]
    %v2658 = vld [vmem:[#allocation4 + $0x740] sm:$0xff]
    %v2659 = vld [vmem:[#allocation4 + $0x748] sm:$0xff]
    %v2660 = vld [vmem:[#allocation4 + $0x750] sm:$0xff]
    %v2661 = vld [vmem:[#allocation4 + $0x758] sm:$0xff]
    %v2662 = vld [vmem:[#allocation4 + $0x760] sm:$0xff]
    %v2663 = vld [vmem:[#allocation4 + $0x768] sm:$0xff]
    %v2664 = vld [vmem:[#allocation4 + $0x770] sm:$0xff]
    %v2665 = vld [vmem:[#allocation4 + $0x778] sm:$0xff]
    %v2666 = vld [vmem:[#allocation4 + $0x780] sm:$0xff]
    %v2667 = vld [vmem:[#allocation4 + $0x788] sm:$0xff]
    %v2668 = vld [vmem:[#allocation4 + $0x790] sm:$0xff]
    %v2669 = vld [vmem:[#allocation4 + $0x798] sm:$0xff]
    %v2670 = vld [vmem:[#allocation4 + $0x7a0] sm:$0xff]
    %v2671 = vld [vmem:[#allocation4 + $0x7a8] sm:$0xff]
    %v2672 = vld [vmem:[#allocation4 + $0x7b0] sm:$0xff]
    %v2673 = vld [vmem:[#allocation4 + $0x7b8] sm:$0xff]
    %v2674 = vld [vmem:[#allocation4 + $0x7c0] sm:$0xff]
    %v2675 = vld [vmem:[#allocation4 + $0x7c8] sm:$0xff]
    %v2676 = vld [vmem:[#allocation4 + $0x7d0] sm:$0xff]
    %v2677 = vld [vmem:[#allocation4 + $0x7d8] sm:$0xff]
    %v2678 = vld [vmem:[#allocation4 + $0x7e0] sm:$0xff]
    %v2679 = vld [vmem:[#allocation4 + $0x7e8] sm:$0xff]
    %v2680 = vld [vmem:[#allocation4 + $0x7f0] sm:$0xff]
    %v2681 = vld [vmem:[#allocation4 + $0x7f8] sm:$0xff]
    %v2682 = vld [vmem:[#allocation4 + $0x800] sm:$0xff]
    %v2683 = vld [vmem:[#allocation4 + $0x808] sm:$0xff]
    %v2684 = vld [vmem:[#allocation4 + $0x810] sm:$0xff]
    %v2685 = vld [vmem:[#allocation4 + $0x818] sm:$0xff]
    %v2686 = vld [vmem:[#allocation4 + $0x820] sm:$0xff]
    %v2687 = vld [vmem:[#allocation4 + $0x828] sm:$0xff]
    %v2688 = vld [vmem:[#allocation4 + $0x830] sm:$0xff]
    %v2689 = vld [vmem:[#allocation4 + $0x838] sm:$0xff]
    %v2690 = vld [vmem:[#allocation4 + $0x840] sm:$0xff]
    %v2691 = vld [vmem:[#allocation4 + $0x848] sm:$0xff]
    %v2692 = vld [vmem:[#allocation4 + $0x850] sm:$0xff]
    %v2693 = vld [vmem:[#allocation4 + $0x858] sm:$0xff]
    %v2694 = vld [vmem:[#allocation4 + $0x860] sm:$0xff]
    %v2695 = vld [vmem:[#allocation4 + $0x868] sm:$0xff]
    %v2696 = vld [vmem:[#allocation4 + $0x870] sm:$0xff]
    %v2697 = vld [vmem:[#allocation4 + $0x878] sm:$0xff]
    %v2698 = vld [vmem:[#allocation4 + $0x880] sm:$0xff]
    %v2699 = vld [vmem:[#allocation4 + $0x888] sm:$0xff]
    %v2700 = vld [vmem:[#allocation4 + $0x890] sm:$0xff]
    %v2701 = vld [vmem:[#allocation4 + $0x898] sm:$0xff]
    %v2702 = vld [vmem:[#allocation4 + $0x8a0] sm:$0xff]
    %v2703 = vld [vmem:[#allocation4 + $0x8a8] sm:$0xff]
    %v2704 = vld [vmem:[#allocation4 + $0x8b0] sm:$0xff]
    %v2705 = vld [vmem:[#allocation4 + $0x8b8] sm:$0xff]
    %v2706 = vld [vmem:[#allocation4 + $0x8c0] sm:$0xff]
    %v2707 = vld [vmem:[#allocation4 + $0x8c8] sm:$0xff]
    %v2708 = vld [vmem:[#allocation4 + $0x8d0] sm:$0xff]
    %v2709 = vld [vmem:[#allocation4 + $0x8d8] sm:$0xff]
    %v2710 = vld [vmem:[#allocation4 + $0x8e0] sm:$0xff]
    %v2711 = vld [vmem:[#allocation4 + $0x8e8] sm:$0xff]
    %v2712 = vld [vmem:[#allocation4 + $0x8f0] sm:$0xff]
    %v2713 = vld [vmem:[#allocation4 + $0x8f8] sm:$0xff]
    %2714 = vmatprep.subr.bf16.mxu0 %v2427
    %2715 = vmatpush1.bf16.msra.mxu0 %v2426
    %2716 = vmatprep.subr.bf16.mxu0 %v2429
    %2717 = vmatpush1.bf16.msra.mxu0 %v2428
    %2718 = vmatprep.subr.bf16.mxu0 %v2431
    %2719 = vmatpush1.bf16.msra.mxu0 %v2430
    %2720 = vmatprep.subr.bf16.mxu0 %v2433
    %2721 = vmatpush1.bf16.msra.mxu0 %v2432
    %2722 = vmatprep.subr.bf16.mxu0 %v2435
    %2723 = vmatpush1.bf16.msra.mxu0 %v2434
    %2724 = vmatprep.subr.bf16.mxu0 %v2437
    %2725 = vmatpush1.bf16.msra.mxu0 %v2436
    %2726 = vmatprep.subr.bf16.mxu0 %v2439
    %2727 = vmatpush1.bf16.msra.mxu0 %v2438
    %2728 = vmatprep.subr.bf16.mxu0 %v2441
    %2729 = vmatpush1.bf16.msra.mxu0 %v2440
    %2730 = vmatprep.subr.bf16.mxu0 %v2443
    %2731 = vmatpush1.bf16.msra.mxu0 %v2442
    %2732 = vmatprep.subr.bf16.mxu0 %v2445
    %2733 = vmatpush1.bf16.msra.mxu0 %v2444
    %2734 = vmatprep.subr.bf16.mxu0 %v2447
    %2735 = vmatpush1.bf16.msra.mxu0 %v2446
    %2736 = vmatprep.subr.bf16.mxu0 %v2449
    %2737 = vmatpush1.bf16.msra.mxu0 %v2448
    %2738 = vmatprep.subr.bf16.mxu0 %v2451
    %2739 = vmatpush1.bf16.msra.mxu0 %v2450
    %2740 = vmatprep.subr.bf16.mxu0 %v2453
    %2741 = vmatpush1.bf16.msra.mxu0 %v2452
    %2742 = vmatprep.subr.bf16.mxu0 %v2455
    %2743 = vmatpush1.bf16.msra.mxu0 %v2454
    %2744 = vmatprep.subr.bf16.mxu0 %v2457
    %2745 = vmatpush1.bf16.msra.mxu0 %v2456
    %2746 = vmatprep.mubr.bf16.mxu0 %v2409
    %2747 = vmatmul.mubr.bf16.gmra.mrb[0].mxu0 %v2408
    %v2748 = vpop.f32.mrb[0].mxu0
    %v2749 = vadd.f32 0.0, %v2748
    %v2750 = vpop.f32.mrb[0].mxu0
    %v2751 = vadd.f32 0.0, %v2750
    %v2752 = vpop.f32.mrb[0].mxu0
    %v2753 = vpop.f32.mrb[0].mxu0
    %2754 = vdwg.mxu0
    %2755 = vmatprep.subr.bf16.mxu0 %v2459
    %2756 = vmatpush1.bf16.msra.mxu0 %v2458
    %2757 = vmatprep.subr.bf16.mxu0 %v2461
    %2758 = vmatpush1.bf16.msra.mxu0 %v2460
    %2759 = vmatprep.subr.bf16.mxu0 %v2463
    %2760 = vmatpush1.bf16.msra.mxu0 %v2462
    %2761 = vmatprep.subr.bf16.mxu0 %v2465
    %2762 = vmatpush1.bf16.msra.mxu0 %v2464
    %2763 = vmatprep.subr.bf16.mxu0 %v2467
    %2764 = vmatpush1.bf16.msra.mxu0 %v2466
    %2765 = vmatprep.subr.bf16.mxu0 %v2469
    %2766 = vmatpush1.bf16.msra.mxu0 %v2468
    %2767 = vmatprep.subr.bf16.mxu0 %v2471
    %2768 = vmatpush1.bf16.msra.mxu0 %v2470
    %2769 = vmatprep.subr.bf16.mxu0 %v2473
    %2770 = vmatpush1.bf16.msra.mxu0 %v2472
    %2771 = vmatprep.subr.bf16.mxu0 %v2475
    %2772 = vmatpush1.bf16.msra.mxu0 %v2474
    %2773 = vmatprep.subr.bf16.mxu0 %v2477
    %2774 = vmatpush1.bf16.msra.mxu0 %v2476
    %2775 = vmatprep.subr.bf16.mxu0 %v2479
    %2776 = vmatpush1.bf16.msra.mxu0 %v2478
    %2777 = vmatprep.subr.bf16.mxu0 %v2481
    %2778 = vmatpush1.bf16.msra.mxu0 %v2480
    %2779 = vmatprep.subr.bf16.mxu0 %v2483
    %2780 = vmatpush1.bf16.msra.mxu0 %v2482
    %2781 = vmatprep.subr.bf16.mxu0 %v2485
    %2782 = vmatpush1.bf16.msra.mxu0 %v2484
    %2783 = vmatprep.subr.bf16.mxu0 %v2487
    %2784 = vmatpush1.bf16.msra.mxu0 %v2486
    %2785 = vmatprep.subr.bf16.mxu0 %v2489
    %2786 = vmatpush1.bf16.msra.mxu0 %v2488
    %2787 = vmatprep.mubr.bf16.mxu0 %v2411
    %2788 = vmatmul.mubr.bf16.gmra.mrb[0].mxu0 %v2410
    %v2789 = vpop.f32.mrb[0].mxu0
    %v2790 = vadd.f32 %v2749, %v2789
    %v2791 = vpop.f32.mrb[0].mxu0
    %v2792 = vadd.f32 %v2751, %v2791
    %v2793 = vpop.f32.mrb[0].mxu0
    %v2794 = vpop.f32.mrb[0].mxu0
    %2795 = vdwg.mxu0
    %2796 = vmatprep.subr.bf16.mxu0 %v2491
    %2797 = vmatpush1.bf16.msra.mxu0 %v2490
    %2798 = vmatprep.subr.bf16.mxu0 %v2493
    %2799 = vmatpush1.bf16.msra.mxu0 %v2492
    %2800 = vmatprep.subr.bf16.mxu0 %v2495
    %2801 = vmatpush1.bf16.msra.mxu0 %v2494
    %2802 = vmatprep.subr.bf16.mxu0 %v2497
    %2803 = vmatpush1.bf16.msra.mxu0 %v2496
    %2804 = vmatprep.subr.bf16.mxu0 %v2499
    %2805 = vmatpush1.bf16.msra.mxu0 %v2498
    %2806 = vmatprep.subr.bf16.mxu0 %v2501
    %2807 = vmatpush1.bf16.msra.mxu0 %v2500
    %2808 = vmatprep.subr.bf16.mxu0 %v2503
    %2809 = vmatpush1.bf16.msra.mxu0 %v2502
    %2810 = vmatprep.subr.bf16.mxu0 %v2505
    %2811 = vmatpush1.bf16.msra.mxu0 %v2504
    %2812 = vmatprep.subr.bf16.mxu0 %v2507
    %2813 = vmatpush1.bf16.msra.mxu0 %v2506
    %2814 = vmatprep.subr.bf16.mxu0 %v2509
    %2815 = vmatpush1.bf16.msra.mxu0 %v2508
    %2816 = vmatprep.subr.bf16.mxu0 %v2511
    %2817 = vmatpush1.bf16.msra.mxu0 %v2510
    %2818 = vmatprep.subr.bf16.mxu0 %v2513
    %2819 = vmatpush1.bf16.msra.mxu0 %v2512
    %2820 = vmatprep.subr.bf16.mxu0 %v2515
    %2821 = vmatpush1.bf16.msra.mxu0 %v2514
    %2822 = vmatprep.subr.bf16.mxu0 %v2517
    %2823 = vmatpush1.bf16.msra.mxu0 %v2516
    %2824 = vmatprep.subr.bf16.mxu0 %v2519
    %2825 = vmatpush1.bf16.msra.mxu0 %v2518
    %2826 = vmatprep.subr.bf16.mxu0 %v2521
    %2827 = vmatpush1.bf16.msra.mxu0 %v2520
    %2828 = vmatprep.mubr.bf16.mxu0 %v2413
    %2829 = vmatmul.mubr.bf16.gmra.mrb[0].mxu0 %v2412
    %v2830 = vpop.f32.mrb[0].mxu0
    %v2831 = vadd.f32 %v2790, %v2830
    %v2832 = vpop.f32.mrb[0].mxu0
    %v2833 = vadd.f32 %v2792, %v2832
    %v2834 = vpop.f32.mrb[0].mxu0
    %v2835 = vpop.f32.mrb[0].mxu0
    %2836 = vdwg.mxu0
    %2837 = vmatprep.subr.bf16.mxu0 %v2523
    %2838 = vmatpush1.bf16.msra.mxu0 %v2522
    %2839 = vmatprep.subr.bf16.mxu0 %v2525
    %2840 = vmatpush1.bf16.msra.mxu0 %v2524
    %2841 = vmatprep.subr.bf16.mxu0 %v2527
    %2842 = vmatpush1.bf16.msra.mxu0 %v2526
    %2843 = vmatprep.subr.bf16.mxu0 %v2529
    %2844 = vmatpush1.bf16.msra.mxu0 %v2528
    %2845 = vmatprep.subr.bf16.mxu0 %v2531
    %2846 = vmatpush1.bf16.msra.mxu0 %v2530
    %2847 = vmatprep.subr.bf16.mxu0 %v2533
    %2848 = vmatpush1.bf16.msra.mxu0 %v2532
    %2849 = vmatprep.subr.bf16.mxu0 %v2535
    %2850 = vmatpush1.bf16.msra.mxu0 %v2534
    %2851 = vmatprep.subr.bf16.mxu0 %v2537
    %2852 = vmatpush1.bf16.msra.mxu0 %v2536
    %2853 = vmatprep.subr.bf16.mxu0 %v2539
    %2854 = vmatpush1.bf16.msra.mxu0 %v2538
    %2855 = vmatprep.subr.bf16.mxu0 %v2541
    %2856 = vmatpush1.bf16.msra.mxu0 %v2540
    %2857 = vmatprep.subr.bf16.mxu0 %v2543
    %2858 = vmatpush1.bf16.msra.mxu0 %v2542
    %2859 = vmatprep.subr.bf16.mxu0 %v2545
    %2860 = vmatpush1.bf16.msra.mxu0 %v2544
    %2861 = vmatprep.subr.bf16.mxu0 %v2547
    %2862 = vmatpush1.bf16.msra.mxu0 %v2546
    %2863 = vmatprep.subr.bf16.mxu0 %v2549
    %2864 = vmatpush1.bf16.msra.mxu0 %v2548
    %2865 = vmatprep.subr.bf16.mxu0 %v2551
    %2866 = vmatpush1.bf16.msra.mxu0 %v2550
    %2867 = vmatprep.subr.bf16.mxu0 %v2553
    %2868 = vmatpush1.bf16.msra.mxu0 %v2552
    %2869 = vmatprep.mubr.bf16.mxu0 %v2415
    %2870 = vmatmul.mubr.bf16.gmra.mrb[0].mxu0 %v2414
    %v2871 = vpop.f32.mrb[0].mxu0
    %v2872 = vadd.f32 %v2831, %v2871
    %v2873 = vpop.f32.mrb[0].mxu0
    %v2874 = vadd.f32 %v2833, %v2873
    %v2875 = vpop.f32.mrb[0].mxu0
    %v2876 = vpop.f32.mrb[0].mxu0
    %2877 = vdwg.mxu0
    %2878 = vmatprep.subr.bf16.mxu0 %v2555
    %2879 = vmatpush1.bf16.msra.mxu0 %v2554
    %2880 = vmatprep.subr.bf16.mxu0 %v2557
    %2881 = vmatpush1.bf16.msra.mxu0 %v2556
    %2882 = vmatprep.subr.bf16.mxu0 %v2559
    %2883 = vmatpush1.bf16.msra.mxu0 %v2558
    %2884 = vmatprep.subr.bf16.mxu0 %v2561
    %2885 = vmatpush1.bf16.msra.mxu0 %v2560
    %2886 = vmatprep.subr.bf16.mxu0 %v2563
    %2887 = vmatpush1.bf16.msra.mxu0 %v2562
    %2888 = vmatprep.subr.bf16.mxu0 %v2565
    %2889 = vmatpush1.bf16.msra.mxu0 %v2564
    %2890 = vmatprep.subr.bf16.mxu0 %v2567
    %2891 = vmatpush1.bf16.msra.mxu0 %v2566
    %2892 = vmatprep.subr.bf16.mxu0 %v2569
    %2893 = vmatpush1.bf16.msra.mxu0 %v2568
    %2894 = vmatprep.subr.bf16.mxu0 %v2571
    %2895 = vmatpush1.bf16.msra.mxu0 %v2570
    %2896 = vmatprep.subr.bf16.mxu0 %v2573
    %2897 = vmatpush1.bf16.msra.mxu0 %v2572
    %2898 = vmatprep.subr.bf16.mxu0 %v2575
    %2899 = vmatpush1.bf16.msra.mxu0 %v2574
    %2900 = vmatprep.subr.bf16.mxu0 %v2577
    %2901 = vmatpush1.bf16.msra.mxu0 %v2576
    %2902 = vmatprep.subr.bf16.mxu0 %v2579
    %2903 = vmatpush1.bf16.msra.mxu0 %v2578
    %2904 = vmatprep.subr.bf16.mxu0 %v2581
    %2905 = vmatpush1.bf16.msra.mxu0 %v2580
    %2906 = vmatprep.subr.bf16.mxu0 %v2583
    %2907 = vmatpush1.bf16.msra.mxu0 %v2582
    %2908 = vmatprep.subr.bf16.mxu0 %v2585
    %2909 = vmatpush1.bf16.msra.mxu0 %v2584
    %2910 = vmatprep.mubr.bf16.mxu0 %v2417
    %2911 = vmatmul.mubr.bf16.gmra.mrb[0].mxu0 %v2416
    %v2912 = vpop.f32.mrb[0].mxu0
    %v2913 = vadd.f32 %v2872, %v2912
    %v2914 = vpop.f32.mrb[0].mxu0
    %v2915 = vadd.f32 %v2874, %v2914
    %v2916 = vpop.f32.mrb[0].mxu0
    %v2917 = vpop.f32.mrb[0].mxu0
    %2918 = vdwg.mxu0
    %2919 = vmatprep.subr.bf16.mxu0 %v2587
    %2920 = vmatpush1.bf16.msra.mxu0 %v2586
    %2921 = vmatprep.subr.bf16.mxu0 %v2589
    %2922 = vmatpush1.bf16.msra.mxu0 %v2588
    %2923 = vmatprep.subr.bf16.mxu0 %v2591
    %2924 = vmatpush1.bf16.msra.mxu0 %v2590
    %2925 = vmatprep.subr.bf16.mxu0 %v2593
    %2926 = vmatpush1.bf16.msra.mxu0 %v2592
    %2927 = vmatprep.subr.bf16.mxu0 %v2595
    %2928 = vmatpush1.bf16.msra.mxu0 %v2594
    %2929 = vmatprep.subr.bf16.mxu0 %v2597
    %2930 = vmatpush1.bf16.msra.mxu0 %v2596
    %2931 = vmatprep.subr.bf16.mxu0 %v2599
    %2932 = vmatpush1.bf16.msra.mxu0 %v2598
    %2933 = vmatprep.subr.bf16.mxu0 %v2601
    %2934 = vmatpush1.bf16.msra.mxu0 %v2600
    %2935 = vmatprep.subr.bf16.mxu0 %v2603
    %2936 = vmatpush1.bf16.msra.mxu0 %v2602
    %2937 = vmatprep.subr.bf16.mxu0 %v2605
    %2938 = vmatpush1.bf16.msra.mxu0 %v2604
    %2939 = vmatprep.subr.bf16.mxu0 %v2607
    %2940 = vmatpush1.bf16.msra.mxu0 %v2606
    %2941 = vmatprep.subr.bf16.mxu0 %v2609
    %2942 = vmatpush1.bf16.msra.mxu0 %v2608
    %2943 = vmatprep.subr.bf16.mxu0 %v2611
    %2944 = vmatpush1.bf16.msra.mxu0 %v2610
    %2945 = vmatprep.subr.bf16.mxu0 %v2613
    %2946 = vmatpush1.bf16.msra.mxu0 %v2612
    %2947 = vmatprep.subr.bf16.mxu0 %v2615
    %2948 = vmatpush1.bf16.msra.mxu0 %v2614
    %2949 = vmatprep.subr.bf16.mxu0 %v2617
    %2950 = vmatpush1.bf16.msra.mxu0 %v2616
    %2951 = vmatprep.mubr.bf16.mxu0 %v2419
    %2952 = vmatmul.mubr.bf16.gmra.mrb[0].mxu0 %v2418
    %v2953 = vpop.f32.mrb[0].mxu0
    %v2954 = vadd.f32 %v2913, %v2953
    %v2955 = vpop.f32.mrb[0].mxu0
    %v2956 = vadd.f32 %v2915, %v2955
    %v2957 = vpop.f32.mrb[0].mxu0
    %v2958 = vpop.f32.mrb[0].mxu0
    %2959 = vdwg.mxu0
    %2960 = vmatprep.subr.bf16.mxu0 %v2619
    %2961 = vmatpush1.bf16.msra.mxu0 %v2618
    %2962 = vmatprep.subr.bf16.mxu0 %v2621
    %2963 = vmatpush1.bf16.msra.mxu0 %v2620
    %2964 = vmatprep.subr.bf16.mxu0 %v2623
    %2965 = vmatpush1.bf16.msra.mxu0 %v2622
    %2966 = vmatprep.subr.bf16.mxu0 %v2625
    %2967 = vmatpush1.bf16.msra.mxu0 %v2624
    %2968 = vmatprep.subr.bf16.mxu0 %v2627
    %2969 = vmatpush1.bf16.msra.mxu0 %v2626
    %2970 = vmatprep.subr.bf16.mxu0 %v2629
    %2971 = vmatpush1.bf16.msra.mxu0 %v2628
    %2972 = vmatprep.subr.bf16.mxu0 %v2631
    %2973 = vmatpush1.bf16.msra.mxu0 %v2630
    %2974 = vmatprep.subr.bf16.mxu0 %v2633
    %2975 = vmatpush1.bf16.msra.mxu0 %v2632
    %2976 = vmatprep.subr.bf16.mxu0 %v2635
    %2977 = vmatpush1.bf16.msra.mxu0 %v2634
    %2978 = vmatprep.subr.bf16.mxu0 %v2637
    %2979 = vmatpush1.bf16.msra.mxu0 %v2636
    %2980 = vmatprep.subr.bf16.mxu0 %v2639
    %2981 = vmatpush1.bf16.msra.mxu0 %v2638
    %2982 = vmatprep.subr.bf16.mxu0 %v2641
    %2983 = vmatpush1.bf16.msra.mxu0 %v2640
    %2984 = vmatprep.subr.bf16.mxu0 %v2643
    %2985 = vmatpush1.bf16.msra.mxu0 %v2642
    %2986 = vmatprep.subr.bf16.mxu0 %v2645
    %2987 = vmatpush1.bf16.msra.mxu0 %v2644
    %2988 = vmatprep.subr.bf16.mxu0 %v2647
    %2989 = vmatpush1.bf16.msra.mxu0 %v2646
    %2990 = vmatprep.subr.bf16.mxu0 %v2649
    %2991 = vmatpush1.bf16.msra.mxu0 %v2648
    %2992 = vmatprep.mubr.bf16.mxu0 %v2421
    %2993 = vmatmul.mubr.bf16.gmra.mrb[0].mxu0 %v2420
    %v2994 = vpop.f32.mrb[0].mxu0
    %v2995 = vadd.f32 %v2954, %v2994
    %v2996 = vpop.f32.mrb[0].mxu0
    %v2997 = vadd.f32 %v2956, %v2996
    %v2998 = vpop.f32.mrb[0].mxu0
    %v2999 = vpop.f32.mrb[0].mxu0
    %3000 = vdwg.mxu0
    %3001 = vmatprep.subr.bf16.mxu0 %v2651
    %3002 = vmatpush1.bf16.msra.mxu0 %v2650
    %3003 = vmatprep.subr.bf16.mxu0 %v2653
    %3004 = vmatpush1.bf16.msra.mxu0 %v2652
    %3005 = vmatprep.subr.bf16.mxu0 %v2655
    %3006 = vmatpush1.bf16.msra.mxu0 %v2654
    %3007 = vmatprep.subr.bf16.mxu0 %v2657
    %3008 = vmatpush1.bf16.msra.mxu0 %v2656
    %3009 = vmatprep.subr.bf16.mxu0 %v2659
    %3010 = vmatpush1.bf16.msra.mxu0 %v2658
    %3011 = vmatprep.subr.bf16.mxu0 %v2661
    %3012 = vmatpush1.bf16.msra.mxu0 %v2660
    %3013 = vmatprep.subr.bf16.mxu0 %v2663
    %3014 = vmatpush1.bf16.msra.mxu0 %v2662
    %3015 = vmatprep.subr.bf16.mxu0 %v2665
    %3016 = vmatpush1.bf16.msra.mxu0 %v2664
    %3017 = vmatprep.subr.bf16.mxu0 %v2667
    %3018 = vmatpush1.bf16.msra.mxu0 %v2666
    %3019 = vmatprep.subr.bf16.mxu0 %v2669
    %3020 = vmatpush1.bf16.msra.mxu0 %v2668
    %3021 = vmatprep.subr.bf16.mxu0 %v2671
    %3022 = vmatpush1.bf16.msra.mxu0 %v2670
    %3023 = vmatprep.subr.bf16.mxu0 %v2673
    %3024 = vmatpush1.bf16.msra.mxu0 %v2672
    %3025 = vmatprep.subr.bf16.mxu0 %v2675
    %3026 = vmatpush1.bf16.msra.mxu0 %v2674
    %3027 = vmatprep.subr.bf16.mxu0 %v2677
    %3028 = vmatpush1.bf16.msra.mxu0 %v2676
    %3029 = vmatprep.subr.bf16.mxu0 %v2679
    %3030 = vmatpush1.bf16.msra.mxu0 %v2678
    %3031 = vmatprep.subr.bf16.mxu0 %v2681
    %3032 = vmatpush1.bf16.msra.mxu0 %v2680
    %3033 = vmatprep.mubr.bf16.mxu0 %v2423
    %3034 = vmatmul.mubr.bf16.gmra.mrb[0].mxu0 %v2422
    %v3035 = vpop.f32.mrb[0].mxu0
    %v3036 = vadd.f32 %v2995, %v3035
    %v3037 = vpop.f32.mrb[0].mxu0
    %v3038 = vadd.f32 %v2997, %v3037
    %v3039 = vpop.f32.mrb[0].mxu0
    %v3040 = vpop.f32.mrb[0].mxu0
    %3041 = vdwg.mxu0
    %3042 = vmatprep.subr.bf16.mxu0 %v2683
    %3043 = vmatpush1.bf16.msra.mxu0 %v2682
    %3044 = vmatprep.subr.bf16.mxu0 %v2685
    %3045 = vmatpush1.bf16.msra.mxu0 %v2684
    %3046 = vmatprep.subr.bf16.mxu0 %v2687
    %3047 = vmatpush1.bf16.msra.mxu0 %v2686
    %3048 = vmatprep.subr.bf16.mxu0 %v2689
    %3049 = vmatpush1.bf16.msra.mxu0 %v2688
    %3050 = vmatprep.subr.bf16.mxu0 %v2691
    %3051 = vmatpush1.bf16.msra.mxu0 %v2690
    %3052 = vmatprep.subr.bf16.mxu0 %v2693
    %3053 = vmatpush1.bf16.msra.mxu0 %v2692
    %3054 = vmatprep.subr.bf16.mxu0 %v2695
    %3055 = vmatpush1.bf16.msra.mxu0 %v2694
    %3056 = vmatprep.subr.bf16.mxu0 %v2697
    %3057 = vmatpush1.bf16.msra.mxu0 %v2696
    %3058 = vmatprep.subr.bf16.mxu0 %v2699
    %3059 = vmatpush1.bf16.msra.mxu0 %v2698
    %3060 = vmatprep.subr.bf16.mxu0 %v2701
    %3061 = vmatpush1.bf16.msra.mxu0 %v2700
    %3062 = vmatprep.subr.bf16.mxu0 %v2703
    %3063 = vmatpush1.bf16.msra.mxu0 %v2702
    %3064 = vmatprep.subr.bf16.mxu0 %v2705
    %3065 = vmatpush1.bf16.msra.mxu0 %v2704
    %3066 = vmatprep.subr.bf16.mxu0 %v2707
    %3067 = vmatpush1.bf16.msra.mxu0 %v2706
    %3068 = vmatprep.subr.bf16.mxu0 %v2709
    %3069 = vmatpush1.bf16.msra.mxu0 %v2708
    %3070 = vmatprep.subr.bf16.mxu0 %v2711
    %3071 = vmatpush1.bf16.msra.mxu0 %v2710
    %3072 = vmatprep.subr.bf16.mxu0 %v2713
    %3073 = vmatpush1.bf16.msra.mxu0 %v2712
    %3074 = vmatprep.mubr.bf16.mxu0 %v2425
    %3075 = vmatmul.mubr.bf16.gmra.mrb[0].mxu0 %v2424
    %v3076 = vpop.f32.mrb[0].mxu0
    %v3077 = vadd.f32 %v3036, %v3076
    %v3078 = vpop.f32.mrb[0].mxu0
    %v3079 = vadd.f32 %v3038, %v3078
    %v3080 = vpop.f32.mrb[0].mxu0
    %v3081 = vpop.f32.mrb[0].mxu0
    %3082 = vdwg.mxu0
    %v3083 = vrot.slane %v3077, 4
    %v3084 = vadd.f32 %v3077, %v3083
    %v3085 = vrot.slane %v3084, 2
    %v3086 = vadd.f32 %v3084, %v3085
    %v3087 = vrot.slane %v3086, 1
    %v3088 = vadd.f32 %v3086, %v3087
    %v3089 = vrot.slane %v3079, 4
    %v3090 = vadd.f32 %v3079, %v3089
    %v3091 = vrot.slane %v3090, 2
    %v3092 = vadd.f32 %v3090, %v3091
    %v3093 = vrot.slane %v3092, 1
    %v3094 = vadd.f32 %v3092, %v3093
    %v3095 = vrcp.pop 8.0
    %v3096 = vmul.f32 %v3088, %v3095
    %v3097 = vmul.f32 %v3094, %v3095
    %v3098 = vsub.f32 %v3077, %v3096
    %v3099 = vsub.f32 %v3079, %v3097
    %v3100 = vmul.f32 %v3098, %v3098
    %v3101 = vmul.f32 %v3099, %v3099
    %v3102 = vrot.slane %v3100, 4
    %v3103 = vadd.f32 %v3100, %v3102
    %v3104 = vrot.slane %v3103, 2
    %v3105 = vadd.f32 %v3103, %v3104
    %v3106 = vrot.slane %v3105, 1
    %v3107 = vadd.f32 %v3105, %v3106
    %v3108 = vrot.slane %v3101, 4
    %v3109 = vadd.f32 %v3101, %v3108
    %v3110 = vrot.slane %v3109, 2
    %v3111 = vadd.f32 %v3109, %v3110
    %v3112 = vrot.slane %v3111, 1
    %v3113 = vadd.f32 %v3111, %v3112
    %v3114 = vmul.f32 %v3107, %v3095
    %v3115 = vmul.f32 %v3113, %v3095
    %v3116 = vld [vmem:[#allocation6] sm:$0x3]
    %v3118 = vlaneseq
    %v3119 = vshrl.u32 %v3118, 7
    %v3120 = vsub.s32 0, %v3119
    %v3121 = vrot.slane %v3116, %v3120
    %v3122 = vlaneseq
    %v3123 = vshrl.u32 %v3122, 7
    %v3124 = vsub.s32 1, %v3123
    %v3125 = vrot.slane %v3116, %v3124
    %v3128 = vmul.f32 %v3121, %v3098
    %v3129 = vmul.f32 %v3125, %v3099
    %v3130 = vadd.f32 %v3114, 1e-05
    %v3131 = vadd.f32 %v3115, 1e-05
    %v3132 = vrsqrt.pop %v3130
    %v3133 = vrsqrt.pop %v3131
    %v3134 = vmul.f32 %v3128, %v3132
    %v3135 = vmul.f32 %v3129, %v3133
    %v3136 = vld [vmem:[#allocation9] sm:$0x3]
    %v3138 = vlaneseq
    %v3139 = vshrl.u32 %v3138, 7
    %v3140 = vsub.s32 0, %v3139
    %v3141 = vrot.slane %v3136, %v3140
    %v3142 = vlaneseq
    %v3143 = vshrl.u32 %v3142, 7
    %v3144 = vsub.s32 1, %v3143
    %v3145 = vrot.slane %v3136, %v3144
    %v3148 = vadd.f32 %v3134, %v3141
    %v3149 = vadd.f32 %v3135, %v3145
    %v3150 = vmax.f32 %v3148, 0.0
    %v3151 = vmax.f32 %v3149, 0.0
    %v3154 = vcombine.low %v3150, %v3151
    %v3155 = vcombine.high %v3150, %v3151
    %v3157 = vunpack.c.l.s4 1983009808
    %v3158 = vunpack.c.0.s8 %v3157
    %v3159 = vlaneseq
    %v3160 = vshrl.u32 %v3159, 7
    %v3161 = vsub.s32 %v3158, %v3160
    %v3162 = vrot.slane %v3154, %v3161
    %v3164 = vunpack.c.l.s4 1983009808
    %v3165 = vunpack.c.0.s8 %v3164
    %v3166 = vlaneseq
    %v3167 = vshrl.u32 %v3166, 7
    %v3168 = vsub.s32 %v3165, %v3167
    %v3169 = vrot.slane %v3155, %v3168
    %v3170 = vcombine.high %v3162, %v3162
    %v3171 = vcombine.high %v3169, %v3169
    %v3173 = vunpack.c.l.s4 1983009808
    %v3174 = vunpack.c.0.s8 %v3173
    %v3175 = vlaneseq
    %v3176 = vshrl.u32 %v3175, 7
    %v3177 = vsub.s32 %v3174, %v3176
    %v3178 = vrot.slane %v3162, %v3177
    %v3179 = vcombine.high %v3178, %v3178
    %v3181 = vunpack.c.l.s4 1983009808
    %v3182 = vunpack.c.0.s8 %v3181
    %v3183 = vlaneseq
    %v3184 = vshrl.u32 %v3183, 7
    %v3185 = vsub.s32 %v3182, %v3184
    %v3186 = vrot.slane %v3170, %v3185
    %v3187 = vcombine.high %v3186, %v3186
    %v3189 = vunpack.c.l.s4 1983009808
    %v3190 = vunpack.c.0.s8 %v3189
    %v3191 = vlaneseq
    %v3192 = vshrl.u32 %v3191, 7
    %v3193 = vsub.s32 %v3190, %v3192
    %v3194 = vrot.slane %v3169, %v3193
    %v3195 = vcombine.high %v3194, %v3194
    %v3197 = vunpack.c.l.s4 1983009808
    %v3198 = vunpack.c.0.s8 %v3197
    %v3199 = vlaneseq
    %v3200 = vshrl.u32 %v3199, 7
    %v3201 = vsub.s32 %v3198, %v3200
    %v3202 = vrot.slane %v3171, %v3201
    %v3203 = vcombine.high %v3202, %v3202
    %v3212 = vsel %vm921, %v3178, 0.0
    %v3213 = vsel %vm921, %v3186, 0.0
    %v3214 = vadd.f32 %v3212, %v3213
    %v3215 = vsel %vm921, %v3194, 0.0
    %v3216 = vadd.f32 %v3214, %v3215
    %v3217 = vsel %vm921, %v3202, 0.0
    %v3218 = vadd.f32 %v3216, %v3217
    %v3219 = vsel %vm921, %v3179, 0.0
    %v3220 = vsel %vm921, %v3187, 0.0
    %v3221 = vadd.f32 %v3219, %v3220
    %v3222 = vsel %vm921, %v3195, 0.0
    %v3223 = vadd.f32 %v3221, %v3222
    %v3224 = vsel %vm921, %v3203, 0.0
    %v3225 = vadd.f32 %v3223, %v3224
    %v3226 = vrcp.pop 4.0
    %v3227 = vmul.f32 %v3218, %v3226
    %v3228 = vmul.f32 %v3225, %v3226
    %v3229 = vpack.c.bf16 %v3227, %v3227
    %v3230 = vpack.c.bf16 %v3228, %v3228
    %v3231 = vld [vmem:[#allocation11] sm:$0xf]
    %v3232 = vld [vmem:[#allocation11 + $0x4] sm:$0xf]
    %v3233 = vld [vmem:[#allocation11 + $0x8] sm:$0xf]
    %v3234 = vld [vmem:[#allocation11 + $0xc] sm:$0xf]
    %v3235 = vld [vmem:[#allocation11 + $0x10] sm:$0xf]
    %v3236 = vld [vmem:[#allocation11 + $0x14] sm:$0xf]
    %v3237 = vld [vmem:[#allocation11 + $0x18] sm:$0xf]
    %v3238 = vld [vmem:[#allocation11 + $0x1c] sm:$0xf]
    %v3239 = vld [vmem:[#allocation11 + $0x20] sm:$0xf]
    %v3240 = vld [vmem:[#allocation11 + $0x24] sm:$0xf]
    %v3241 = vld [vmem:[#allocation11 + $0x28] sm:$0xf]
    %v3242 = vld [vmem:[#allocation11 + $0x2c] sm:$0xf]
    %v3243 = vld [vmem:[#allocation11 + $0x30] sm:$0xf]
    %v3244 = vld [vmem:[#allocation11 + $0x34] sm:$0xf]
    %v3245 = vld [vmem:[#allocation11 + $0x38] sm:$0xf]
    %v3246 = vld [vmem:[#allocation11 + $0x3c] sm:$0xf]
    %v3247 = vld [vmem:[#allocation11 + $0x40] sm:$0xf]
    %v3248 = vld [vmem:[#allocation11 + $0x44] sm:$0xf]
    %v3249 = vld [vmem:[#allocation11 + $0x48] sm:$0xf]
    %v3250 = vld [vmem:[#allocation11 + $0x4c] sm:$0xf]
    %v3251 = vld [vmem:[#allocation11 + $0x50] sm:$0xf]
    %v3252 = vld [vmem:[#allocation11 + $0x54] sm:$0xf]
    %v3253 = vld [vmem:[#allocation11 + $0x58] sm:$0xf]
    %v3254 = vld [vmem:[#allocation11 + $0x5c] sm:$0xf]
    %v3255 = vld [vmem:[#allocation11 + $0x60] sm:$0xf]
    %v3256 = vld [vmem:[#allocation11 + $0x64] sm:$0xf]
    %v3257 = vld [vmem:[#allocation11 + $0x68] sm:$0xf]
    %v3258 = vld [vmem:[#allocation11 + $0x6c] sm:$0xf]
    %v3259 = vld [vmem:[#allocation11 + $0x70] sm:$0xf]
    %v3260 = vld [vmem:[#allocation11 + $0x74] sm:$0xf]
    %v3261 = vld [vmem:[#allocation11 + $0x78] sm:$0xf]
    %v3262 = vld [vmem:[#allocation11 + $0x7c] sm:$0xf]
    %v3263 = vld [vmem:[#allocation12] sm:$0x1]
    %v3265 = vlaneseq
    %v3266 = vshrl.u32 %v3265, 7
    %v3267 = vsub.s32 0, %v3266
    %v3268 = vrot.slane %v3263, %v3267
    %v3302 = vunpack.c.l.b16 %v3231
    %v3303 = vunpack.c.l.b16 %v3232
    %v3304 = vunpack.c.l.b16 %v3233
    %v3305 = vunpack.c.l.b16 %v3234
    %v3306 = vunpack.c.l.b16 %v3235
    %v3307 = vunpack.c.l.b16 %v3236
    %v3308 = vunpack.c.l.b16 %v3237
    %v3309 = vunpack.c.l.b16 %v3238
    %v3310 = vunpack.c.l.b16 %v3239
    %v3311 = vunpack.c.l.b16 %v3240
    %v3312 = vunpack.c.l.b16 %v3241
    %v3313 = vunpack.c.l.b16 %v3242
    %v3314 = vunpack.c.l.b16 %v3243
    %v3315 = vunpack.c.l.b16 %v3244
    %v3316 = vunpack.c.l.b16 %v3245
    %v3317 = vunpack.c.l.b16 %v3246
    %v3318 = vunpack.c.l.b16 %v3247
    %v3319 = vunpack.c.l.b16 %v3248
    %v3320 = vunpack.c.l.b16 %v3249
    %v3321 = vunpack.c.l.b16 %v3250
    %v3322 = vunpack.c.l.b16 %v3251
    %v3323 = vunpack.c.l.b16 %v3252
    %v3324 = vunpack.c.l.b16 %v3253
    %v3325 = vunpack.c.l.b16 %v3254
    %v3326 = vunpack.c.l.b16 %v3255
    %v3327 = vunpack.c.l.b16 %v3256
    %v3328 = vunpack.c.l.b16 %v3257
    %v3329 = vunpack.c.l.b16 %v3258
    %v3330 = vunpack.c.l.b16 %v3259
    %v3331 = vunpack.c.l.b16 %v3260
    %v3332 = vunpack.c.l.b16 %v3261
    %v3333 = vunpack.c.l.b16 %v3262
    %v3334 = vpack.c.b16 %v3303, %v3302
    %v3335 = vpack.c.b16 %v3305, %v3304
    %v3336 = vpack.c.b16 %v3307, %v3306
    %v3337 = vpack.c.b16 %v3309, %v3308
    %v3338 = vpack.c.b16 %v3311, %v3310
    %v3339 = vpack.c.b16 %v3313, %v3312
    %v3340 = vpack.c.b16 %v3315, %v3314
    %v3341 = vpack.c.b16 %v3317, %v3316
    %v3342 = vpack.c.b16 %v3319, %v3318
    %v3343 = vpack.c.b16 %v3321, %v3320
    %v3344 = vpack.c.b16 %v3323, %v3322
    %v3345 = vpack.c.b16 %v3325, %v3324
    %v3346 = vpack.c.b16 %v3327, %v3326
    %v3347 = vpack.c.b16 %v3329, %v3328
    %v3348 = vpack.c.b16 %v3331, %v3330
    %v3349 = vpack.c.b16 %v3333, %v3332
    %3366 = vmatprep.subr.bf16.mxu0 0
    %3367 = vmatpush1.bf16.msra.mxu0 %v3334
    %3368 = vmatprep.subr.bf16.mxu0 0
    %3369 = vmatpush1.bf16.msra.mxu0 %v3335
    %3370 = vmatprep.subr.bf16.mxu0 0
    %3371 = vmatpush1.bf16.msra.mxu0 %v3336
    %3372 = vmatprep.subr.bf16.mxu0 0
    %3373 = vmatpush1.bf16.msra.mxu0 %v3337
    %3374 = vmatprep.subr.bf16.mxu0 0
    %3375 = vmatpush1.bf16.msra.mxu0 %v3338
    %3376 = vmatprep.subr.bf16.mxu0 0
    %3377 = vmatpush1.bf16.msra.mxu0 %v3339
    %3378 = vmatprep.subr.bf16.mxu0 0
    %3379 = vmatpush1.bf16.msra.mxu0 %v3340
    %3380 = vmatprep.subr.bf16.mxu0 0
    %3381 = vmatpush1.bf16.msra.mxu0 %v3341
    %3382 = vmatprep.subr.bf16.mxu0 0
    %3383 = vmatpush1.bf16.msra.mxu0 %v3342
    %3384 = vmatprep.subr.bf16.mxu0 0
    %3385 = vmatpush1.bf16.msra.mxu0 %v3343
    %3386 = vmatprep.subr.bf16.mxu0 0
    %3387 = vmatpush1.bf16.msra.mxu0 %v3344
    %3388 = vmatprep.subr.bf16.mxu0 0
    %3389 = vmatpush1.bf16.msra.mxu0 %v3345
    %3390 = vmatprep.subr.bf16.mxu0 0
    %3391 = vmatpush1.bf16.msra.mxu0 %v3346
    %3392 = vmatprep.subr.bf16.mxu0 0
    %3393 = vmatpush1.bf16.msra.mxu0 %v3347
    %3394 = vmatprep.subr.bf16.mxu0 0
    %3395 = vmatpush1.bf16.msra.mxu0 %v3348
    %3396 = vmatprep.subr.bf16.mxu0 0
    %3397 = vmatpush1.bf16.msra.mxu0 %v3349
    %3398 = vmatprep.mubr.bf16.mxu0 %v3230
    %3399 = vmatmul.mubr.bf16.gmra.mrb[0].mxu0 %v3229
    %v3400 = vpop.f32.mrb[0].mxu0
    %v3401 = vadd.f32 %v3268, %v3400
    %v3402 = vpop.f32.mrb[0].mxu0
    %v3403 = vpop.f32.mrb[0].mxu0
    %v3404 = vpop.f32.mrb[0].mxu0
    %3405 = vdwg.mxu0
    %v3406 = vmax.f32 %v3401, 0.0
    %v3407 = vsel %vm921, %v3406, 0.0
    %v3408 = vrot.slane %v3407, 4
    %v3409 = vadd.f32 %v3407, %v3408
    %v3410 = vrot.slane %v3409, 2
    %v3411 = vadd.f32 %v3409, %v3410
    %v3412 = vrot.slane %v3411, 1
    %v3413 = vadd.f32 %v3411, %v3412
    %v3414 = vrcp.pop 2.0
    %v3415 = vmul.f32 %v3413, %v3414
    %v3416 = vsub.f32 %v3406, %v3415
    %v3417 = vmul.f32 %v3416, %v3416
    %v3418 = vsel %vm921, %v3417, 0.0
    %v3419 = vrot.slane %v3418, 4
    %v3420 = vadd.f32 %v3418, %v3419
    %v3421 = vrot.slane %v3420, 2
    %v3422 = vadd.f32 %v3420, %v3421
    %v3423 = vrot.slane %v3422, 1
    %v3424 = vadd.f32 %v3422, %v3423
    %v3425 = vmul.f32 %v3424, %v3414
    %v3426 = vld [vmem:[#allocation14] sm:$0x1]
    %v3428 = vlaneseq
    %v3429 = vshrl.u32 %v3428, 7
    %v3430 = vsub.s32 0, %v3429
    %v3431 = vrot.slane %v3426, %v3430
    %v3433 = vmul.f32 %v3431, %v3416
    %v3434 = vadd.f32 %v3425, 1e-05
    %v3435 = vrsqrt.pop %v3434
    %v3436 = vmul.f32 %v3433, %v3435
    %v3437 = vld [vmem:[#allocation15] sm:$0x1]
    %v3439 = vlaneseq
    %v3440 = vshrl.u32 %v3439, 7
    %v3441 = vsub.s32 0, %v3440
    %v3442 = vrot.slane %v3437, %v3441
    %v3444 = vadd.f32 %v3436, %v3442
    %v3445 = vld [vmem:[%s8] sm:$0xff]
    %v3446 = vld [vmem:[%s8 + $0x8] sm:$0xff]
    %v3447 = vld [vmem:[%s8 + $0x10] sm:$0xff]
    %v3448 = vld [vmem:[%s8 + $0x18] sm:$0xff]
    %v3449 = vld [vmem:[%s8 + $0x20] sm:$0xff]
    %v3450 = vld [vmem:[%s8 + $0x28] sm:$0xff]
    %v3451 = vld [vmem:[%s8 + $0x30] sm:$0xff]
    %v3452 = vld [vmem:[%s8 + $0x38] sm:$0xff]
    %v3453 = vld [vmem:[%s8 + $0x40] sm:$0xff]
    %v3454 = vld [vmem:[%s8 + $0x48] sm:$0xff]
    %v3455 = vld [vmem:[%s8 + $0x50] sm:$0xff]
    %v3456 = vld [vmem:[%s8 + $0x58] sm:$0xff]
    %v3457 = vld [vmem:[%s8 + $0x60] sm:$0xff]
    %v3458 = vld [vmem:[%s8 + $0x68] sm:$0xff]
    %v3459 = vld [vmem:[%s8 + $0x70] sm:$0xff]
    %v3460 = vld [vmem:[%s8 + $0x78] sm:$0xff]
    %v3461 = vld [vmem:[#allocation17] sm:$0x1]
    %v3463 = vlaneseq
    %v3464 = vshrl.u32 %v3463, 7
    %v3465 = vsub.s32 0, %v3464
    %v3466 = vrot.slane %v3461, %v3465
    %3468 = vmatprep.subr.mxu0 0.0
    %3469 = vmatpush1.msra.mxu0 %v3445
    %3470 = vmatprep.subr.mxu0 0.0
    %3471 = vmatpush1.msra.mxu0 %v3446
    %3472 = vmatprep.subr.mxu0 0.0
    %3473 = vmatpush1.msra.mxu0 %v3447
    %3474 = vmatprep.subr.mxu0 0.0
    %3475 = vmatpush1.msra.mxu0 %v3448
    %3476 = vmatprep.subr.mxu0 0.0
    %3477 = vmatpush1.msra.mxu0 %v3449
    %3478 = vmatprep.subr.mxu0 0.0
    %3479 = vmatpush1.msra.mxu0 %v3450
    %3480 = vmatprep.subr.mxu0 0.0
    %3481 = vmatpush1.msra.mxu0 %v3451
    %3482 = vmatprep.subr.mxu0 0.0
    %3483 = vmatpush1.msra.mxu0 %v3452
    %3484 = vmatprep.subr.mxu0 0.0
    %3485 = vmatpush1.msra.mxu0 %v3453
    %3486 = vmatprep.subr.mxu0 0.0
    %3487 = vmatpush1.msra.mxu0 %v3454
    %3488 = vmatprep.subr.mxu0 0.0
    %3489 = vmatpush1.msra.mxu0 %v3455
    %3490 = vmatprep.subr.mxu0 0.0
    %3491 = vmatpush1.msra.mxu0 %v3456
    %3492 = vmatprep.subr.mxu0 0.0
    %3493 = vmatpush1.msra.mxu0 %v3457
    %3494 = vmatprep.subr.mxu0 0.0
    %3495 = vmatpush1.msra.mxu0 %v3458
    %3496 = vmatprep.subr.mxu0 0.0
    %3497 = vmatpush1.msra.mxu0 %v3459
    %3498 = vmatprep.subr.mxu0 0.0
    %3499 = vmatpush1.msra.mxu0 %v3460
    %3500 = vmatprep.subr.mxu0 0.0
    %3501 = vmatpush1.msra.mxu0 0.0
    %3502 = vmatprep.subr.mxu0 0.0
    %3503 = vmatpush1.msra.mxu0 0.0
    %3504 = vmatprep.subr.mxu0 0.0
    %3505 = vmatpush1.msra.mxu0 0.0
    %3506 = vmatprep.subr.mxu0 0.0
    %3507 = vmatpush1.msra.mxu0 0.0
    %3508 = vmatprep.subr.mxu0 0.0
    %3509 = vmatpush1.msra.mxu0 0.0
    %3510 = vmatprep.subr.mxu0 0.0
    %3511 = vmatpush1.msra.mxu0 0.0
    %3512 = vmatprep.subr.mxu0 0.0
    %3513 = vmatpush1.msra.mxu0 0.0
    %3514 = vmatprep.subr.mxu0 0.0
    %3515 = vmatpush1.msra.mxu0 0.0
    %3516 = vmatprep.subr.mxu0 0.0
    %3517 = vmatpush1.msra.mxu0 0.0
    %3518 = vmatprep.subr.mxu0 0.0
    %3519 = vmatpush1.msra.mxu0 0.0
    %3520 = vmatprep.subr.mxu0 0.0
    %3521 = vmatpush1.msra.mxu0 0.0
    %3522 = vmatprep.subr.mxu0 0.0
    %3523 = vmatpush1.msra.mxu0 0.0
    %3524 = vmatprep.subr.mxu0 0.0
    %3525 = vmatpush1.msra.mxu0 0.0
    %3526 = vmatprep.subr.mxu0 0.0
    %3527 = vmatpush1.msra.mxu0 0.0
    %3528 = vmatprep.subr.mxu0 0.0
    %3529 = vmatpush1.msra.mxu0 0.0
    %3530 = vmatprep.subr.mxu0 0.0
    %3531 = vmatpush1.msra.mxu0 0.0
    %3532 = vmatprep.mubr.f32.mxu0 0.0
    %3533 = vmatmul.mubr.f32.gmra.mrb[0].mxu0 %v3444
    %v3534 = vpop.f32.mrb[0].mxu0
    %v3535 = vadd.f32 %v3466, %v3534
    %v3536 = vpop.f32.mrb[0].mxu0
    %3537 = vdwg.mxu0
    %vm3538 = vcmask 74752
    %3539 = vst.msk [vmem:[#allocation18] sm:$0x3] %vm3538, %v3535
    // Predicated region
    $region66: #{vgg_tinyserver_0_forward.1} parent=1 // pred_check
      _
    $region67: #{vgg_tinyserver_0_forward.1} parent=1 // pred_check_branch
      %3541 = sbr.rel (0) target = $region69
    $region68: #{vgg_tinyserver_0_forward.1} parent=1 // pred_region
      %s3543 = ssub.s32 32, 32
      %3544 = vsyncadd [#allocation8], %s3543
      %s3546 = sshll.u32 [#allocation18], 4
      %s3547 = int_to_ptr.vmem [resolvable:$true] %s3546
      %3549 = dma.vmem_to_hbm [thread:$0]  %s3547, 32, %s10, [#allocation8]
    $region69: #{vgg_tinyserver_0_forward.1} parent=1 // pred_fallthru
      _
    // Predicated region
    $region70: #{vgg_tinyserver_0_forward.1} parent=1 // pred_check
      _
    $region71: #{vgg_tinyserver_0_forward.1} parent=1 // pred_check_branch
      %3551 = sbr.rel (0) target = $region73
    $region72: #{vgg_tinyserver_0_forward.1} parent=1 // pred_region
      %3552 = dma.done [#allocation8], 32
    $region73: #{vgg_tinyserver_0_forward.1} parent=1 // pred_fallthru
      _
    %3553 = vsyncpa [#allocation7], 1
    %3554 = vsyncpa [#allocation10], 1
    %3555 = vsyncpa [#allocation13], 1
    %3556 = vsyncpa [#allocation16], 1
    %3557 = vsyncpa [#allocation8], 1
  %3558 = vsyncmov [#allocation5]
  %s3559 = vpop.sfrf %3558
  %p3560 = scmp.eq.s32.totalorder %s3559, 0
  %p3561 = pneg %p3560
  %3563 = shalt.err (%p3561)

</llo_original>
